<compile_context>
chip_gen: v6e
topology: v6e:2x2x1
jax: 0.10.0
libtpu: 0.0.40
codegen_flags: <defaults>
</compile_context>

<pallas_src>
import functools

import numpy as np
import jax
import jax.numpy as jnp
from jax.experimental import pallas as pl
from jax.experimental.pallas import tpu as pltpu


# ---------------------------------------------------------------------------
# Fused kernel
# ---------------------------------------------------------------------------
def _sad_kernel(x1_ref, x2_ref, x3_ref, k1t_ref, k2t_ref, m2_ref, m3_ref,
                w_up14, s_up14, w_up2, s_up2, w_up3, s_up3,
                w_cat2, s_cat2, w_up5, s_up5, w_cat3, s_cat3,
                w_c4, s_c4, w5_ref, b5_ref,
                o_ref, flat2, flat3, patch,
                *, c, h2, w2, h3, w3):
    f32 = jnp.float32
    hw2, hw3 = h2 * w2, h3 * w3

    # Zero only the halo columns of the line buffers; interiors are fully
    # rewritten by every conv, so this is the only zero-fill per step.
    flat2[:, 0:w2 + 1] = jnp.zeros((2 * c, w2 + 1), f32)
    flat2[:, w2 + 1 + hw2:hw2 + 2 * w2 + 2] = jnp.zeros((2 * c, w2 + 1), f32)
    flat3[:, 0:w3 + 1] = jnp.zeros((3 * c, w3 + 1), f32)
    flat3[:, w3 + 1 + hw3:hw3 + 2 * w3 + 2] = jnp.zeros((3 * c, w3 + 1), f32)

    def conv3x3(blocks, w_ref, s_ref, flat_ref, m_ref, w, hw):
        """3x3 conv (stride 1, pad 1, no bias, BN folded) over the channel
        concatenation of `blocks`, computed as a single im2col matmul."""
        # 1) write the input blocks into the zero-haloed flat line buffer
        off = 0
        for b in blocks:
            cb = b.shape[0]
            flat_ref[off:off + cb, w + 1:w + 1 + hw] = b
            off += cb
        ctot = off
        # 2) nine shifted taps -> patch matrix (tap-major, channel-minor rows)
        #    The shift is a lane-offset read; the zero halo supplies the
        #    row-boundary zeros and the column masks handle left/right edges.
        for dy in range(3):
            for dx in range(3):
                t = flat_ref[0:ctot, dy * w + dx:dy * w + dx + hw]
                if dx == 0:
                    t = t * m_ref[0:1, :]
                elif dx == 2:
                    t = t * m_ref[1:2, :]
                r = (dy * 3 + dx) * ctot
                patch[r:r + ctot, 0:hw] = t
        # 3) one MXU dot + BatchNorm shift epilogue
        return (jnp.dot(w_ref[...], patch[0:9 * ctot, 0:hw],
                        preferred_element_type=f32) + s_ref[...])

    def up2x(x, kt_ref):
        # bilinear x2 upsample (align_corners=True): x @ kron(U_h, U_w)^T
        return jnp.dot(x, kt_ref[...], preferred_element_type=f32)

    x1 = x1_ref[0]                                      # (C, h1*w1)
    x2 = x2_ref[0]                                      # (C, h2*w2)
    x3 = x3_ref[0]                                      # (C, h3*w3)

    # x2_1 = conv_upsample1(up(x1)) * x2 ;  u4 = conv_upsample4(up(x1))
    x1u = up2x(x1, k1t_ref)                             # (C, hw2)
    y14 = conv3x3([x1u], w_up14, s_up14, flat2, m2_ref, w2, hw2)   # (2C, hw2)
    x2_1 = y14[0:c, :] * x2
    u4 = y14[c:2 * c, :]

    # x2_2 = conv_concat2(cat(x2_1, u4))
    x2_2 = conv3x3([x2_1, u4], w_cat2, s_cat2, flat2, m2_ref, w2, hw2)

    # x3_1 = conv_upsample2(up(x2_1)) * conv_upsample3(up(x2)) * x3
    x3_1 = (conv3x3([up2x(x2_1, k2t_ref)], w_up2, s_up2, flat3, m3_ref, w3, hw3)
            * conv3x3([up2x(x2, k2t_ref)], w_up3, s_up3, flat3, m3_ref, w3, hw3)
            * x3)

    # x3_2 = conv4(conv_concat3(cat(x3_1, conv_upsample5(up(x2_2)))))
    u5 = conv3x3([up2x(x2_2, k2t_ref)], w_up5, s_up5, flat3, m3_ref, w3, hw3)
    x3_2 = conv3x3([x3_1, u5], w_cat3, s_cat3, flat3, m3_ref, w3, hw3)
    x3_2 = conv3x3([x3_2], w_c4, s_c4, flat3, m3_ref, w3, hw3)

    # conv5: 1x1 conv with bias, fused as one matmul + add
    out = jnp.dot(w5_ref[...], x3_2, preferred_element_type=f32) + b5_ref[...]
    o_ref[0] = out.astype(o_ref.dtype)                  # (C, h3*w3)


# ---------------------------------------------------------------------------
# Static host-side constants (upsample matrices, boundary masks)
# ---------------------------------------------------------------------------
def _up_matrix(n_in):
    """(2*n_in, n_in) row-interpolation matrix: x2 bilinear, align_corners=True."""
    n_out = 2 * n_in
    if n_in == 1:
        return np.ones((n_out, 1), np.float64)
    src = np.arange(n_out, dtype=np.float64) * (n_in - 1) / (n_out - 1)
    lo = np.clip(np.floor(src).astype(np.int64), 0, n_in - 1)
    hi = np.clip(lo + 1, 0, n_in - 1)
    frac = src - lo
    u = np.zeros((n_out, n_in), np.float64)
    u[np.arange(n_out), lo] += 1.0 - frac
    u[np.arange(n_out), hi] += frac
    return u


def _up_kron_t(h, w):
    """K^T of shape (h*w, 4*h*w): channel-first up2(x) == x @ K^T."""
    k = np.kron(_up_matrix(h), _up_matrix(w))           # (2h*2w, h*w)
    return jnp.asarray(k.T, dtype=jnp.float32)


def _col_masks(h, w):
    """(2, h*w) f32: row 0 masks ddx=-1 taps (col>0), row 1 ddx=+1 (col<w-1)."""
    col = np.arange(h * w) % w
    left = (col > 0).astype(np.float32)
    right = (col < w - 1).astype(np.float32)
    return jnp.asarray(np.stack([left, right], axis=0))


# ---------------------------------------------------------------------------
# Parameters (deterministic synthetic init matching SAD.__init__ shapes),
# pre-converted to the fused im2col layout: (cout, 9*cin), BN scale folded.
# ---------------------------------------------------------------------------
def init_params(key, channel):
    eps = 1e-5
    c = channel

    def conv_bn(k, cin, cout):
        w = 0.1 * jax.random.normal(k, (cout, cin, 3, 3), jnp.float32)  # OIHW
        gamma = jnp.ones((cout,), jnp.float32)
        beta = jnp.zeros((cout,), jnp.float32)
        run_mean = jnp.zeros((cout,), jnp.float32)
        run_var = jnp.ones((cout,), jnp.float32)
        scale = gamma / jnp.sqrt(run_var + eps)          # eval-mode BatchNorm
        shift = beta - run_mean * scale
        w = w * scale[:, None, None, None]               # fold BN scale in
        # (cout, cin, 3, 3) -> (cout, 3, 3, cin) -> (cout, 9*cin):
        # tap-major / channel-minor, matching the kernel's patch rows.
        w_flat = jnp.transpose(w, (0, 2, 3, 1)).reshape(cout, 9 * cin)
        return w_flat, shift.reshape(cout, 1)

    keys = jax.random.split(key, 10)
    w1, s1 = conv_bn(keys[0], c, c)          # conv_upsample1
    w2_, s2_ = conv_bn(keys[1], c, c)        # conv_upsample2
    w3_, s3_ = conv_bn(keys[2], c, c)        # conv_upsample3
    w4, s4 = conv_bn(keys[3], c, c)          # conv_upsample4
    w5u, s5u = conv_bn(keys[4], 2 * c, 2 * c)   # conv_upsample5
    wc2, sc2 = conv_bn(keys[5], 2 * c, 2 * c)   # conv_concat2
    wc3, sc3 = conv_bn(keys[6], 3 * c, 3 * c)   # conv_concat3
    wc4, sc4 = conv_bn(keys[7], 3 * c, 3 * c)   # conv4
    conv5_w = 0.1 * jax.random.normal(keys[8], (c, 3 * c), jnp.float32)
    conv5_b = 0.1 * jax.random.normal(keys[9], (c, 1), jnp.float32)

    return {
        # conv_upsample1 & conv_upsample4 merged (same input): cout = 2C
        "up14_w": jnp.concatenate([w1, w4], axis=0),
        "up14_s": jnp.concatenate([s1, s4], axis=0),
        "up2_w": w2_, "up2_s": s2_,
        "up3_w": w3_, "up3_s": s3_,
        "cat2_w": wc2, "cat2_s": sc2,
        "up5_w": w5u, "up5_s": s5u,
        "cat3_w": wc3, "cat3_s": sc3,
        "conv4_w": wc4, "conv4_s": sc4,
        "conv5_w": conv5_w, "conv5_b": conv5_b,
    }


# ---------------------------------------------------------------------------
# Wrapper: NCHW in / NCHW out, single fused pallas_call
# ---------------------------------------------------------------------------
def sad_forward(params, x1, x2, x3):
    n, c, h1, w1 = x1.shape
    _, _, h2, w2 = x2.shape
    _, _, h3, w3 = x3.shape
    assert (h2, w2) == (2 * h1, 2 * w1) and (h3, w3) == (2 * h2, 2 * w2)
    hw1, hw2, hw3 = h1 * w1, h2 * w2, h3 * w3

    # NCHW -> channel-first spatially-flattened (N, C, H*W): pure reshape.
    x1f = x1.reshape(n, c, hw1)
    x2f = x2.reshape(n, c, hw2)
    x3f = x3.reshape(n, c, hw3)

    k1t = _up_kron_t(h1, w1)          # (hw1, hw2)
    k2t = _up_kron_t(h2, w2)          # (hw2, hw3)
    m2 = _col_masks(h2, w2)           # (2, hw2)
    m3 = _col_masks(h3, w3)           # (2, hw3)

    p = params
    weight_args = [
        p["up14_w"], p["up14_s"],
        p["up2_w"], p["up2_s"],
        p["up3_w"], p["up3_s"],
        p["cat2_w"], p["cat2_s"],
        p["up5_w"], p["up5_s"],
        p["cat3_w"], p["cat3_s"],
        p["conv4_w"], p["conv4_s"],
        p["conv5_w"], p["conv5_b"],
    ]

    def batch_spec(ch, hw):
        return pl.BlockSpec((1, ch, hw), lambda i: (i, 0, 0))

    def const_spec(a):
        nd = a.ndim
        return pl.BlockSpec(tuple(a.shape), lambda i, nd=nd: (0,) * nd)

    in_specs = ([batch_spec(c, hw1), batch_spec(c, hw2), batch_spec(c, hw3)]
                + [const_spec(a) for a in (k1t, k2t, m2, m3)]
                + [const_spec(a) for a in weight_args])

    kernel = functools.partial(_sad_kernel, c=c, h2=h2, w2=w2, h3=h3, w3=w3)

    out = pl.pallas_call(
        kernel,
        out_shape=jax.ShapeDtypeStruct((n, c, hw3), jnp.float32),
        grid=(n,),
        in_specs=in_specs,
        out_specs=pl.BlockSpec((1, c, hw3), lambda i: (i, 0, 0)),
        scratch_shapes=[
            pltpu.VMEM((2 * c, hw2 + 2 * w2 + 2), jnp.float32),  # level-2 line buf
            pltpu.VMEM((3 * c, hw3 + 2 * w3 + 2), jnp.float32),  # level-3 line buf
            pltpu.VMEM((9 * 3 * c, hw3), jnp.float32),           # im2col patches
        ],
        compiler_params=pltpu.CompilerParams(
            dimension_semantics=("parallel",)),
    )(x1f, x2f, x3f, k1t, k2t, m2, m3, *weight_args)

    # (N, C, H3*W3) -> NCHW: pure reshape.
    return out.reshape(n, c, h3, w3)


if __name__ == "__main__":
    channel = 4
    n = 2
    key = jax.random.PRNGKey(0)
    k1, k2, k3, kp = jax.random.split(key, 4)

    # NCHW inputs with the spatial pyramid the forward pass implies:
    x1 = jax.random.normal(k1, (n, channel, 4, 4), jnp.float32)
    x2 = jax.random.normal(k2, (n, channel, 8, 8), jnp.float32)
    x3 = jax.random.normal(k3, (n, channel, 16, 16), jnp.float32)

    params = init_params(kp, channel)

    out = jax.jit(sad_forward)(params, x1, x2, x3)
    out = jax.block_until_ready(out)

    assert out.shape == (n, channel, 16, 16), out.shape
    assert jnp.all(jnp.isfinite(out))
    print("KERNEL_OK")
</pallas_src>

<mosaic_0001>
module attributes {stable_mosaic.version = 11 : i64} {
  func.func @_sad_kernel(%arg0: i32, %arg1: memref<1x4x16xf32, #tpu.memory_space<vmem>>, %arg2: memref<1x4x64xf32, #tpu.memory_space<vmem>>, %arg3: memref<1x4x256xf32, #tpu.memory_space<vmem>>, %arg4: memref<16x64xf32, #tpu.memory_space<vmem>>, %arg5: memref<64x256xf32, #tpu.memory_space<vmem>>, %arg6: memref<2x64xf32, #tpu.memory_space<vmem>>, %arg7: memref<2x256xf32, #tpu.memory_space<vmem>>, %arg8: memref<8x36xf32, #tpu.memory_space<vmem>>, %arg9: memref<8x1xf32, #tpu.memory_space<vmem>>, %arg10: memref<4x36xf32, #tpu.memory_space<vmem>>, %arg11: memref<4x1xf32, #tpu.memory_space<vmem>>, %arg12: memref<4x36xf32, #tpu.memory_space<vmem>>, %arg13: memref<4x1xf32, #tpu.memory_space<vmem>>, %arg14: memref<8x72xf32, #tpu.memory_space<vmem>>, %arg15: memref<8x1xf32, #tpu.memory_space<vmem>>, %arg16: memref<8x72xf32, #tpu.memory_space<vmem>>, %arg17: memref<8x1xf32, #tpu.memory_space<vmem>>, %arg18: memref<12x108xf32, #tpu.memory_space<vmem>>, %arg19: memref<12x1xf32, #tpu.memory_space<vmem>>, %arg20: memref<12x108xf32, #tpu.memory_space<vmem>>, %arg21: memref<12x1xf32, #tpu.memory_space<vmem>>, %arg22: memref<4x12xf32, #tpu.memory_space<vmem>>, %arg23: memref<4x1xf32, #tpu.memory_space<vmem>>, %arg24: memref<1x4x256xf32, #tpu.memory_space<vmem>>, %arg25: memref<8x82xf32, #tpu.memory_space<vmem>>, %arg26: memref<12x290xf32, #tpu.memory_space<vmem>>, %arg27: memref<108x256xf32, #tpu.memory_space<vmem>>) attributes {dimension_semantics = [#tpu.dimension_semantics<parallel>], iteration_bounds = array<i64: 2>, scalar_prefetch = 0 : i64, scratch_operands = 3 : i64, tpu.core_type = #tpu.core_type<tc>, window_params = [{transform_indices = @transform_0, window_bounds = array<i64: 1, 4, 16>}, {transform_indices = @transform_1, window_bounds = array<i64: 1, 4, 64>}, {transform_indices = @transform_2, window_bounds = array<i64: 1, 4, 256>}, {pipeline_mode = #tpu.pipeline_mode<synchronous>, transform_indices = @transform_3, window_bounds = array<i64: 16, 64>}, {pipeline_mode = #tpu.pipeline_mode<synchronous>, transform_indices = @transform_4, window_bounds = array<i64: 64, 256>}, {pipeline_mode = #tpu.pipeline_mode<synchronous>, transform_indices = @transform_5, window_bounds = array<i64: 2, 64>}, {pipeline_mode = #tpu.pipeline_mode<synchronous>, transform_indices = @transform_6, window_bounds = array<i64: 2, 256>}, {pipeline_mode = #tpu.pipeline_mode<synchronous>, transform_indices = @transform_7, window_bounds = array<i64: 8, 36>}, {pipeline_mode = #tpu.pipeline_mode<synchronous>, transform_indices = @transform_8, window_bounds = array<i64: 8, 1>}, {pipeline_mode = #tpu.pipeline_mode<synchronous>, transform_indices = @transform_9, window_bounds = array<i64: 4, 36>}, {pipeline_mode = #tpu.pipeline_mode<synchronous>, transform_indices = @transform_10, window_bounds = array<i64: 4, 1>}, {pipeline_mode = #tpu.pipeline_mode<synchronous>, transform_indices = @transform_11, window_bounds = array<i64: 4, 36>}, {pipeline_mode = #tpu.pipeline_mode<synchronous>, transform_indices = @transform_12, window_bounds = array<i64: 4, 1>}, {pipeline_mode = #tpu.pipeline_mode<synchronous>, transform_indices = @transform_13, window_bounds = array<i64: 8, 72>}, {pipeline_mode = #tpu.pipeline_mode<synchronous>, transform_indices = @transform_14, window_bounds = array<i64: 8, 1>}, {pipeline_mode = #tpu.pipeline_mode<synchronous>, transform_indices = @transform_15, window_bounds = array<i64: 8, 72>}, {pipeline_mode = #tpu.pipeline_mode<synchronous>, transform_indices = @transform_16, window_bounds = array<i64: 8, 1>}, {pipeline_mode = #tpu.pipeline_mode<synchronous>, transform_indices = @transform_17, window_bounds = array<i64: 12, 108>}, {pipeline_mode = #tpu.pipeline_mode<synchronous>, transform_indices = @transform_18, window_bounds = array<i64: 12, 1>}, {pipeline_mode = #tpu.pipeline_mode<synchronous>, transform_indices = @transform_19, window_bounds = array<i64: 12, 108>}, {pipeline_mode = #tpu.pipeline_mode<synchronous>, transform_indices = @transform_20, window_bounds = array<i64: 12, 1>}, {pipeline_mode = #tpu.pipeline_mode<synchronous>, transform_indices = @transform_21, window_bounds = array<i64: 4, 12>}, {pipeline_mode = #tpu.pipeline_mode<synchronous>, transform_indices = @transform_22, window_bounds = array<i64: 4, 1>}, {transform_indices = @transform_23, window_bounds = array<i64: 1, 4, 256>}]} {
    %cst = arith.constant 0.000000e+00 : f32
    %0 = vector.broadcast %cst : f32 to vector<8x9xf32>
    %c0 = arith.constant 0 : index
    %c0_0 = arith.constant 0 : index
    %1 = vector.load %arg25[%c0, %c0_0] : memref<8x82xf32, #tpu.memory_space<vmem>>, vector<8x9xf32>
    tpu.vector_store %arg25[%c0, %c0_0], %0 {strides = array<i32>} : memref<8x82xf32, #tpu.memory_space<vmem>>, vector<8x9xf32>,
    %cst_1 = arith.constant 0.000000e+00 : f32
    %2 = vector.broadcast %cst_1 : f32 to vector<8x9xf32>
    %c0_2 = arith.constant 0 : index
    %c73 = arith.constant 73 : index
    %3 = vector.load %arg25[%c0_2, %c73] : memref<8x82xf32, #tpu.memory_space<vmem>>, vector<8x9xf32>
    tpu.vector_store %arg25[%c0_2, %c73], %2 {strides = array<i32>} : memref<8x82xf32, #tpu.memory_space<vmem>>, vector<8x9xf32>,
    %cst_3 = arith.constant 0.000000e+00 : f32
    %4 = vector.broadcast %cst_3 : f32 to vector<12x17xf32>
    %c0_4 = arith.constant 0 : index
    %c0_5 = arith.constant 0 : index
    %5 = vector.load %arg26[%c0_4, %c0_5] : memref<12x290xf32, #tpu.memory_space<vmem>>, vector<12x17xf32>
    tpu.vector_store %arg26[%c0_4, %c0_5], %4 {strides = array<i32>} : memref<12x290xf32, #tpu.memory_space<vmem>>, vector<12x17xf32>,
    %cst_6 = arith.constant 0.000000e+00 : f32
    %6 = vector.broadcast %cst_6 : f32 to vector<12x17xf32>
    %c0_7 = arith.constant 0 : index
    %c273 = arith.constant 273 : index
    %7 = vector.load %arg26[%c0_7, %c273] : memref<12x290xf32, #tpu.memory_space<vmem>>, vector<12x17xf32>
    tpu.vector_store %arg26[%c0_7, %c273], %6 {strides = array<i32>} : memref<12x290xf32, #tpu.memory_space<vmem>>, vector<12x17xf32>,
    %c0_8 = arith.constant 0 : index
    %c0_9 = arith.constant 0 : index
    %c0_10 = arith.constant 0 : index
    %8 = vector.load %arg1[%c0_8, %c0_9, %c0_10] : memref<1x4x16xf32, #tpu.memory_space<vmem>>, vector<1x4x16xf32>
    %9 = vector.shape_cast %8 : vector<1x4x16xf32> to vector<4x16xf32>
    %c0_11 = arith.constant 0 : index
    %c0_12 = arith.constant 0 : index
    %c0_13 = arith.constant 0 : index
    %10 = vector.load %arg2[%c0_11, %c0_12, %c0_13] : memref<1x4x64xf32, #tpu.memory_space<vmem>>, vector<1x4x64xf32>
    %11 = vector.shape_cast %10 : vector<1x4x64xf32> to vector<4x64xf32>
    %c0_14 = arith.constant 0 : index
    %c0_15 = arith.constant 0 : index
    %c0_16 = arith.constant 0 : index
    %12 = vector.load %arg3[%c0_14, %c0_15, %c0_16] : memref<1x4x256xf32, #tpu.memory_space<vmem>>, vector<1x4x256xf32>
    %13 = vector.shape_cast %12 : vector<1x4x256xf32> to vector<4x256xf32>
    %c0_17 = arith.constant 0 : index
    %c0_18 = arith.constant 0 : index
    %14 = vector.load %arg4[%c0_17, %c0_18] : memref<16x64xf32, #tpu.memory_space<vmem>>, vector<16x64xf32>
    %cst_19 = arith.constant dense<0.000000e+00> : vector<4x64xf32>
    %15 = tpu.matmul %9, %14, %cst_19 {dimension_numbers = #tpu.dot_dimension_numbers<[1], [0], [0], [1], [0, 0, 1, 1], [], []>} : vector<4x16xf32>, vector<16x64xf32>, vector<4x64xf32> -> vector<4x64xf32>
    %c0_20 = arith.constant 0 : index
    %c9 = arith.constant 9 : index
    %16 = vector.load %arg25[%c0_20, %c9] : memref<8x82xf32, #tpu.memory_space<vmem>>, vector<4x64xf32>
    tpu.vector_store %arg25[%c0_20, %c9], %15 {strides = array<i32>} : memref<8x82xf32, #tpu.memory_space<vmem>>, vector<4x64xf32>,
    %c0_21 = arith.constant 0 : index
    %c0_22 = arith.constant 0 : index
    %17 = vector.load %arg25[%c0_21, %c0_22] : memref<8x82xf32, #tpu.memory_space<vmem>>, vector<4x64xf32>
    %c0_23 = arith.constant 0 : index
    %c0_24 = arith.constant 0 : index
    %18 = vector.load %arg6[%c0_23, %c0_24] : memref<2x64xf32, #tpu.memory_space<vmem>>, vector<1x64xf32>
    %19 = vector.broadcast %18 : vector<1x64xf32> to vector<4x64xf32>
    %20 = arith.mulf %17, %19 : vector<4x64xf32>
    %c0_25 = arith.constant 0 : index
    %c0_26 = arith.constant 0 : index
    %21 = vector.load %arg27[%c0_25, %c0_26] : memref<108x256xf32, #tpu.memory_space<vmem>>, vector<4x64xf32>
    tpu.vector_store %arg27[%c0_25, %c0_26], %20 {strides = array<i32>} : memref<108x256xf32, #tpu.memory_space<vmem>>, vector<4x64xf32>,
    %c0_27 = arith.constant 0 : index
    %c1 = arith.constant 1 : index
    %22 = vector.load %arg25[%c0_27, %c1] : memref<8x82xf32, #tpu.memory_space<vmem>>, vector<4x64xf32>
    %c4 = arith.constant 4 : index
    %c0_28 = arith.constant 0 : index
    %23 = vector.load %arg27[%c4, %c0_28] : memref<108x256xf32, #tpu.memory_space<vmem>>, vector<4x64xf32>
    tpu.vector_store %arg27[%c4, %c0_28], %22 {strides = array<i32>} : memref<108x256xf32, #tpu.memory_space<vmem>>, vector<4x64xf32>,
    %c0_29 = arith.constant 0 : index
    %c2 = arith.constant 2 : index
    %24 = vector.load %arg25[%c0_29, %c2] : memref<8x82xf32, #tpu.memory_space<vmem>>, vector<4x64xf32>
    %c1_30 = arith.constant 1 : index
    %c0_31 = arith.constant 0 : index
    %25 = vector.load %arg6[%c1_30, %c0_31] : memref<2x64xf32, #tpu.memory_space<vmem>>, vector<1x64xf32>
    %26 = vector.broadcast %25 : vector<1x64xf32> to vector<4x64xf32>
    %27 = arith.mulf %24, %26 : vector<4x64xf32>
    %c8 = arith.constant 8 : index
    %c0_32 = arith.constant 0 : index
    %28 = vector.load %arg27[%c8, %c0_32] : memref<108x256xf32, #tpu.memory_space<vmem>>, vector<4x64xf32>
    tpu.vector_store %arg27[%c8, %c0_32], %27 {strides = array<i32>} : memref<108x256xf32, #tpu.memory_space<vmem>>, vector<4x64xf32>,
    %c0_33 = arith.constant 0 : index
    %c8_34 = arith.constant 8 : index
    %29 = vector.load %arg25[%c0_33, %c8_34] : memref<8x82xf32, #tpu.memory_space<vmem>>, vector<4x64xf32>
    %c0_35 = arith.constant 0 : index
    %c0_36 = arith.constant 0 : index
    %30 = vector.load %arg6[%c0_35, %c0_36] : memref<2x64xf32, #tpu.memory_space<vmem>>, vector<1x64xf32>
    %31 = vector.broadcast %30 : vector<1x64xf32> to vector<4x64xf32>
    %32 = arith.mulf %29, %31 : vector<4x64xf32>
    %c12 = arith.constant 12 : index
    %c0_37 = arith.constant 0 : index
    %33 = vector.load %arg27[%c12, %c0_37] : memref<108x256xf32, #tpu.memory_space<vmem>>, vector<4x64xf32>
    tpu.vector_store %arg27[%c12, %c0_37], %32 {strides = array<i32>} : memref<108x256xf32, #tpu.memory_space<vmem>>, vector<4x64xf32>,
    %c0_38 = arith.constant 0 : index
    %c9_39 = arith.constant 9 : index
    %34 = vector.load %arg25[%c0_38, %c9_39] : memref<8x82xf32, #tpu.memory_space<vmem>>, vector<4x64xf32>
    %c16 = arith.constant 16 : index
    %c0_40 = arith.constant 0 : index
    %35 = vector.load %arg27[%c16, %c0_40] : memref<108x256xf32, #tpu.memory_space<vmem>>, vector<4x64xf32>
    tpu.vector_store %arg27[%c16, %c0_40], %34 {strides = array<i32>} : memref<108x256xf32, #tpu.memory_space<vmem>>, vector<4x64xf32>,
    %c0_41 = arith.constant 0 : index
    %c10 = arith.constant 10 : index
    %36 = vector.load %arg25[%c0_41, %c10] : memref<8x82xf32, #tpu.memory_space<vmem>>, vector<4x64xf32>
    %c1_42 = arith.constant 1 : index
    %c0_43 = arith.constant 0 : index
    %37 = vector.load %arg6[%c1_42, %c0_43] : memref<2x64xf32, #tpu.memory_space<vmem>>, vector<1x64xf32>
    %38 = vector.broadcast %37 : vector<1x64xf32> to vector<4x64xf32>
    %39 = arith.mulf %36, %38 : vector<4x64xf32>
    %c20 = arith.constant 20 : index
    %c0_44 = arith.constant 0 : index
    %40 = vector.load %arg27[%c20, %c0_44] : memref<108x256xf32, #tpu.memory_space<vmem>>, vector<4x64xf32>
    tpu.vector_store %arg27[%c20, %c0_44], %39 {strides = array<i32>} : memref<108x256xf32, #tpu.memory_space<vmem>>, vector<4x64xf32>,
    %c0_45 = arith.constant 0 : index
    %c16_46 = arith.constant 16 : index
    %41 = vector.load %arg25[%c0_45, %c16_46] : memref<8x82xf32, #tpu.memory_space<vmem>>, vector<4x64xf32>
    %c0_47 = arith.constant 0 : index
    %c0_48 = arith.constant 0 : index
    %42 = vector.load %arg6[%c0_47, %c0_48] : memref<2x64xf32, #tpu.memory_space<vmem>>, vector<1x64xf32>
    %43 = vector.broadcast %42 : vector<1x64xf32> to vector<4x64xf32>
    %44 = arith.mulf %41, %43 : vector<4x64xf32>
    %c24 = arith.constant 24 : index
    %c0_49 = arith.constant 0 : index
    %45 = vector.load %arg27[%c24, %c0_49] : memref<108x256xf32, #tpu.memory_space<vmem>>, vector<4x64xf32>
    tpu.vector_store %arg27[%c24, %c0_49], %44 {strides = array<i32>} : memref<108x256xf32, #tpu.memory_space<vmem>>, vector<4x64xf32>,
    %c0_50 = arith.constant 0 : index
    %c17 = arith.constant 17 : index
    %46 = vector.load %arg25[%c0_50, %c17] : memref<8x82xf32, #tpu.memory_space<vmem>>, vector<4x64xf32>
    %c28 = arith.constant 28 : index
    %c0_51 = arith.constant 0 : index
    %47 = vector.load %arg27[%c28, %c0_51] : memref<108x256xf32, #tpu.memory_space<vmem>>, vector<4x64xf32>
    tpu.vector_store %arg27[%c28, %c0_51], %46 {strides = array<i32>} : memref<108x256xf32, #tpu.memory_space<vmem>>, vector<4x64xf32>,
    %c0_52 = arith.constant 0 : index
    %c18 = arith.constant 18 : index
    %48 = vector.load %arg25[%c0_52, %c18] : memref<8x82xf32, #tpu.memory_space<vmem>>, vector<4x64xf32>
    %c1_53 = arith.constant 1 : index
    %c0_54 = arith.constant 0 : index
    %49 = vector.load %arg6[%c1_53, %c0_54] : memref<2x64xf32, #tpu.memory_space<vmem>>, vector<1x64xf32>
    %50 = vector.broadcast %49 : vector<1x64xf32> to vector<4x64xf32>
    %51 = arith.mulf %48, %50 : vector<4x64xf32>
    %c32 = arith.constant 32 : index
    %c0_55 = arith.constant 0 : index
    %52 = vector.load %arg27[%c32, %c0_55] : memref<108x256xf32, #tpu.memory_space<vmem>>, vector<4x64xf32>
    tpu.vector_store %arg27[%c32, %c0_55], %51 {strides = array<i32>} : memref<108x256xf32, #tpu.memory_space<vmem>>, vector<4x64xf32>,
    %c0_56 = arith.constant 0 : index
    %c0_57 = arith.constant 0 : index
    %53 = vector.load %arg8[%c0_56, %c0_57] : memref<8x36xf32, #tpu.memory_space<vmem>>, vector<8x36xf32>
    %c0_58 = arith.constant 0 : index
    %c0_59 = arith.constant 0 : index
    %54 = vector.load %arg27[%c0_58, %c0_59] : memref<108x256xf32, #tpu.memory_space<vmem>>, vector<36x64xf32>
    %cst_60 = arith.constant dense<0.000000e+00> : vector<8x64xf32>
    %55 = tpu.matmul %53, %54, %cst_60 {dimension_numbers = #tpu.dot_dimension_numbers<[1], [0], [0], [1], [0, 0, 1, 1], [], []>} : vector<8x36xf32>, vector<36x64xf32>, vector<8x64xf32> -> vector<8x64xf32>
    %c0_61 = arith.constant 0 : index
    %c0_62 = arith.constant 0 : index
    %56 = vector.load %arg9[%c0_61, %c0_62] : memref<8x1xf32, #tpu.memory_space<vmem>>, vector<8x1xf32>
    %57 = vector.broadcast %56 : vector<8x1xf32> to vector<8x64xf32>
    %58 = arith.addf %55, %57 : vector<8x64xf32>
    %59 = vector.extract_strided_slice %58 {offsets = [0, 0], sizes = [4, 64], strides = [1, 1]} : vector<8x64xf32> to vector<4x64xf32>
    %60 = arith.mulf %59, %11 : vector<4x64xf32>
    %61 = vector.extract_strided_slice %58 {offsets = [4, 0], sizes = [4, 64], strides = [1, 1]} : vector<8x64xf32> to vector<4x64xf32>
    %c0_63 = arith.constant 0 : index
    %c9_64 = arith.constant 9 : index
    %62 = vector.load %arg25[%c0_63, %c9_64] : memref<8x82xf32, #tpu.memory_space<vmem>>, vector<4x64xf32>
    tpu.vector_store %arg25[%c0_63, %c9_64], %60 {strides = array<i32>} : memref<8x82xf32, #tpu.memory_space<vmem>>, vector<4x64xf32>,
    %c4_65 = arith.constant 4 : index
    %c9_66 = arith.constant 9 : index
    %63 = vector.load %arg25[%c4_65, %c9_66] : memref<8x82xf32, #tpu.memory_space<vmem>>, vector<4x64xf32>
    tpu.vector_store %arg25[%c4_65, %c9_66], %61 {strides = array<i32>} : memref<8x82xf32, #tpu.memory_space<vmem>>, vector<4x64xf32>,
    %c0_67 = arith.constant 0 : index
    %c0_68 = arith.constant 0 : index
    %64 = vector.load %arg25[%c0_67, %c0_68] : memref<8x82xf32, #tpu.memory_space<vmem>>, vector<8x64xf32>
    %c0_69 = arith.constant 0 : index
    %c0_70 = arith.constant 0 : index
    %65 = vector.load %arg6[%c0_69, %c0_70] : memref<2x64xf32, #tpu.memory_space<vmem>>, vector<1x64xf32>
    %66 = vector.broadcast %65 : vector<1x64xf32> to vector<8x64xf32>
    %67 = arith.mulf %64, %66 : vector<8x64xf32>
    %c0_71 = arith.constant 0 : index
    %c0_72 = arith.constant 0 : index
    %68 = vector.load %arg27[%c0_71, %c0_72] : memref<108x256xf32, #tpu.memory_space<vmem>>, vector<8x64xf32>
    tpu.vector_store %arg27[%c0_71, %c0_72], %67 {strides = array<i32>} : memref<108x256xf32, #tpu.memory_space<vmem>>, vector<8x64xf32>,
    %c0_73 = arith.constant 0 : index
    %c1_74 = arith.constant 1 : index
    %69 = vector.load %arg25[%c0_73, %c1_74] : memref<8x82xf32, #tpu.memory_space<vmem>>, vector<8x64xf32>
    %c8_75 = arith.constant 8 : index
    %c0_76 = arith.constant 0 : index
    %70 = vector.load %arg27[%c8_75, %c0_76] : memref<108x256xf32, #tpu.memory_space<vmem>>, vector<8x64xf32>
    tpu.vector_store %arg27[%c8_75, %c0_76], %69 {strides = array<i32>} : memref<108x256xf32, #tpu.memory_space<vmem>>, vector<8x64xf32>,
    %c0_77 = arith.constant 0 : index
    %c2_78 = arith.constant 2 : index
    %71 = vector.load %arg25[%c0_77, %c2_78] : memref<8x82xf32, #tpu.memory_space<vmem>>, vector<8x64xf32>
    %c1_79 = arith.constant 1 : index
    %c0_80 = arith.constant 0 : index
    %72 = vector.load %arg6[%c1_79, %c0_80] : memref<2x64xf32, #tpu.memory_space<vmem>>, vector<1x64xf32>
    %73 = vector.broadcast %72 : vector<1x64xf32> to vector<8x64xf32>
    %74 = arith.mulf %71, %73 : vector<8x64xf32>
    %c16_81 = arith.constant 16 : index
    %c0_82 = arith.constant 0 : index
    %75 = vector.load %arg27[%c16_81, %c0_82] : memref<108x256xf32, #tpu.memory_space<vmem>>, vector<8x64xf32>
    tpu.vector_store %arg27[%c16_81, %c0_82], %74 {strides = array<i32>} : memref<108x256xf32, #tpu.memory_space<vmem>>, vector<8x64xf32>,
    %c0_83 = arith.constant 0 : index
    %c8_84 = arith.constant 8 : index
    %76 = vector.load %arg25[%c0_83, %c8_84] : memref<8x82xf32, #tpu.memory_space<vmem>>, vector<8x64xf32>
    %c0_85 = arith.constant 0 : index
    %c0_86 = arith.constant 0 : index
    %77 = vector.load %arg6[%c0_85, %c0_86] : memref<2x64xf32, #tpu.memory_space<vmem>>, vector<1x64xf32>
    %78 = vector.broadcast %77 : vector<1x64xf32> to vector<8x64xf32>
    %79 = arith.mulf %76, %78 : vector<8x64xf32>
    %c24_87 = arith.constant 24 : index
    %c0_88 = arith.constant 0 : index
    %80 = vector.load %arg27[%c24_87, %c0_88] : memref<108x256xf32, #tpu.memory_space<vmem>>, vector<8x64xf32>
    tpu.vector_store %arg27[%c24_87, %c0_88], %79 {strides = array<i32>} : memref<108x256xf32, #tpu.memory_space<vmem>>, vector<8x64xf32>,
    %c0_89 = arith.constant 0 : index
    %c9_90 = arith.constant 9 : index
    %81 = vector.load %arg25[%c0_89, %c9_90] : memref<8x82xf32, #tpu.memory_space<vmem>>, vector<8x64xf32>
    %c32_91 = arith.constant 32 : index
    %c0_92 = arith.constant 0 : index
    %82 = vector.load %arg27[%c32_91, %c0_92] : memref<108x256xf32, #tpu.memory_space<vmem>>, vector<8x64xf32>
    tpu.vector_store %arg27[%c32_91, %c0_92], %81 {strides = array<i32>} : memref<108x256xf32, #tpu.memory_space<vmem>>, vector<8x64xf32>,
    %c0_93 = arith.constant 0 : index
    %c10_94 = arith.constant 10 : index
    %83 = vector.load %arg25[%c0_93, %c10_94] : memref<8x82xf32, #tpu.memory_space<vmem>>, vector<8x64xf32>
    %c1_95 = arith.constant 1 : index
    %c0_96 = arith.constant 0 : index
    %84 = vector.load %arg6[%c1_95, %c0_96] : memref<2x64xf32, #tpu.memory_space<vmem>>, vector<1x64xf32>
    %85 = vector.broadcast %84 : vector<1x64xf32> to vector<8x64xf32>
    %86 = arith.mulf %83, %85 : vector<8x64xf32>
    %c40 = arith.constant 40 : index
    %c0_97 = arith.constant 0 : index
    %87 = vector.load %arg27[%c40, %c0_97] : memref<108x256xf32, #tpu.memory_space<vmem>>, vector<8x64xf32>
    tpu.vector_store %arg27[%c40, %c0_97], %86 {strides = array<i32>} : memref<108x256xf32, #tpu.memory_space<vmem>>, vector<8x64xf32>,
    %c0_98 = arith.constant 0 : index
    %c16_99 = arith.constant 16 : index
    %88 = vector.load %arg25[%c0_98, %c16_99] : memref<8x82xf32, #tpu.memory_space<vmem>>, vector<8x64xf32>
    %c0_100 = arith.constant 0 : index
    %c0_101 = arith.constant 0 : index
    %89 = vector.load %arg6[%c0_100, %c0_101] : memref<2x64xf32, #tpu.memory_space<vmem>>, vector<1x64xf32>
    %90 = vector.broadcast %89 : vector<1x64xf32> to vector<8x64xf32>
    %91 = arith.mulf %88, %90 : vector<8x64xf32>
    %c48 = arith.constant 48 : index
    %c0_102 = arith.constant 0 : index
    %92 = vector.load %arg27[%c48, %c0_102] : memref<108x256xf32, #tpu.memory_space<vmem>>, vector<8x64xf32>
    tpu.vector_store %arg27[%c48, %c0_102], %91 {strides = array<i32>} : memref<108x256xf32, #tpu.memory_space<vmem>>, vector<8x64xf32>,
    %c0_103 = arith.constant 0 : index
    %c17_104 = arith.constant 17 : index
    %93 = vector.load %arg25[%c0_103, %c17_104] : memref<8x82xf32, #tpu.memory_space<vmem>>, vector<8x64xf32>
    %c56 = arith.constant 56 : index
    %c0_105 = arith.constant 0 : index
    %94 = vector.load %arg27[%c56, %c0_105] : memref<108x256xf32, #tpu.memory_space<vmem>>, vector<8x64xf32>
    tpu.vector_store %arg27[%c56, %c0_105], %93 {strides = array<i32>} : memref<108x256xf32, #tpu.memory_space<vmem>>, vector<8x64xf32>,
    %c0_106 = arith.constant 0 : index
    %c18_107 = arith.constant 18 : index
    %95 = vector.load %arg25[%c0_106, %c18_107] : memref<8x82xf32, #tpu.memory_space<vmem>>, vector<8x64xf32>
    %c1_108 = arith.constant 1 : index
    %c0_109 = arith.constant 0 : index
    %96 = vector.load %arg6[%c1_108, %c0_109] : memref<2x64xf32, #tpu.memory_space<vmem>>, vector<1x64xf32>
    %97 = vector.broadcast %96 : vector<1x64xf32> to vector<8x64xf32>
    %98 = arith.mulf %95, %97 : vector<8x64xf32>
    %c64 = arith.constant 64 : index
    %c0_110 = arith.constant 0 : index
    %99 = vector.load %arg27[%c64, %c0_110] : memref<108x256xf32, #tpu.memory_space<vmem>>, vector<8x64xf32>
    tpu.vector_store %arg27[%c64, %c0_110], %98 {strides = array<i32>} : memref<108x256xf32, #tpu.memory_space<vmem>>, vector<8x64xf32>,
    %c0_111 = arith.constant 0 : index
    %c0_112 = arith.constant 0 : index
    %100 = vector.load %arg14[%c0_111, %c0_112] : memref<8x72xf32, #tpu.memory_space<vmem>>, vector<8x72xf32>
    %c0_113 = arith.constant 0 : index
    %c0_114 = arith.constant 0 : index
    %101 = vector.load %arg27[%c0_113, %c0_114] : memref<108x256xf32, #tpu.memory_space<vmem>>, vector<72x64xf32>
    %cst_115 = arith.constant dense<0.000000e+00> : vector<8x64xf32>
    %102 = tpu.matmul %100, %101, %cst_115 {dimension_numbers = #tpu.dot_dimension_numbers<[1], [0], [0], [1], [0, 0, 1, 1], [], []>} : vector<8x72xf32>, vector<72x64xf32>, vector<8x64xf32> -> vector<8x64xf32>
    %c0_116 = arith.constant 0 : index
    %c0_117 = arith.constant 0 : index
    %103 = vector.load %arg15[%c0_116, %c0_117] : memref<8x1xf32, #tpu.memory_space<vmem>>, vector<8x1xf32>
    %104 = vector.broadcast %103 : vector<8x1xf32> to vector<8x64xf32>
    %105 = arith.addf %102, %104 : vector<8x64xf32>
    %c0_118 = arith.constant 0 : index
    %c0_119 = arith.constant 0 : index
    %106 = vector.load %arg5[%c0_118, %c0_119] : memref<64x256xf32, #tpu.memory_space<vmem>>, vector<64x256xf32>
    %cst_120 = arith.constant dense<0.000000e+00> : vector<4x256xf32>
    %107 = tpu.matmul %60, %106, %cst_120 {dimension_numbers = #tpu.dot_dimension_numbers<[1], [0], [0], [1], [0, 0, 1, 1], [], []>} : vector<4x64xf32>, vector<64x256xf32>, vector<4x256xf32> -> vector<4x256xf32>
    %c0_121 = arith.constant 0 : index
    %c17_122 = arith.constant 17 : index
    %108 = vector.load %arg26[%c0_121, %c17_122] : memref<12x290xf32, #tpu.memory_space<vmem>>, vector<4x256xf32>
    tpu.vector_store %arg26[%c0_121, %c17_122], %107 {strides = array<i32>} : memref<12x290xf32, #tpu.memory_space<vmem>>, vector<4x256xf32>,
    %c0_123 = arith.constant 0 : index
    %c0_124 = arith.constant 0 : index
    %109 = vector.load %arg26[%c0_123, %c0_124] : memref<12x290xf32, #tpu.memory_space<vmem>>, vector<4x256xf32>
    %c0_125 = arith.constant 0 : index
    %c0_126 = arith.constant 0 : index
    %110 = vector.load %arg7[%c0_125, %c0_126] : memref<2x256xf32, #tpu.memory_space<vmem>>, vector<1x256xf32>
    %111 = vector.broadcast %110 : vector<1x256xf32> to vector<4x256xf32>
    %112 = arith.mulf %109, %111 : vector<4x256xf32>
    %c0_127 = arith.constant 0 : index
    %c0_128 = arith.constant 0 : index
    %113 = vector.load %arg27[%c0_127, %c0_128] : memref<108x256xf32, #tpu.memory_space<vmem>>, vector<4x256xf32>
    tpu.vector_store %arg27[%c0_127, %c0_128], %112 {strides = array<i32>} : memref<108x256xf32, #tpu.memory_space<vmem>>, vector<4x256xf32>,
    %c0_129 = arith.constant 0 : index
    %c1_130 = arith.constant 1 : index
    %114 = vector.load %arg26[%c0_129, %c1_130] : memref<12x290xf32, #tpu.memory_space<vmem>>, vector<4x256xf32>
    %c4_131 = arith.constant 4 : index
    %c0_132 = arith.constant 0 : index
    %115 = vector.load %arg27[%c4_131, %c0_132] : memref<108x256xf32, #tpu.memory_space<vmem>>, vector<4x256xf32>
    tpu.vector_store %arg27[%c4_131, %c0_132], %114 {strides = array<i32>} : memref<108x256xf32, #tpu.memory_space<vmem>>, vector<4x256xf32>,
    %c0_133 = arith.constant 0 : index
    %c2_134 = arith.constant 2 : index
    %116 = vector.load %arg26[%c0_133, %c2_134] : memref<12x290xf32, #tpu.memory_space<vmem>>, vector<4x256xf32>
    %c1_135 = arith.constant 1 : index
    %c0_136 = arith.constant 0 : index
    %117 = vector.load %arg7[%c1_135, %c0_136] : memref<2x256xf32, #tpu.memory_space<vmem>>, vector<1x256xf32>
    %118 = vector.broadcast %117 : vector<1x256xf32> to vector<4x256xf32>
    %119 = arith.mulf %116, %118 : vector<4x256xf32>
    %c8_137 = arith.constant 8 : index
    %c0_138 = arith.constant 0 : index
    %120 = vector.load %arg27[%c8_137, %c0_138] : memref<108x256xf32, #tpu.memory_space<vmem>>, vector<4x256xf32>
    tpu.vector_store %arg27[%c8_137, %c0_138], %119 {strides = array<i32>} : memref<108x256xf32, #tpu.memory_space<vmem>>, vector<4x256xf32>,
    %c0_139 = arith.constant 0 : index
    %c16_140 = arith.constant 16 : index
    %121 = vector.load %arg26[%c0_139, %c16_140] : memref<12x290xf32, #tpu.memory_space<vmem>>, vector<4x256xf32>
    %c0_141 = arith.constant 0 : index
    %c0_142 = arith.constant 0 : index
    %122 = vector.load %arg7[%c0_141, %c0_142] : memref<2x256xf32, #tpu.memory_space<vmem>>, vector<1x256xf32>
    %123 = vector.broadcast %122 : vector<1x256xf32> to vector<4x256xf32>
    %124 = arith.mulf %121, %123 : vector<4x256xf32>
    %c12_143 = arith.constant 12 : index
    %c0_144 = arith.constant 0 : index
    %125 = vector.load %arg27[%c12_143, %c0_144] : memref<108x256xf32, #tpu.memory_space<vmem>>, vector<4x256xf32>
    tpu.vector_store %arg27[%c12_143, %c0_144], %124 {strides = array<i32>} : memref<108x256xf32, #tpu.memory_space<vmem>>, vector<4x256xf32>,
    %c0_145 = arith.constant 0 : index
    %c17_146 = arith.constant 17 : index
    %126 = vector.load %arg26[%c0_145, %c17_146] : memref<12x290xf32, #tpu.memory_space<vmem>>, vector<4x256xf32>
    %c16_147 = arith.constant 16 : index
    %c0_148 = arith.constant 0 : index
    %127 = vector.load %arg27[%c16_147, %c0_148] : memref<108x256xf32, #tpu.memory_space<vmem>>, vector<4x256xf32>
    tpu.vector_store %arg27[%c16_147, %c0_148], %126 {strides = array<i32>} : memref<108x256xf32, #tpu.memory_space<vmem>>, vector<4x256xf32>,
    %c0_149 = arith.constant 0 : index
    %c18_150 = arith.constant 18 : index
    %128 = vector.load %arg26[%c0_149, %c18_150] : memref<12x290xf32, #tpu.memory_space<vmem>>, vector<4x256xf32>
    %c1_151 = arith.constant 1 : index
    %c0_152 = arith.constant 0 : index
    %129 = vector.load %arg7[%c1_151, %c0_152] : memref<2x256xf32, #tpu.memory_space<vmem>>, vector<1x256xf32>
    %130 = vector.broadcast %129 : vector<1x256xf32> to vector<4x256xf32>
    %131 = arith.mulf %128, %130 : vector<4x256xf32>
    %c20_153 = arith.constant 20 : index
    %c0_154 = arith.constant 0 : index
    %132 = vector.load %arg27[%c20_153, %c0_154] : memref<108x256xf32, #tpu.memory_space<vmem>>, vector<4x256xf32>
    tpu.vector_store %arg27[%c20_153, %c0_154], %131 {strides = array<i32>} : memref<108x256xf32, #tpu.memory_space<vmem>>, vector<4x256xf32>,
    %c0_155 = arith.constant 0 : index
    %c32_156 = arith.constant 32 : index
    %133 = vector.load %arg26[%c0_155, %c32_156] : memref<12x290xf32, #tpu.memory_space<vmem>>, vector<4x256xf32>
    %c0_157 = arith.constant 0 : index
    %c0_158 = arith.constant 0 : index
    %134 = vector.load %arg7[%c0_157, %c0_158] : memref<2x256xf32, #tpu.memory_space<vmem>>, vector<1x256xf32>
    %135 = vector.broadcast %134 : vector<1x256xf32> to vector<4x256xf32>
    %136 = arith.mulf %133, %135 : vector<4x256xf32>
    %c24_159 = arith.constant 24 : index
    %c0_160 = arith.constant 0 : index
    %137 = vector.load %arg27[%c24_159, %c0_160] : memref<108x256xf32, #tpu.memory_space<vmem>>, vector<4x256xf32>
    tpu.vector_store %arg27[%c24_159, %c0_160], %136 {strides = array<i32>} : memref<108x256xf32, #tpu.memory_space<vmem>>, vector<4x256xf32>,
    %c0_161 = arith.constant 0 : index
    %c33 = arith.constant 33 : index
    %138 = vector.load %arg26[%c0_161, %c33] : memref<12x290xf32, #tpu.memory_space<vmem>>, vector<4x256xf32>
    %c28_162 = arith.constant 28 : index
    %c0_163 = arith.constant 0 : index
    %139 = vector.load %arg27[%c28_162, %c0_163] : memref<108x256xf32, #tpu.memory_space<vmem>>, vector<4x256xf32>
    tpu.vector_store %arg27[%c28_162, %c0_163], %138 {strides = array<i32>} : memref<108x256xf32, #tpu.memory_space<vmem>>, vector<4x256xf32>,
    %c0_164 = arith.constant 0 : index
    %c34 = arith.constant 34 : index
    %140 = vector.load %arg26[%c0_164, %c34] : memref<12x290xf32, #tpu.memory_space<vmem>>, vector<4x256xf32>
    %c1_165 = arith.constant 1 : index
    %c0_166 = arith.constant 0 : index
    %141 = vector.load %arg7[%c1_165, %c0_166] : memref<2x256xf32, #tpu.memory_space<vmem>>, vector<1x256xf32>
    %142 = vector.broadcast %141 : vector<1x256xf32> to vector<4x256xf32>
    %143 = arith.mulf %140, %142 : vector<4x256xf32>
    %c32_167 = arith.constant 32 : index
    %c0_168 = arith.constant 0 : index
    %144 = vector.load %arg27[%c32_167, %c0_168] : memref<108x256xf32, #tpu.memory_space<vmem>>, vector<4x256xf32>
    tpu.vector_store %arg27[%c32_167, %c0_168], %143 {strides = array<i32>} : memref<108x256xf32, #tpu.memory_space<vmem>>, vector<4x256xf32>,
    %c0_169 = arith.constant 0 : index
    %c0_170 = arith.constant 0 : index
    %145 = vector.load %arg10[%c0_169, %c0_170] : memref<4x36xf32, #tpu.memory_space<vmem>>, vector<4x36xf32>
    %c0_171 = arith.constant 0 : index
    %c0_172 = arith.constant 0 : index
    %146 = vector.load %arg27[%c0_171, %c0_172] : memref<108x256xf32, #tpu.memory_space<vmem>>, vector<36x256xf32>
    %cst_173 = arith.constant dense<0.000000e+00> : vector<4x256xf32>
    %147 = tpu.matmul %145, %146, %cst_173 {dimension_numbers = #tpu.dot_dimension_numbers<[1], [0], [0], [1], [0, 0, 1, 1], [], []>} : vector<4x36xf32>, vector<36x256xf32>, vector<4x256xf32> -> vector<4x256xf32>
    %c0_174 = arith.constant 0 : index
    %c0_175 = arith.constant 0 : index
    %148 = vector.load %arg11[%c0_174, %c0_175] : memref<4x1xf32, #tpu.memory_space<vmem>>, vector<4x1xf32>
    %149 = vector.broadcast %148 : vector<4x1xf32> to vector<4x256xf32>
    %150 = arith.addf %147, %149 : vector<4x256xf32>
    %c0_176 = arith.constant 0 : index
    %c0_177 = arith.constant 0 : index
    %151 = vector.load %arg5[%c0_176, %c0_177] : memref<64x256xf32, #tpu.memory_space<vmem>>, vector<64x256xf32>
    %cst_178 = arith.constant dense<0.000000e+00> : vector<4x256xf32>
    %152 = tpu.matmul %11, %151, %cst_178 {dimension_numbers = #tpu.dot_dimension_numbers<[1], [0], [0], [1], [0, 0, 1, 1], [], []>} : vector<4x64xf32>, vector<64x256xf32>, vector<4x256xf32> -> vector<4x256xf32>
    %c0_179 = arith.constant 0 : index
    %c17_180 = arith.constant 17 : index
    %153 = vector.load %arg26[%c0_179, %c17_180] : memref<12x290xf32, #tpu.memory_space<vmem>>, vector<4x256xf32>
    tpu.vector_store %arg26[%c0_179, %c17_180], %152 {strides = array<i32>} : memref<12x290xf32, #tpu.memory_space<vmem>>, vector<4x256xf32>,
    %c0_181 = arith.constant 0 : index
    %c0_182 = arith.constant 0 : index
    %154 = vector.load %arg26[%c0_181, %c0_182] : memref<12x290xf32, #tpu.memory_space<vmem>>, vector<4x256xf32>
    %c0_183 = arith.constant 0 : index
    %c0_184 = arith.constant 0 : index
    %155 = vector.load %arg7[%c0_183, %c0_184] : memref<2x256xf32, #tpu.memory_space<vmem>>, vector<1x256xf32>
    %156 = vector.broadcast %155 : vector<1x256xf32> to vector<4x256xf32>
    %157 = arith.mulf %154, %156 : vector<4x256xf32>
    %c0_185 = arith.constant 0 : index
    %c0_186 = arith.constant 0 : index
    %158 = vector.load %arg27[%c0_185, %c0_186] : memref<108x256xf32, #tpu.memory_space<vmem>>, vector<4x256xf32>
    tpu.vector_store %arg27[%c0_185, %c0_186], %157 {strides = array<i32>} : memref<108x256xf32, #tpu.memory_space<vmem>>, vector<4x256xf32>,
    %c0_187 = arith.constant 0 : index
    %c1_188 = arith.constant 1 : index
    %159 = vector.load %arg26[%c0_187, %c1_188] : memref<12x290xf32, #tpu.memory_space<vmem>>, vector<4x256xf32>
    %c4_189 = arith.constant 4 : index
    %c0_190 = arith.constant 0 : index
    %160 = vector.load %arg27[%c4_189, %c0_190] : memref<108x256xf32, #tpu.memory_space<vmem>>, vector<4x256xf32>
    tpu.vector_store %arg27[%c4_189, %c0_190], %159 {strides = array<i32>} : memref<108x256xf32, #tpu.memory_space<vmem>>, vector<4x256xf32>,
    %c0_191 = arith.constant 0 : index
    %c2_192 = arith.constant 2 : index
    %161 = vector.load %arg26[%c0_191, %c2_192] : memref<12x290xf32, #tpu.memory_space<vmem>>, vector<4x256xf32>
    %c1_193 = arith.constant 1 : index
    %c0_194 = arith.constant 0 : index
    %162 = vector.load %arg7[%c1_193, %c0_194] : memref<2x256xf32, #tpu.memory_space<vmem>>, vector<1x256xf32>
    %163 = vector.broadcast %162 : vector<1x256xf32> to vector<4x256xf32>
    %164 = arith.mulf %161, %163 : vector<4x256xf32>
    %c8_195 = arith.constant 8 : index
    %c0_196 = arith.constant 0 : index
    %165 = vector.load %arg27[%c8_195, %c0_196] : memref<108x256xf32, #tpu.memory_space<vmem>>, vector<4x256xf32>
    tpu.vector_store %arg27[%c8_195, %c0_196], %164 {strides = array<i32>} : memref<108x256xf32, #tpu.memory_space<vmem>>, vector<4x256xf32>,
    %c0_197 = arith.constant 0 : index
    %c16_198 = arith.constant 16 : index
    %166 = vector.load %arg26[%c0_197, %c16_198] : memref<12x290xf32, #tpu.memory_space<vmem>>, vector<4x256xf32>
    %c0_199 = arith.constant 0 : index
    %c0_200 = arith.constant 0 : index
    %167 = vector.load %arg7[%c0_199, %c0_200] : memref<2x256xf32, #tpu.memory_space<vmem>>, vector<1x256xf32>
    %168 = vector.broadcast %167 : vector<1x256xf32> to vector<4x256xf32>
    %169 = arith.mulf %166, %168 : vector<4x256xf32>
    %c12_201 = arith.constant 12 : index
    %c0_202 = arith.constant 0 : index
    %170 = vector.load %arg27[%c12_201, %c0_202] : memref<108x256xf32, #tpu.memory_space<vmem>>, vector<4x256xf32>
    tpu.vector_store %arg27[%c12_201, %c0_202], %169 {strides = array<i32>} : memref<108x256xf32, #tpu.memory_space<vmem>>, vector<4x256xf32>,
    %c0_203 = arith.constant 0 : index
    %c17_204 = arith.constant 17 : index
    %171 = vector.load %arg26[%c0_203, %c17_204] : memref<12x290xf32, #tpu.memory_space<vmem>>, vector<4x256xf32>
    %c16_205 = arith.constant 16 : index
    %c0_206 = arith.constant 0 : index
    %172 = vector.load %arg27[%c16_205, %c0_206] : memref<108x256xf32, #tpu.memory_space<vmem>>, vector<4x256xf32>
    tpu.vector_store %arg27[%c16_205, %c0_206], %171 {strides = array<i32>} : memref<108x256xf32, #tpu.memory_space<vmem>>, vector<4x256xf32>,
    %c0_207 = arith.constant 0 : index
    %c18_208 = arith.constant 18 : index
    %173 = vector.load %arg26[%c0_207, %c18_208] : memref<12x290xf32, #tpu.memory_space<vmem>>, vector<4x256xf32>
    %c1_209 = arith.constant 1 : index
    %c0_210 = arith.constant 0 : index
    %174 = vector.load %arg7[%c1_209, %c0_210] : memref<2x256xf32, #tpu.memory_space<vmem>>, vector<1x256xf32>
    %175 = vector.broadcast %174 : vector<1x256xf32> to vector<4x256xf32>
    %176 = arith.mulf %173, %175 : vector<4x256xf32>
    %c20_211 = arith.constant 20 : index
    %c0_212 = arith.constant 0 : index
    %177 = vector.load %arg27[%c20_211, %c0_212] : memref<108x256xf32, #tpu.memory_space<vmem>>, vector<4x256xf32>
    tpu.vector_store %arg27[%c20_211, %c0_212], %176 {strides = array<i32>} : memref<108x256xf32, #tpu.memory_space<vmem>>, vector<4x256xf32>,
    %c0_213 = arith.constant 0 : index
    %c32_214 = arith.constant 32 : index
    %178 = vector.load %arg26[%c0_213, %c32_214] : memref<12x290xf32, #tpu.memory_space<vmem>>, vector<4x256xf32>
    %c0_215 = arith.constant 0 : index
    %c0_216 = arith.constant 0 : index
    %179 = vector.load %arg7[%c0_215, %c0_216] : memref<2x256xf32, #tpu.memory_space<vmem>>, vector<1x256xf32>
    %180 = vector.broadcast %179 : vector<1x256xf32> to vector<4x256xf32>
    %181 = arith.mulf %178, %180 : vector<4x256xf32>
    %c24_217 = arith.constant 24 : index
    %c0_218 = arith.constant 0 : index
    %182 = vector.load %arg27[%c24_217, %c0_218] : memref<108x256xf32, #tpu.memory_space<vmem>>, vector<4x256xf32>
    tpu.vector_store %arg27[%c24_217, %c0_218], %181 {strides = array<i32>} : memref<108x256xf32, #tpu.memory_space<vmem>>, vector<4x256xf32>,
    %c0_219 = arith.constant 0 : index
    %c33_220 = arith.constant 33 : index
    %183 = vector.load %arg26[%c0_219, %c33_220] : memref<12x290xf32, #tpu.memory_space<vmem>>, vector<4x256xf32>
    %c28_221 = arith.constant 28 : index
    %c0_222 = arith.constant 0 : index
    %184 = vector.load %arg27[%c28_221, %c0_222] : memref<108x256xf32, #tpu.memory_space<vmem>>, vector<4x256xf32>
    tpu.vector_store %arg27[%c28_221, %c0_222], %183 {strides = array<i32>} : memref<108x256xf32, #tpu.memory_space<vmem>>, vector<4x256xf32>,
    %c0_223 = arith.constant 0 : index
    %c34_224 = arith.constant 34 : index
    %185 = vector.load %arg26[%c0_223, %c34_224] : memref<12x290xf32, #tpu.memory_space<vmem>>, vector<4x256xf32>
    %c1_225 = arith.constant 1 : index
    %c0_226 = arith.constant 0 : index
    %186 = vector.load %arg7[%c1_225, %c0_226] : memref<2x256xf32, #tpu.memory_space<vmem>>, vector<1x256xf32>
    %187 = vector.broadcast %186 : vector<1x256xf32> to vector<4x256xf32>
    %188 = arith.mulf %185, %187 : vector<4x256xf32>
    %c32_227 = arith.constant 32 : index
    %c0_228 = arith.constant 0 : index
    %189 = vector.load %arg27[%c32_227, %c0_228] : memref<108x256xf32, #tpu.memory_space<vmem>>, vector<4x256xf32>
    tpu.vector_store %arg27[%c32_227, %c0_228], %188 {strides = array<i32>} : memref<108x256xf32, #tpu.memory_space<vmem>>, vector<4x256xf32>,
    %c0_229 = arith.constant 0 : index
    %c0_230 = arith.constant 0 : index
    %190 = vector.load %arg12[%c0_229, %c0_230] : memref<4x36xf32, #tpu.memory_space<vmem>>, vector<4x36xf32>
    %c0_231 = arith.constant 0 : index
    %c0_232 = arith.constant 0 : index
    %191 = vector.load %arg27[%c0_231, %c0_232] : memref<108x256xf32, #tpu.memory_space<vmem>>, vector<36x256xf32>
    %cst_233 = arith.constant dense<0.000000e+00> : vector<4x256xf32>
    %192 = tpu.matmul %190, %191, %cst_233 {dimension_numbers = #tpu.dot_dimension_numbers<[1], [0], [0], [1], [0, 0, 1, 1], [], []>} : vector<4x36xf32>, vector<36x256xf32>, vector<4x256xf32> -> vector<4x256xf32>
    %c0_234 = arith.constant 0 : index
    %c0_235 = arith.constant 0 : index
    %193 = vector.load %arg13[%c0_234, %c0_235] : memref<4x1xf32, #tpu.memory_space<vmem>>, vector<4x1xf32>
    %194 = vector.broadcast %193 : vector<4x1xf32> to vector<4x256xf32>
    %195 = arith.addf %192, %194 : vector<4x256xf32>
    %196 = arith.mulf %150, %195 : vector<4x256xf32>
    %197 = arith.mulf %196, %13 : vector<4x256xf32>
    %c0_236 = arith.constant 0 : index
    %c0_237 = arith.constant 0 : index
    %198 = vector.load %arg5[%c0_236, %c0_237] : memref<64x256xf32, #tpu.memory_space<vmem>>, vector<64x256xf32>
    %cst_238 = arith.constant dense<0.000000e+00> : vector<8x256xf32>
    %199 = tpu.matmul %105, %198, %cst_238 {dimension_numbers = #tpu.dot_dimension_numbers<[1], [0], [0], [1], [0, 0, 1, 1], [], []>} : vector<8x64xf32>, vector<64x256xf32>, vector<8x256xf32> -> vector<8x256xf32>
    %c0_239 = arith.constant 0 : index
    %c17_240 = arith.constant 17 : index
    %200 = vector.load %arg26[%c0_239, %c17_240] : memref<12x290xf32, #tpu.memory_space<vmem>>, vector<8x256xf32>
    tpu.vector_store %arg26[%c0_239, %c17_240], %199 {strides = array<i32>} : memref<12x290xf32, #tpu.memory_space<vmem>>, vector<8x256xf32>,
    %c0_241 = arith.constant 0 : index
    %c0_242 = arith.constant 0 : index
    %201 = vector.load %arg26[%c0_241, %c0_242] : memref<12x290xf32, #tpu.memory_space<vmem>>, vector<8x256xf32>
    %c0_243 = arith.constant 0 : index
    %c0_244 = arith.constant 0 : index
    %202 = vector.load %arg7[%c0_243, %c0_244] : memref<2x256xf32, #tpu.memory_space<vmem>>, vector<1x256xf32>
    %203 = vector.broadcast %202 : vector<1x256xf32> to vector<8x256xf32>
    %204 = arith.mulf %201, %203 : vector<8x256xf32>
    %c0_245 = arith.constant 0 : index
    %c0_246 = arith.constant 0 : index
    %205 = vector.load %arg27[%c0_245, %c0_246] : memref<108x256xf32, #tpu.memory_space<vmem>>, vector<8x256xf32>
    tpu.vector_store %arg27[%c0_245, %c0_246], %204 {strides = array<i32>} : memref<108x256xf32, #tpu.memory_space<vmem>>, vector<8x256xf32>,
    %c0_247 = arith.constant 0 : index
    %c1_248 = arith.constant 1 : index
    %206 = vector.load %arg26[%c0_247, %c1_248] : memref<12x290xf32, #tpu.memory_space<vmem>>, vector<8x256xf32>
    %c8_249 = arith.constant 8 : index
    %c0_250 = arith.constant 0 : index
    %207 = vector.load %arg27[%c8_249, %c0_250] : memref<108x256xf32, #tpu.memory_space<vmem>>, vector<8x256xf32>
    tpu.vector_store %arg27[%c8_249, %c0_250], %206 {strides = array<i32>} : memref<108x256xf32, #tpu.memory_space<vmem>>, vector<8x256xf32>,
    %c0_251 = arith.constant 0 : index
    %c2_252 = arith.constant 2 : index
    %208 = vector.load %arg26[%c0_251, %c2_252] : memref<12x290xf32, #tpu.memory_space<vmem>>, vector<8x256xf32>
    %c1_253 = arith.constant 1 : index
    %c0_254 = arith.constant 0 : index
    %209 = vector.load %arg7[%c1_253, %c0_254] : memref<2x256xf32, #tpu.memory_space<vmem>>, vector<1x256xf32>
    %210 = vector.broadcast %209 : vector<1x256xf32> to vector<8x256xf32>
    %211 = arith.mulf %208, %210 : vector<8x256xf32>
    %c16_255 = arith.constant 16 : index
    %c0_256 = arith.constant 0 : index
    %212 = vector.load %arg27[%c16_255, %c0_256] : memref<108x256xf32, #tpu.memory_space<vmem>>, vector<8x256xf32>
    tpu.vector_store %arg27[%c16_255, %c0_256], %211 {strides = array<i32>} : memref<108x256xf32, #tpu.memory_space<vmem>>, vector<8x256xf32>,
    %c0_257 = arith.constant 0 : index
    %c16_258 = arith.constant 16 : index
    %213 = vector.load %arg26[%c0_257, %c16_258] : memref<12x290xf32, #tpu.memory_space<vmem>>, vector<8x256xf32>
    %c0_259 = arith.constant 0 : index
    %c0_260 = arith.constant 0 : index
    %214 = vector.load %arg7[%c0_259, %c0_260] : memref<2x256xf32, #tpu.memory_space<vmem>>, vector<1x256xf32>
    %215 = vector.broadcast %214 : vector<1x256xf32> to vector<8x256xf32>
    %216 = arith.mulf %213, %215 : vector<8x256xf32>
    %c24_261 = arith.constant 24 : index
    %c0_262 = arith.constant 0 : index
    %217 = vector.load %arg27[%c24_261, %c0_262] : memref<108x256xf32, #tpu.memory_space<vmem>>, vector<8x256xf32>
    tpu.vector_store %arg27[%c24_261, %c0_262], %216 {strides = array<i32>} : memref<108x256xf32, #tpu.memory_space<vmem>>, vector<8x256xf32>,
    %c0_263 = arith.constant 0 : index
    %c17_264 = arith.constant 17 : index
    %218 = vector.load %arg26[%c0_263, %c17_264] : memref<12x290xf32, #tpu.memory_space<vmem>>, vector<8x256xf32>
    %c32_265 = arith.constant 32 : index
    %c0_266 = arith.constant 0 : index
    %219 = vector.load %arg27[%c32_265, %c0_266] : memref<108x256xf32, #tpu.memory_space<vmem>>, vector<8x256xf32>
    tpu.vector_store %arg27[%c32_265, %c0_266], %218 {strides = array<i32>} : memref<108x256xf32, #tpu.memory_space<vmem>>, vector<8x256xf32>,
    %c0_267 = arith.constant 0 : index
    %c18_268 = arith.constant 18 : index
    %220 = vector.load %arg26[%c0_267, %c18_268] : memref<12x290xf32, #tpu.memory_space<vmem>>, vector<8x256xf32>
    %c1_269 = arith.constant 1 : index
    %c0_270 = arith.constant 0 : index
    %221 = vector.load %arg7[%c1_269, %c0_270] : memref<2x256xf32, #tpu.memory_space<vmem>>, vector<1x256xf32>
    %222 = vector.broadcast %221 : vector<1x256xf32> to vector<8x256xf32>
    %223 = arith.mulf %220, %222 : vector<8x256xf32>
    %c40_271 = arith.constant 40 : index
    %c0_272 = arith.constant 0 : index
    %224 = vector.load %arg27[%c40_271, %c0_272] : memref<108x256xf32, #tpu.memory_space<vmem>>, vector<8x256xf32>
    tpu.vector_store %arg27[%c40_271, %c0_272], %223 {strides = array<i32>} : memref<108x256xf32, #tpu.memory_space<vmem>>, vector<8x256xf32>,
    %c0_273 = arith.constant 0 : index
    %c32_274 = arith.constant 32 : index
    %225 = vector.load %arg26[%c0_273, %c32_274] : memref<12x290xf32, #tpu.memory_space<vmem>>, vector<8x256xf32>
    %c0_275 = arith.constant 0 : index
    %c0_276 = arith.constant 0 : index
    %226 = vector.load %arg7[%c0_275, %c0_276] : memref<2x256xf32, #tpu.memory_space<vmem>>, vector<1x256xf32>
    %227 = vector.broadcast %226 : vector<1x256xf32> to vector<8x256xf32>
    %228 = arith.mulf %225, %227 : vector<8x256xf32>
    %c48_277 = arith.constant 48 : index
    %c0_278 = arith.constant 0 : index
    %229 = vector.load %arg27[%c48_277, %c0_278] : memref<108x256xf32, #tpu.memory_space<vmem>>, vector<8x256xf32>
    tpu.vector_store %arg27[%c48_277, %c0_278], %228 {strides = array<i32>} : memref<108x256xf32, #tpu.memory_space<vmem>>, vector<8x256xf32>,
    %c0_279 = arith.constant 0 : index
    %c33_280 = arith.constant 33 : index
    %230 = vector.load %arg26[%c0_279, %c33_280] : memref<12x290xf32, #tpu.memory_space<vmem>>, vector<8x256xf32>
    %c56_281 = arith.constant 56 : index
    %c0_282 = arith.constant 0 : index
    %231 = vector.load %arg27[%c56_281, %c0_282] : memref<108x256xf32, #tpu.memory_space<vmem>>, vector<8x256xf32>
    tpu.vector_store %arg27[%c56_281, %c0_282], %230 {strides = array<i32>} : memref<108x256xf32, #tpu.memory_space<vmem>>, vector<8x256xf32>,
    %c0_283 = arith.constant 0 : index
    %c34_284 = arith.constant 34 : index
    %232 = vector.load %arg26[%c0_283, %c34_284] : memref<12x290xf32, #tpu.memory_space<vmem>>, vector<8x256xf32>
    %c1_285 = arith.constant 1 : index
    %c0_286 = arith.constant 0 : index
    %233 = vector.load %arg7[%c1_285, %c0_286] : memref<2x256xf32, #tpu.memory_space<vmem>>, vector<1x256xf32>
    %234 = vector.broadcast %233 : vector<1x256xf32> to vector<8x256xf32>
    %235 = arith.mulf %232, %234 : vector<8x256xf32>
    %c64_287 = arith.constant 64 : index
    %c0_288 = arith.constant 0 : index
    %236 = vector.load %arg27[%c64_287, %c0_288] : memref<108x256xf32, #tpu.memory_space<vmem>>, vector<8x256xf32>
    tpu.vector_store %arg27[%c64_287, %c0_288], %235 {strides = array<i32>} : memref<108x256xf32, #tpu.memory_space<vmem>>, vector<8x256xf32>,
    %c0_289 = arith.constant 0 : index
    %c0_290 = arith.constant 0 : index
    %237 = vector.load %arg16[%c0_289, %c0_290] : memref<8x72xf32, #tpu.memory_space<vmem>>, vector<8x72xf32>
    %c0_291 = arith.constant 0 : index
    %c0_292 = arith.constant 0 : index
    %238 = vector.load %arg27[%c0_291, %c0_292] : memref<108x256xf32, #tpu.memory_space<vmem>>, vector<72x256xf32>
    %cst_293 = arith.constant dense<0.000000e+00> : vector<8x256xf32>
    %239 = tpu.matmul %237, %238, %cst_293 {dimension_numbers = #tpu.dot_dimension_numbers<[1], [0], [0], [1], [0, 0, 1, 1], [], []>} : vector<8x72xf32>, vector<72x256xf32>, vector<8x256xf32> -> vector<8x256xf32>
    %c0_294 = arith.constant 0 : index
    %c0_295 = arith.constant 0 : index
    %240 = vector.load %arg17[%c0_294, %c0_295] : memref<8x1xf32, #tpu.memory_space<vmem>>, vector<8x1xf32>
    %241 = vector.broadcast %240 : vector<8x1xf32> to vector<8x256xf32>
    %242 = arith.addf %239, %241 : vector<8x256xf32>
    %c0_296 = arith.constant 0 : index
    %c17_297 = arith.constant 17 : index
    %243 = vector.load %arg26[%c0_296, %c17_297] : memref<12x290xf32, #tpu.memory_space<vmem>>, vector<4x256xf32>
    tpu.vector_store %arg26[%c0_296, %c17_297], %197 {strides = array<i32>} : memref<12x290xf32, #tpu.memory_space<vmem>>, vector<4x256xf32>,
    %c4_298 = arith.constant 4 : index
    %c17_299 = arith.constant 17 : index
    %244 = vector.load %arg26[%c4_298, %c17_299] : memref<12x290xf32, #tpu.memory_space<vmem>>, vector<8x256xf32>
    tpu.vector_store %arg26[%c4_298, %c17_299], %242 {strides = array<i32>} : memref<12x290xf32, #tpu.memory_space<vmem>>, vector<8x256xf32>,
    %c0_300 = arith.constant 0 : index
    %c0_301 = arith.constant 0 : index
    %245 = vector.load %arg26[%c0_300, %c0_301] : memref<12x290xf32, #tpu.memory_space<vmem>>, vector<12x256xf32>
    %c0_302 = arith.constant 0 : index
    %c0_303 = arith.constant 0 : index
    %246 = vector.load %arg7[%c0_302, %c0_303] : memref<2x256xf32, #tpu.memory_space<vmem>>, vector<1x256xf32>
    %247 = vector.broadcast %246 : vector<1x256xf32> to vector<12x256xf32>
    %248 = arith.mulf %245, %247 : vector<12x256xf32>
    %c0_304 = arith.constant 0 : index
    %c0_305 = arith.constant 0 : index
    %249 = vector.load %arg27[%c0_304, %c0_305] : memref<108x256xf32, #tpu.memory_space<vmem>>, vector<12x256xf32>
    tpu.vector_store %arg27[%c0_304, %c0_305], %248 {strides = array<i32>} : memref<108x256xf32, #tpu.memory_space<vmem>>, vector<12x256xf32>,
    %c0_306 = arith.constant 0 : index
    %c1_307 = arith.constant 1 : index
    %250 = vector.load %arg26[%c0_306, %c1_307] : memref<12x290xf32, #tpu.memory_space<vmem>>, vector<12x256xf32>
    %c12_308 = arith.constant 12 : index
    %c0_309 = arith.constant 0 : index
    %251 = vector.load %arg27[%c12_308, %c0_309] : memref<108x256xf32, #tpu.memory_space<vmem>>, vector<12x256xf32>
    tpu.vector_store %arg27[%c12_308, %c0_309], %250 {strides = array<i32>} : memref<108x256xf32, #tpu.memory_space<vmem>>, vector<12x256xf32>,
    %c0_310 = arith.constant 0 : index
    %c2_311 = arith.constant 2 : index
    %252 = vector.load %arg26[%c0_310, %c2_311] : memref<12x290xf32, #tpu.memory_space<vmem>>, vector<12x256xf32>
    %c1_312 = arith.constant 1 : index
    %c0_313 = arith.constant 0 : index
    %253 = vector.load %arg7[%c1_312, %c0_313] : memref<2x256xf32, #tpu.memory_space<vmem>>, vector<1x256xf32>
    %254 = vector.broadcast %253 : vector<1x256xf32> to vector<12x256xf32>
    %255 = arith.mulf %252, %254 : vector<12x256xf32>
    %c24_314 = arith.constant 24 : index
    %c0_315 = arith.constant 0 : index
    %256 = vector.load %arg27[%c24_314, %c0_315] : memref<108x256xf32, #tpu.memory_space<vmem>>, vector<12x256xf32>
    tpu.vector_store %arg27[%c24_314, %c0_315], %255 {strides = array<i32>} : memref<108x256xf32, #tpu.memory_space<vmem>>, vector<12x256xf32>,
    %c0_316 = arith.constant 0 : index
    %c16_317 = arith.constant 16 : index
    %257 = vector.load %arg26[%c0_316, %c16_317] : memref<12x290xf32, #tpu.memory_space<vmem>>, vector<12x256xf32>
    %c0_318 = arith.constant 0 : index
    %c0_319 = arith.constant 0 : index
    %258 = vector.load %arg7[%c0_318, %c0_319] : memref<2x256xf32, #tpu.memory_space<vmem>>, vector<1x256xf32>
    %259 = vector.broadcast %258 : vector<1x256xf32> to vector<12x256xf32>
    %260 = arith.mulf %257, %259 : vector<12x256xf32>
    %c36 = arith.constant 36 : index
    %c0_320 = arith.constant 0 : index
    %261 = vector.load %arg27[%c36, %c0_320] : memref<108x256xf32, #tpu.memory_space<vmem>>, vector<12x256xf32>
    tpu.vector_store %arg27[%c36, %c0_320], %260 {strides = array<i32>} : memref<108x256xf32, #tpu.memory_space<vmem>>, vector<12x256xf32>,
    %c0_321 = arith.constant 0 : index
    %c17_322 = arith.constant 17 : index
    %262 = vector.load %arg26[%c0_321, %c17_322] : memref<12x290xf32, #tpu.memory_space<vmem>>, vector<12x256xf32>
    %c48_323 = arith.constant 48 : index
    %c0_324 = arith.constant 0 : index
    %263 = vector.load %arg27[%c48_323, %c0_324] : memref<108x256xf32, #tpu.memory_space<vmem>>, vector<12x256xf32>
    tpu.vector_store %arg27[%c48_323, %c0_324], %262 {strides = array<i32>} : memref<108x256xf32, #tpu.memory_space<vmem>>, vector<12x256xf32>,
    %c0_325 = arith.constant 0 : index
    %c18_326 = arith.constant 18 : index
    %264 = vector.load %arg26[%c0_325, %c18_326] : memref<12x290xf32, #tpu.memory_space<vmem>>, vector<12x256xf32>
    %c1_327 = arith.constant 1 : index
    %c0_328 = arith.constant 0 : index
    %265 = vector.load %arg7[%c1_327, %c0_328] : memref<2x256xf32, #tpu.memory_space<vmem>>, vector<1x256xf32>
    %266 = vector.broadcast %265 : vector<1x256xf32> to vector<12x256xf32>
    %267 = arith.mulf %264, %266 : vector<12x256xf32>
    %c60 = arith.constant 60 : index
    %c0_329 = arith.constant 0 : index
    %268 = vector.load %arg27[%c60, %c0_329] : memref<108x256xf32, #tpu.memory_space<vmem>>, vector<12x256xf32>
    tpu.vector_store %arg27[%c60, %c0_329], %267 {strides = array<i32>} : memref<108x256xf32, #tpu.memory_space<vmem>>, vector<12x256xf32>,
    %c0_330 = arith.constant 0 : index
    %c32_331 = arith.constant 32 : index
    %269 = vector.load %arg26[%c0_330, %c32_331] : memref<12x290xf32, #tpu.memory_space<vmem>>, vector<12x256xf32>
    %c0_332 = arith.constant 0 : index
    %c0_333 = arith.constant 0 : index
    %270 = vector.load %arg7[%c0_332, %c0_333] : memref<2x256xf32, #tpu.memory_space<vmem>>, vector<1x256xf32>
    %271 = vector.broadcast %270 : vector<1x256xf32> to vector<12x256xf32>
    %272 = arith.mulf %269, %271 : vector<12x256xf32>
    %c72 = arith.constant 72 : index
    %c0_334 = arith.constant 0 : index
    %273 = vector.load %arg27[%c72, %c0_334] : memref<108x256xf32, #tpu.memory_space<vmem>>, vector<12x256xf32>
    tpu.vector_store %arg27[%c72, %c0_334], %272 {strides = array<i32>} : memref<108x256xf32, #tpu.memory_space<vmem>>, vector<12x256xf32>,
    %c0_335 = arith.constant 0 : index
    %c33_336 = arith.constant 33 : index
    %274 = vector.load %arg26[%c0_335, %c33_336] : memref<12x290xf32, #tpu.memory_space<vmem>>, vector<12x256xf32>
    %c84 = arith.constant 84 : index
    %c0_337 = arith.constant 0 : index
    %275 = vector.load %arg27[%c84, %c0_337] : memref<108x256xf32, #tpu.memory_space<vmem>>, vector<12x256xf32>
    tpu.vector_store %arg27[%c84, %c0_337], %274 {strides = array<i32>} : memref<108x256xf32, #tpu.memory_space<vmem>>, vector<12x256xf32>,
    %c0_338 = arith.constant 0 : index
    %c34_339 = arith.constant 34 : index
    %276 = vector.load %arg26[%c0_338, %c34_339] : memref<12x290xf32, #tpu.memory_space<vmem>>, vector<12x256xf32>
    %c1_340 = arith.constant 1 : index
    %c0_341 = arith.constant 0 : index
    %277 = vector.load %arg7[%c1_340, %c0_341] : memref<2x256xf32, #tpu.memory_space<vmem>>, vector<1x256xf32>
    %278 = vector.broadcast %277 : vector<1x256xf32> to vector<12x256xf32>
    %279 = arith.mulf %276, %278 : vector<12x256xf32>
    %c96 = arith.constant 96 : index
    %c0_342 = arith.constant 0 : index
    %280 = vector.load %arg27[%c96, %c0_342] : memref<108x256xf32, #tpu.memory_space<vmem>>, vector<12x256xf32>
    tpu.vector_store %arg27[%c96, %c0_342], %279 {strides = array<i32>} : memref<108x256xf32, #tpu.memory_space<vmem>>, vector<12x256xf32>,
    %c0_343 = arith.constant 0 : index
    %c0_344 = arith.constant 0 : index
    %281 = vector.load %arg18[%c0_343, %c0_344] : memref<12x108xf32, #tpu.memory_space<vmem>>, vector<12x108xf32>
    %c0_345 = arith.constant 0 : index
    %c0_346 = arith.constant 0 : index
    %282 = vector.load %arg27[%c0_345, %c0_346] : memref<108x256xf32, #tpu.memory_space<vmem>>, vector<108x256xf32>
    %cst_347 = arith.constant dense<0.000000e+00> : vector<12x256xf32>
    %283 = tpu.matmul %281, %282, %cst_347 {dimension_numbers = #tpu.dot_dimension_numbers<[1], [0], [0], [1], [0, 0, 1, 1], [], []>} : vector<12x108xf32>, vector<108x256xf32>, vector<12x256xf32> -> vector<12x256xf32>
    %c0_348 = arith.constant 0 : index
    %c0_349 = arith.constant 0 : index
    %284 = vector.load %arg19[%c0_348, %c0_349] : memref<12x1xf32, #tpu.memory_space<vmem>>, vector<12x1xf32>
    %285 = vector.broadcast %284 : vector<12x1xf32> to vector<12x256xf32>
    %286 = arith.addf %283, %285 : vector<12x256xf32>
    %c0_350 = arith.constant 0 : index
    %c17_351 = arith.constant 17 : index
    %287 = vector.load %arg26[%c0_350, %c17_351] : memref<12x290xf32, #tpu.memory_space<vmem>>, vector<12x256xf32>
    tpu.vector_store %arg26[%c0_350, %c17_351], %286 {strides = array<i32>} : memref<12x290xf32, #tpu.memory_space<vmem>>, vector<12x256xf32>,
    %c0_352 = arith.constant 0 : index
    %c0_353 = arith.constant 0 : index
    %288 = vector.load %arg26[%c0_352, %c0_353] : memref<12x290xf32, #tpu.memory_space<vmem>>, vector<12x256xf32>
    %c0_354 = arith.constant 0 : index
    %c0_355 = arith.constant 0 : index
    %289 = vector.load %arg7[%c0_354, %c0_355] : memref<2x256xf32, #tpu.memory_space<vmem>>, vector<1x256xf32>
    %290 = vector.broadcast %289 : vector<1x256xf32> to vector<12x256xf32>
    %291 = arith.mulf %288, %290 : vector<12x256xf32>
    %c0_356 = arith.constant 0 : index
    %c0_357 = arith.constant 0 : index
    %292 = vector.load %arg27[%c0_356, %c0_357] : memref<108x256xf32, #tpu.memory_space<vmem>>, vector<12x256xf32>
    tpu.vector_store %arg27[%c0_356, %c0_357], %291 {strides = array<i32>} : memref<108x256xf32, #tpu.memory_space<vmem>>, vector<12x256xf32>,
    %c0_358 = arith.constant 0 : index
    %c1_359 = arith.constant 1 : index
    %293 = vector.load %arg26[%c0_358, %c1_359] : memref<12x290xf32, #tpu.memory_space<vmem>>, vector<12x256xf32>
    %c12_360 = arith.constant 12 : index
    %c0_361 = arith.constant 0 : index
    %294 = vector.load %arg27[%c12_360, %c0_361] : memref<108x256xf32, #tpu.memory_space<vmem>>, vector<12x256xf32>
    tpu.vector_store %arg27[%c12_360, %c0_361], %293 {strides = array<i32>} : memref<108x256xf32, #tpu.memory_space<vmem>>, vector<12x256xf32>,
    %c0_362 = arith.constant 0 : index
    %c2_363 = arith.constant 2 : index
    %295 = vector.load %arg26[%c0_362, %c2_363] : memref<12x290xf32, #tpu.memory_space<vmem>>, vector<12x256xf32>
    %c1_364 = arith.constant 1 : index
    %c0_365 = arith.constant 0 : index
    %296 = vector.load %arg7[%c1_364, %c0_365] : memref<2x256xf32, #tpu.memory_space<vmem>>, vector<1x256xf32>
    %297 = vector.broadcast %296 : vector<1x256xf32> to vector<12x256xf32>
    %298 = arith.mulf %295, %297 : vector<12x256xf32>
    %c24_366 = arith.constant 24 : index
    %c0_367 = arith.constant 0 : index
    %299 = vector.load %arg27[%c24_366, %c0_367] : memref<108x256xf32, #tpu.memory_space<vmem>>, vector<12x256xf32>
    tpu.vector_store %arg27[%c24_366, %c0_367], %298 {strides = array<i32>} : memref<108x256xf32, #tpu.memory_space<vmem>>, vector<12x256xf32>,
    %c0_368 = arith.constant 0 : index
    %c16_369 = arith.constant 16 : index
    %300 = vector.load %arg26[%c0_368, %c16_369] : memref<12x290xf32, #tpu.memory_space<vmem>>, vector<12x256xf32>
    %c0_370 = arith.constant 0 : index
    %c0_371 = arith.constant 0 : index
    %301 = vector.load %arg7[%c0_370, %c0_371] : memref<2x256xf32, #tpu.memory_space<vmem>>, vector<1x256xf32>
    %302 = vector.broadcast %301 : vector<1x256xf32> to vector<12x256xf32>
    %303 = arith.mulf %300, %302 : vector<12x256xf32>
    %c36_372 = arith.constant 36 : index
    %c0_373 = arith.constant 0 : index
    %304 = vector.load %arg27[%c36_372, %c0_373] : memref<108x256xf32, #tpu.memory_space<vmem>>, vector<12x256xf32>
    tpu.vector_store %arg27[%c36_372, %c0_373], %303 {strides = array<i32>} : memref<108x256xf32, #tpu.memory_space<vmem>>, vector<12x256xf32>,
    %c0_374 = arith.constant 0 : index
    %c17_375 = arith.constant 17 : index
    %305 = vector.load %arg26[%c0_374, %c17_375] : memref<12x290xf32, #tpu.memory_space<vmem>>, vector<12x256xf32>
    %c48_376 = arith.constant 48 : index
    %c0_377 = arith.constant 0 : index
    %306 = vector.load %arg27[%c48_376, %c0_377] : memref<108x256xf32, #tpu.memory_space<vmem>>, vector<12x256xf32>
    tpu.vector_store %arg27[%c48_376, %c0_377], %305 {strides = array<i32>} : memref<108x256xf32, #tpu.memory_space<vmem>>, vector<12x256xf32>,
    %c0_378 = arith.constant 0 : index
    %c18_379 = arith.constant 18 : index
    %307 = vector.load %arg26[%c0_378, %c18_379] : memref<12x290xf32, #tpu.memory_space<vmem>>, vector<12x256xf32>
    %c1_380 = arith.constant 1 : index
    %c0_381 = arith.constant 0 : index
    %308 = vector.load %arg7[%c1_380, %c0_381] : memref<2x256xf32, #tpu.memory_space<vmem>>, vector<1x256xf32>
    %309 = vector.broadcast %308 : vector<1x256xf32> to vector<12x256xf32>
    %310 = arith.mulf %307, %309 : vector<12x256xf32>
    %c60_382 = arith.constant 60 : index
    %c0_383 = arith.constant 0 : index
    %311 = vector.load %arg27[%c60_382, %c0_383] : memref<108x256xf32, #tpu.memory_space<vmem>>, vector<12x256xf32>
    tpu.vector_store %arg27[%c60_382, %c0_383], %310 {strides = array<i32>} : memref<108x256xf32, #tpu.memory_space<vmem>>, vector<12x256xf32>,
    %c0_384 = arith.constant 0 : index
    %c32_385 = arith.constant 32 : index
    %312 = vector.load %arg26[%c0_384, %c32_385] : memref<12x290xf32, #tpu.memory_space<vmem>>, vector<12x256xf32>
    %c0_386 = arith.constant 0 : index
    %c0_387 = arith.constant 0 : index
    %313 = vector.load %arg7[%c0_386, %c0_387] : memref<2x256xf32, #tpu.memory_space<vmem>>, vector<1x256xf32>
    %314 = vector.broadcast %313 : vector<1x256xf32> to vector<12x256xf32>
    %315 = arith.mulf %312, %314 : vector<12x256xf32>
    %c72_388 = arith.constant 72 : index
    %c0_389 = arith.constant 0 : index
    %316 = vector.load %arg27[%c72_388, %c0_389] : memref<108x256xf32, #tpu.memory_space<vmem>>, vector<12x256xf32>
    tpu.vector_store %arg27[%c72_388, %c0_389], %315 {strides = array<i32>} : memref<108x256xf32, #tpu.memory_space<vmem>>, vector<12x256xf32>,
    %c0_390 = arith.constant 0 : index
    %c33_391 = arith.constant 33 : index
    %317 = vector.load %arg26[%c0_390, %c33_391] : memref<12x290xf32, #tpu.memory_space<vmem>>, vector<12x256xf32>
    %c84_392 = arith.constant 84 : index
    %c0_393 = arith.constant 0 : index
    %318 = vector.load %arg27[%c84_392, %c0_393] : memref<108x256xf32, #tpu.memory_space<vmem>>, vector<12x256xf32>
    tpu.vector_store %arg27[%c84_392, %c0_393], %317 {strides = array<i32>} : memref<108x256xf32, #tpu.memory_space<vmem>>, vector<12x256xf32>,
    %c0_394 = arith.constant 0 : index
    %c34_395 = arith.constant 34 : index
    %319 = vector.load %arg26[%c0_394, %c34_395] : memref<12x290xf32, #tpu.memory_space<vmem>>, vector<12x256xf32>
    %c1_396 = arith.constant 1 : index
    %c0_397 = arith.constant 0 : index
    %320 = vector.load %arg7[%c1_396, %c0_397] : memref<2x256xf32, #tpu.memory_space<vmem>>, vector<1x256xf32>
    %321 = vector.broadcast %320 : vector<1x256xf32> to vector<12x256xf32>
    %322 = arith.mulf %319, %321 : vector<12x256xf32>
    %c96_398 = arith.constant 96 : index
    %c0_399 = arith.constant 0 : index
    %323 = vector.load %arg27[%c96_398, %c0_399] : memref<108x256xf32, #tpu.memory_space<vmem>>, vector<12x256xf32>
    tpu.vector_store %arg27[%c96_398, %c0_399], %322 {strides = array<i32>} : memref<108x256xf32, #tpu.memory_space<vmem>>, vector<12x256xf32>,
    %c0_400 = arith.constant 0 : index
    %c0_401 = arith.constant 0 : index
    %324 = vector.load %arg20[%c0_400, %c0_401] : memref<12x108xf32, #tpu.memory_space<vmem>>, vector<12x108xf32>
    %c0_402 = arith.constant 0 : index
    %c0_403 = arith.constant 0 : index
    %325 = vector.load %arg27[%c0_402, %c0_403] : memref<108x256xf32, #tpu.memory_space<vmem>>, vector<108x256xf32>
    %cst_404 = arith.constant dense<0.000000e+00> : vector<12x256xf32>
    %326 = tpu.matmul %324, %325, %cst_404 {dimension_numbers = #tpu.dot_dimension_numbers<[1], [0], [0], [1], [0, 0, 1, 1], [], []>} : vector<12x108xf32>, vector<108x256xf32>, vector<12x256xf32> -> vector<12x256xf32>
    %c0_405 = arith.constant 0 : index
    %c0_406 = arith.constant 0 : index
    %327 = vector.load %arg21[%c0_405, %c0_406] : memref<12x1xf32, #tpu.memory_space<vmem>>, vector<12x1xf32>
    %328 = vector.broadcast %327 : vector<12x1xf32> to vector<12x256xf32>
    %329 = arith.addf %326, %328 : vector<12x256xf32>
    %c0_407 = arith.constant 0 : index
    %c0_408 = arith.constant 0 : index
    %330 = vector.load %arg22[%c0_407, %c0_408] : memref<4x12xf32, #tpu.memory_space<vmem>>, vector<4x12xf32>
    %cst_409 = arith.constant dense<0.000000e+00> : vector<4x256xf32>
    %331 = tpu.matmul %330, %329, %cst_409 {dimension_numbers = #tpu.dot_dimension_numbers<[1], [0], [0], [1], [0, 0, 1, 1], [], []>} : vector<4x12xf32>, vector<12x256xf32>, vector<4x256xf32> -> vector<4x256xf32>
    %c0_410 = arith.constant 0 : index
    %c0_411 = arith.constant 0 : index
    %332 = vector.load %arg23[%c0_410, %c0_411] : memref<4x1xf32, #tpu.memory_space<vmem>>, vector<4x1xf32>
    %333 = vector.broadcast %332 : vector<4x1xf32> to vector<4x256xf32>
    %334 = arith.addf %331, %333 : vector<4x256xf32>
    %c0_412 = arith.constant 0 : index
    %c0_413 = arith.constant 0 : index
    %c0_414 = arith.constant 0 : index
    %335 = vector.load %arg24[%c0_412, %c0_413, %c0_414] : memref<1x4x256xf32, #tpu.memory_space<vmem>>, vector<1x4x256xf32>
    %336 = vector.shape_cast %335 : vector<1x4x256xf32> to vector<4x256xf32>
    %337 = vector.shape_cast %334 : vector<4x256xf32> to vector<1x4x256xf32>
    tpu.vector_store %arg24[%c0_412, %c0_413, %c0_414], %337 {strides = array<i32>} : memref<1x4x256xf32, #tpu.memory_space<vmem>>, vector<1x4x256xf32>,
    return
  }
  func.func @transform_0(%arg0: i32) -> (i32, i32, i32) {
    %c0_i32 = arith.constant 0 : i32
    %c0_i32_0 = arith.constant 0 : i32
    %c0_i32_1 = arith.constant 0 : i32
    return %arg0, %c0_i32, %c0_i32_0 : i32, i32, i32
  }
  func.func @transform_1(%arg0: i32) -> (i32, i32, i32) {
    %c0_i32 = arith.constant 0 : i32
    %c0_i32_0 = arith.constant 0 : i32
    %c0_i32_1 = arith.constant 0 : i32
    return %arg0, %c0_i32, %c0_i32_0 : i32, i32, i32
  }
  func.func @transform_2(%arg0: i32) -> (i32, i32, i32) {
    %c0_i32 = arith.constant 0 : i32
    %c0_i32_0 = arith.constant 0 : i32
    %c0_i32_1 = arith.constant 0 : i32
    return %arg0, %c0_i32, %c0_i32_0 : i32, i32, i32
  }
  func.func @transform_3(%arg0: i32) -> (i32, i32) {
    %c0_i32 = arith.constant 0 : i32
    %c0_i32_0 = arith.constant 0 : i32
    %c0_i32_1 = arith.constant 0 : i32
    return %c0_i32, %c0_i32_0 : i32, i32
  }
  func.func @transform_4(%arg0: i32) -> (i32, i32) {
    %c0_i32 = arith.constant 0 : i32
    %c0_i32_0 = arith.constant 0 : i32
    %c0_i32_1 = arith.constant 0 : i32
    return %c0_i32, %c0_i32_0 : i32, i32
  }
  func.func @transform_5(%arg0: i32) -> (i32, i32) {
    %c0_i32 = arith.constant 0 : i32
    %c0_i32_0 = arith.constant 0 : i32
    %c0_i32_1 = arith.constant 0 : i32
    return %c0_i32, %c0_i32_0 : i32, i32
  }
  func.func @transform_6(%arg0: i32) -> (i32, i32) {
    %c0_i32 = arith.constant 0 : i32
    %c0_i32_0 = arith.constant 0 : i32
    %c0_i32_1 = arith.constant 0 : i32
    return %c0_i32, %c0_i32_0 : i32, i32
  }
  func.func @transform_7(%arg0: i32) -> (i32, i32) {
    %c0_i32 = arith.constant 0 : i32
    %c0_i32_0 = arith.constant 0 : i32
    %c0_i32_1 = arith.constant 0 : i32
    return %c0_i32, %c0_i32_0 : i32, i32
  }
  func.func @transform_8(%arg0: i32) -> (i32, i32) {
    %c0_i32 = arith.constant 0 : i32
    %c0_i32_0 = arith.constant 0 : i32
    %c0_i32_1 = arith.constant 0 : i32
    return %c0_i32, %c0_i32_0 : i32, i32
  }
  func.func @transform_9(%arg0: i32) -> (i32, i32) {
    %c0_i32 = arith.constant 0 : i32
    %c0_i32_0 = arith.constant 0 : i32
    %c0_i32_1 = arith.constant 0 : i32
    return %c0_i32, %c0_i32_0 : i32, i32
  }
  func.func @transform_10(%arg0: i32) -> (i32, i32) {
    %c0_i32 = arith.constant 0 : i32
    %c0_i32_0 = arith.constant 0 : i32
    %c0_i32_1 = arith.constant 0 : i32
    return %c0_i32, %c0_i32_0 : i32, i32
  }
  func.func @transform_11(%arg0: i32) -> (i32, i32) {
    %c0_i32 = arith.constant 0 : i32
    %c0_i32_0 = arith.constant 0 : i32
    %c0_i32_1 = arith.constant 0 : i32
    return %c0_i32, %c0_i32_0 : i32, i32
  }
  func.func @transform_12(%arg0: i32) -> (i32, i32) {
    %c0_i32 = arith.constant 0 : i32
    %c0_i32_0 = arith.constant 0 : i32
    %c0_i32_1 = arith.constant 0 : i32
    return %c0_i32, %c0_i32_0 : i32, i32
  }
  func.func @transform_13(%arg0: i32) -> (i32, i32) {
    %c0_i32 = arith.constant 0 : i32
    %c0_i32_0 = arith.constant 0 : i32
    %c0_i32_1 = arith.constant 0 : i32
    return %c0_i32, %c0_i32_0 : i32, i32
  }
  func.func @transform_14(%arg0: i32) -> (i32, i32) {
    %c0_i32 = arith.constant 0 : i32
    %c0_i32_0 = arith.constant 0 : i32
    %c0_i32_1 = arith.constant 0 : i32
    return %c0_i32, %c0_i32_0 : i32, i32
  }
  func.func @transform_15(%arg0: i32) -> (i32, i32) {
    %c0_i32 = arith.constant 0 : i32
    %c0_i32_0 = arith.constant 0 : i32
    %c0_i32_1 = arith.constant 0 : i32
    return %c0_i32, %c0_i32_0 : i32, i32
  }
  func.func @transform_16(%arg0: i32) -> (i32, i32) {
    %c0_i32 = arith.constant 0 : i32
    %c0_i32_0 = arith.constant 0 : i32
    %c0_i32_1 = arith.constant 0 : i32
    return %c0_i32, %c0_i32_0 : i32, i32
  }
  func.func @transform_17(%arg0: i32) -> (i32, i32) {
    %c0_i32 = arith.constant 0 : i32
    %c0_i32_0 = arith.constant 0 : i32
    %c0_i32_1 = arith.constant 0 : i32
    return %c0_i32, %c0_i32_0 : i32, i32
  }
  func.func @transform_18(%arg0: i32) -> (i32, i32) {
    %c0_i32 = arith.constant 0 : i32
    %c0_i32_0 = arith.constant 0 : i32
    %c0_i32_1 = arith.constant 0 : i32
    return %c0_i32, %c0_i32_0 : i32, i32
  }
  func.func @transform_19(%arg0: i32) -> (i32, i32) {
    %c0_i32 = arith.constant 0 : i32
    %c0_i32_0 = arith.constant 0 : i32
    %c0_i32_1 = arith.constant 0 : i32
    return %c0_i32, %c0_i32_0 : i32, i32
  }
  func.func @transform_20(%arg0: i32) -> (i32, i32) {
    %c0_i32 = arith.constant 0 : i32
    %c0_i32_0 = arith.constant 0 : i32
    %c0_i32_1 = arith.constant 0 : i32
    return %c0_i32, %c0_i32_0 : i32, i32
  }
  func.func @transform_21(%arg0: i32) -> (i32, i32) {
    %c0_i32 = arith.constant 0 : i32
    %c0_i32_0 = arith.constant 0 : i32
    %c0_i32_1 = arith.constant 0 : i32
    return %c0_i32, %c0_i32_0 : i32, i32
  }
  func.func @transform_22(%arg0: i32) -> (i32, i32) {
    %c0_i32 = arith.constant 0 : i32
    %c0_i32_0 = arith.constant 0 : i32
    %c0_i32_1 = arith.constant 0 : i32
    return %c0_i32, %c0_i32_0 : i32, i32
  }
  func.func @transform_23(%arg0: i32) -> (i32, i32, i32) {
    %c0_i32 = arith.constant 0 : i32
    %c0_i32_0 = arith.constant 0 : i32
    %c0_i32_1 = arith.constant 0 : i32
    return %arg0, %c0_i32, %c0_i32_0 : i32, i32, i32
  }
}

</mosaic_0001>

<llo_original>
// kernel: sad_forward.1
$region0: #{sad_forward.1}
  #allocation0 [shape = 'u32[]', space=smem, size = 0x4, offset = 0x4, fixed_abs, tag = 'smem constant byte address 0x4 - core index']
  #allocation1 [shape = 'u32[144,128]{1,0:T(1,128)}', space=vmem, size = 0x12000, scoped, tag = 'internal scratch']
  #allocation2 [shape = 'f32[8,82]{1,0:T(8,128)}', space=vmem, size = 0x1000, scoped, tag = 'scratch operand']
  #allocation3 [shape = 'f32[12,290]{1,0:T(8,128)}', space=vmem, size = 0x6000, scoped, tag = 'scratch operand']
  #allocation4 [shape = 'f32[108,256]{1,0:T(8,128)}', space=vmem, size = 0x1c000, scoped, tag = 'scratch operand']
  %s0 = inlined_call_operand.vmem [shape: f32[2,4,16], index: 0, kind: input, shape index: {}]
  %s1 = inlined_call_operand.vmem [shape: f32[2,4,64], index: 1, kind: input, shape index: {}]
  %s2 = inlined_call_operand.vmem [shape: f32[2,4,256], index: 2, kind: input, shape index: {}]
  %s3 = inlined_call_operand.vmem [shape: f32[16,64], index: 3, kind: input, shape index: {}]
  %s4 = inlined_call_operand.vmem [shape: f32[64,256], index: 4, kind: input, shape index: {}]
  %s5 = inlined_call_operand.vmem [shape: f32[2,64], index: 5, kind: input, shape index: {}]
  %s6 = inlined_call_operand.vmem [shape: f32[2,256], index: 6, kind: input, shape index: {}]
  %s7 = inlined_call_operand.vmem [shape: f32[8,36], index: 7, kind: input, shape index: {}]
  %s8 = inlined_call_operand.vmem [shape: f32[8,1], index: 8, kind: input, shape index: {}]
  %s9 = inlined_call_operand.vmem [shape: f32[4,36], index: 9, kind: input, shape index: {}]
  %s10 = inlined_call_operand.vmem [shape: f32[4,1], index: 10, kind: input, shape index: {}]
  %s11 = inlined_call_operand.vmem [shape: f32[4,36], index: 11, kind: input, shape index: {}]
  %s12 = inlined_call_operand.vmem [shape: f32[4,1], index: 12, kind: input, shape index: {}]
  %s13 = inlined_call_operand.vmem [shape: f32[8,72], index: 13, kind: input, shape index: {}]
  %s14 = inlined_call_operand.vmem [shape: f32[8,1], index: 14, kind: input, shape index: {}]
  %s15 = inlined_call_operand.vmem [shape: f32[8,72], index: 15, kind: input, shape index: {}]
  %s16 = inlined_call_operand.vmem [shape: f32[8,1], index: 16, kind: input, shape index: {}]
  %s17 = inlined_call_operand.vmem [shape: f32[12,108], index: 17, kind: input, shape index: {}]
  %s18 = inlined_call_operand.vmem [shape: f32[12,1], index: 18, kind: input, shape index: {}]
  %s19 = inlined_call_operand.vmem [shape: f32[12,108], index: 19, kind: input, shape index: {}]
  %s20 = inlined_call_operand.vmem [shape: f32[12,1], index: 20, kind: input, shape index: {}]
  %s21 = inlined_call_operand.vmem [shape: f32[4,12], index: 21, kind: input, shape index: {}]
  %s22 = inlined_call_operand.vmem [shape: f32[4,1], index: 22, kind: input, shape index: {}]
  %s23 = inlined_call_operand.vmem [shape: f32[2,4,256], index: 23, kind: output, shape index: {}]
  %s24 = sld [smem:[#allocation0]]
  $region125: #{sad_forward.1} parent=0
    _
  %s26 = ssub.s32 1, %s24
  %s27 = scalar_select 0, %s26, %s24
  loop: start=0, step=1, limit=4
  $region2: #{sad_forward.1} parent=0 // loop_pre_header
    _
  $region3: #{sad_forward.1} parent=0 // loop_header
    %s29 = sphi 0, %s33
    %p30 = scmp.ge.s32.totalorder %s29, 4
    %s39 = sphi 0, %s41
    %s42 = sphi 0, %s39
    %s43 = sphi 0, %s42
    %s59 = sphi 0, %s43
    %s65 = sphi 0, %s67
    %s68 = sphi 0, %s65
    %s69 = sphi 0, %s68
    %s85 = sphi 0, %s69
    %s91 = sphi 0, %s93
    %s94 = sphi 0, %s91
    %s95 = sphi 0, %s94
    %s111 = sphi 0, %s95
    %s115 = sphi 0, %s115
    %s117 = sphi 0, %s115
    %s118 = sphi 0, %s117
    %s132 = sphi 0, %s118
    %s136 = sphi 0, %s136
    %s138 = sphi 0, %s136
    %s139 = sphi 0, %s138
    %s153 = sphi 0, %s139
    %s157 = sphi 0, %s157
    %s159 = sphi 0, %s157
    %s160 = sphi 0, %s159
    %s174 = sphi 0, %s160
    %s178 = sphi 0, %s178
    %s180 = sphi 0, %s178
    %s181 = sphi 0, %s180
    %s195 = sphi 0, %s181
    %s199 = sphi 0, %s199
    %s201 = sphi 0, %s199
    %s202 = sphi 0, %s201
    %s216 = sphi 0, %s202
    %s220 = sphi 0, %s220
    %s222 = sphi 0, %s220
    %s223 = sphi 0, %s222
    %s237 = sphi 0, %s223
    %s241 = sphi 0, %s241
    %s243 = sphi 0, %s241
    %s244 = sphi 0, %s243
    %s258 = sphi 0, %s244
    %s262 = sphi 0, %s262
    %s264 = sphi 0, %s262
    %s265 = sphi 0, %s264
    %s279 = sphi 0, %s265
    %s283 = sphi 0, %s283
    %s285 = sphi 0, %s283
    %s286 = sphi 0, %s285
    %s300 = sphi 0, %s286
    %s304 = sphi 0, %s304
    %s306 = sphi 0, %s304
    %s307 = sphi 0, %s306
    %s321 = sphi 0, %s307
    %s325 = sphi 0, %s325
    %s327 = sphi 0, %s325
    %s328 = sphi 0, %s327
    %s342 = sphi 0, %s328
    %s346 = sphi 0, %s346
    %s348 = sphi 0, %s346
    %s349 = sphi 0, %s348
    %s363 = sphi 0, %s349
    %s367 = sphi 0, %s367
    %s369 = sphi 0, %s367
    %s370 = sphi 0, %s369
    %s384 = sphi 0, %s370
    %s388 = sphi 0, %s388
    %s390 = sphi 0, %s388
    %s391 = sphi 0, %s390
    %s405 = sphi 0, %s391
    %s409 = sphi 0, %s409
    %s411 = sphi 0, %s409
    %s412 = sphi 0, %s411
    %s426 = sphi 0, %s412
    %s430 = sphi 0, %s430
    %s432 = sphi 0, %s430
    %s433 = sphi 0, %s432
    %s447 = sphi 0, %s433
    %s451 = sphi 0, %s451
    %s453 = sphi 0, %s451
    %s454 = sphi 0, %s453
    %s468 = sphi 0, %s454
    %s472 = sphi 0, %s472
    %s474 = sphi 0, %s472
    %s475 = sphi 0, %s474
    %s489 = sphi 0, %s475
    %s493 = sphi 0, %s493
    %s495 = sphi 0, %s493
    %s496 = sphi 0, %s495
    %s510 = sphi 0, %s496
    %s514 = sphi 0, %s514
    %s516 = sphi 0, %s514
    %s517 = sphi 0, %s516
    %s531 = sphi 0, %s517
    %s537 = sphi 0, %s539
    %s540 = sphi 0, %s537
    %s541 = sphi 0, %s540
    %s557 = sphi 0, %s541
  $region4: #{sad_forward.1} parent=0 // loop_header_branch
    %32 = sbr.rel (%p30) target = $region8
  $region5: #{sad_forward.1} parent=0 // loop_body
    %s34 = ssub.s32 %s29, 1
    %s35 = ssub.s32 %s29, 2
    %s36 = sadd.s32 %s29, 1
    %s37 = ssub.s32 %s29, %s36
    %p38 = scmp.eq.s32.totalorder %s37, 0
    %s40 = sadd.s32 %s39, 1
    %s41 = scalar_select %p38, %s39, %s40
    %p44 = pneg %p38
    %p45 = scmp.eq.s32.totalorder %s29, 1
    %p46 = por %p44, %p45
    %p47 = scmp.ne.s32.totalorder %s39, %s42
    %p48 = scmp.eq.s32.totalorder %s29, 0
    %p49 = por %p47, %p48
    %p50 = scmp.ne.s32.totalorder %s39, %s42
    %p51 = scmp.eq.s32.totalorder %s34, 1
    %p52 = por %p50, %p51
    %p53 = scmp.ne.s32.totalorder %s42, %s43
    %p54 = scmp.eq.s32.totalorder %s34, 0
    %p55 = por %p53, %p54
    %p56 = scmp.ne.s32.totalorder %s42, %s43
    %p57 = scmp.eq.s32.totalorder %s35, 1
    %p58 = por %p56, %p57
    %p60 = scmp.ne.s32.totalorder %s43, %s59
    %p61 = scmp.eq.s32.totalorder %s35, 0
    %p62 = por %p60, %p61
    %s63 = ssub.s32 %s29, %s36
    %p64 = scmp.eq.s32.totalorder %s63, 0
    %s66 = sadd.s32 %s65, 1
    %s67 = scalar_select %p64, %s65, %s66
    %p70 = pneg %p64
    %p71 = scmp.eq.s32.totalorder %s29, 1
    %p72 = por %p70, %p71
    %p73 = scmp.ne.s32.totalorder %s65, %s68
    %p74 = scmp.eq.s32.totalorder %s29, 0
    %p75 = por %p73, %p74
    %p76 = scmp.ne.s32.totalorder %s65, %s68
    %p77 = scmp.eq.s32.totalorder %s34, 1
    %p78 = por %p76, %p77
    %p79 = scmp.ne.s32.totalorder %s68, %s69
    %p80 = scmp.eq.s32.totalorder %s34, 0
    %p81 = por %p79, %p80
    %p82 = scmp.ne.s32.totalorder %s68, %s69
    %p83 = scmp.eq.s32.totalorder %s35, 1
    %p84 = por %p82, %p83
    %p86 = scmp.ne.s32.totalorder %s69, %s85
    %p87 = scmp.eq.s32.totalorder %s35, 0
    %p88 = por %p86, %p87
    %s89 = ssub.s32 %s29, %s36
    %p90 = scmp.eq.s32.totalorder %s89, 0
    %s92 = sadd.s32 %s91, 1
    %s93 = scalar_select %p90, %s91, %s92
    %p96 = pneg %p90
    %p97 = scmp.eq.s32.totalorder %s29, 1
    %p98 = por %p96, %p97
    %p99 = scmp.ne.s32.totalorder %s91, %s94
    %p100 = scmp.eq.s32.totalorder %s29, 0
    %p101 = por %p99, %p100
    %p102 = scmp.ne.s32.totalorder %s91, %s94
    %p103 = scmp.eq.s32.totalorder %s34, 1
    %p104 = por %p102, %p103
    %p105 = scmp.ne.s32.totalorder %s94, %s95
    %p106 = scmp.eq.s32.totalorder %s34, 0
    %p107 = por %p105, %p106
    %p108 = scmp.ne.s32.totalorder %s94, %s95
    %p109 = scmp.eq.s32.totalorder %s35, 1
    %p110 = por %p108, %p109
    %p112 = scmp.ne.s32.totalorder %s95, %s111
    %p113 = scmp.eq.s32.totalorder %s35, 0
    %p114 = por %p112, %p113
    %s116 = sadd.s32 %s115, 1
    %p119 = scmp.eq.s32.totalorder %s29, 1
    %p120 = scmp.ne.s32.totalorder %s115, %s117
    %p121 = scmp.eq.s32.totalorder %s29, 0
    %p122 = por %p120, %p121
    %p123 = scmp.ne.s32.totalorder %s115, %s117
    %p124 = scmp.eq.s32.totalorder %s34, 1
    %p125 = por %p123, %p124
    %p126 = scmp.ne.s32.totalorder %s117, %s118
    %p127 = scmp.eq.s32.totalorder %s34, 0
    %p128 = por %p126, %p127
    %p129 = scmp.ne.s32.totalorder %s117, %s118
    %p130 = scmp.eq.s32.totalorder %s35, 1
    %p131 = por %p129, %p130
    %p133 = scmp.ne.s32.totalorder %s118, %s132
    %p134 = scmp.eq.s32.totalorder %s35, 0
    %p135 = por %p133, %p134
    %s137 = sadd.s32 %s136, 1
    %p140 = scmp.eq.s32.totalorder %s29, 1
    %p141 = scmp.ne.s32.totalorder %s136, %s138
    %p142 = scmp.eq.s32.totalorder %s29, 0
    %p143 = por %p141, %p142
    %p144 = scmp.ne.s32.totalorder %s136, %s138
    %p145 = scmp.eq.s32.totalorder %s34, 1
    %p146 = por %p144, %p145
    %p147 = scmp.ne.s32.totalorder %s138, %s139
    %p148 = scmp.eq.s32.totalorder %s34, 0
    %p149 = por %p147, %p148
    %p150 = scmp.ne.s32.totalorder %s138, %s139
    %p151 = scmp.eq.s32.totalorder %s35, 1
    %p152 = por %p150, %p151
    %p154 = scmp.ne.s32.totalorder %s139, %s153
    %p155 = scmp.eq.s32.totalorder %s35, 0
    %p156 = por %p154, %p155
    %s158 = sadd.s32 %s157, 1
    %p161 = scmp.eq.s32.totalorder %s29, 1
    %p162 = scmp.ne.s32.totalorder %s157, %s159
    %p163 = scmp.eq.s32.totalorder %s29, 0
    %p164 = por %p162, %p163
    %p165 = scmp.ne.s32.totalorder %s157, %s159
    %p166 = scmp.eq.s32.totalorder %s34, 1
    %p167 = por %p165, %p166
    %p168 = scmp.ne.s32.totalorder %s159, %s160
    %p169 = scmp.eq.s32.totalorder %s34, 0
    %p170 = por %p168, %p169
    %p171 = scmp.ne.s32.totalorder %s159, %s160
    %p172 = scmp.eq.s32.totalorder %s35, 1
    %p173 = por %p171, %p172
    %p175 = scmp.ne.s32.totalorder %s160, %s174
    %p176 = scmp.eq.s32.totalorder %s35, 0
    %p177 = por %p175, %p176
    %s179 = sadd.s32 %s178, 1
    %p182 = scmp.eq.s32.totalorder %s29, 1
    %p183 = scmp.ne.s32.totalorder %s178, %s180
    %p184 = scmp.eq.s32.totalorder %s29, 0
    %p185 = por %p183, %p184
    %p186 = scmp.ne.s32.totalorder %s178, %s180
    %p187 = scmp.eq.s32.totalorder %s34, 1
    %p188 = por %p186, %p187
    %p189 = scmp.ne.s32.totalorder %s180, %s181
    %p190 = scmp.eq.s32.totalorder %s34, 0
    %p191 = por %p189, %p190
    %p192 = scmp.ne.s32.totalorder %s180, %s181
    %p193 = scmp.eq.s32.totalorder %s35, 1
    %p194 = por %p192, %p193
    %p196 = scmp.ne.s32.totalorder %s181, %s195
    %p197 = scmp.eq.s32.totalorder %s35, 0
    %p198 = por %p196, %p197
    %s200 = sadd.s32 %s199, 1
    %p203 = scmp.eq.s32.totalorder %s29, 1
    %p204 = scmp.ne.s32.totalorder %s199, %s201
    %p205 = scmp.eq.s32.totalorder %s29, 0
    %p206 = por %p204, %p205
    %p207 = scmp.ne.s32.totalorder %s199, %s201
    %p208 = scmp.eq.s32.totalorder %s34, 1
    %p209 = por %p207, %p208
    %p210 = scmp.ne.s32.totalorder %s201, %s202
    %p211 = scmp.eq.s32.totalorder %s34, 0
    %p212 = por %p210, %p211
    %p213 = scmp.ne.s32.totalorder %s201, %s202
    %p214 = scmp.eq.s32.totalorder %s35, 1
    %p215 = por %p213, %p214
    %p217 = scmp.ne.s32.totalorder %s202, %s216
    %p218 = scmp.eq.s32.totalorder %s35, 0
    %p219 = por %p217, %p218
    %s221 = sadd.s32 %s220, 1
    %p224 = scmp.eq.s32.totalorder %s29, 1
    %p225 = scmp.ne.s32.totalorder %s220, %s222
    %p226 = scmp.eq.s32.totalorder %s29, 0
    %p227 = por %p225, %p226
    %p228 = scmp.ne.s32.totalorder %s220, %s222
    %p229 = scmp.eq.s32.totalorder %s34, 1
    %p230 = por %p228, %p229
    %p231 = scmp.ne.s32.totalorder %s222, %s223
    %p232 = scmp.eq.s32.totalorder %s34, 0
    %p233 = por %p231, %p232
    %p234 = scmp.ne.s32.totalorder %s222, %s223
    %p235 = scmp.eq.s32.totalorder %s35, 1
    %p236 = por %p234, %p235
    %p238 = scmp.ne.s32.totalorder %s223, %s237
    %p239 = scmp.eq.s32.totalorder %s35, 0
    %p240 = por %p238, %p239
    %s242 = sadd.s32 %s241, 1
    %p245 = scmp.eq.s32.totalorder %s29, 1
    %p246 = scmp.ne.s32.totalorder %s241, %s243
    %p247 = scmp.eq.s32.totalorder %s29, 0
    %p248 = por %p246, %p247
    %p249 = scmp.ne.s32.totalorder %s241, %s243
    %p250 = scmp.eq.s32.totalorder %s34, 1
    %p251 = por %p249, %p250
    %p252 = scmp.ne.s32.totalorder %s243, %s244
    %p253 = scmp.eq.s32.totalorder %s34, 0
    %p254 = por %p252, %p253
    %p255 = scmp.ne.s32.totalorder %s243, %s244
    %p256 = scmp.eq.s32.totalorder %s35, 1
    %p257 = por %p255, %p256
    %p259 = scmp.ne.s32.totalorder %s244, %s258
    %p260 = scmp.eq.s32.totalorder %s35, 0
    %p261 = por %p259, %p260
    %s263 = sadd.s32 %s262, 1
    %p266 = scmp.eq.s32.totalorder %s29, 1
    %p267 = scmp.ne.s32.totalorder %s262, %s264
    %p268 = scmp.eq.s32.totalorder %s29, 0
    %p269 = por %p267, %p268
    %p270 = scmp.ne.s32.totalorder %s262, %s264
    %p271 = scmp.eq.s32.totalorder %s34, 1
    %p272 = por %p270, %p271
    %p273 = scmp.ne.s32.totalorder %s264, %s265
    %p274 = scmp.eq.s32.totalorder %s34, 0
    %p275 = por %p273, %p274
    %p276 = scmp.ne.s32.totalorder %s264, %s265
    %p277 = scmp.eq.s32.totalorder %s35, 1
    %p278 = por %p276, %p277
    %p280 = scmp.ne.s32.totalorder %s265, %s279
    %p281 = scmp.eq.s32.totalorder %s35, 0
    %p282 = por %p280, %p281
    %s284 = sadd.s32 %s283, 1
    %p287 = scmp.eq.s32.totalorder %s29, 1
    %p288 = scmp.ne.s32.totalorder %s283, %s285
    %p289 = scmp.eq.s32.totalorder %s29, 0
    %p290 = por %p288, %p289
    %p291 = scmp.ne.s32.totalorder %s283, %s285
    %p292 = scmp.eq.s32.totalorder %s34, 1
    %p293 = por %p291, %p292
    %p294 = scmp.ne.s32.totalorder %s285, %s286
    %p295 = scmp.eq.s32.totalorder %s34, 0
    %p296 = por %p294, %p295
    %p297 = scmp.ne.s32.totalorder %s285, %s286
    %p298 = scmp.eq.s32.totalorder %s35, 1
    %p299 = por %p297, %p298
    %p301 = scmp.ne.s32.totalorder %s286, %s300
    %p302 = scmp.eq.s32.totalorder %s35, 0
    %p303 = por %p301, %p302
    %s305 = sadd.s32 %s304, 1
    %p308 = scmp.eq.s32.totalorder %s29, 1
    %p309 = scmp.ne.s32.totalorder %s304, %s306
    %p310 = scmp.eq.s32.totalorder %s29, 0
    %p311 = por %p309, %p310
    %p312 = scmp.ne.s32.totalorder %s304, %s306
    %p313 = scmp.eq.s32.totalorder %s34, 1
    %p314 = por %p312, %p313
    %p315 = scmp.ne.s32.totalorder %s306, %s307
    %p316 = scmp.eq.s32.totalorder %s34, 0
    %p317 = por %p315, %p316
    %p318 = scmp.ne.s32.totalorder %s306, %s307
    %p319 = scmp.eq.s32.totalorder %s35, 1
    %p320 = por %p318, %p319
    %p322 = scmp.ne.s32.totalorder %s307, %s321
    %p323 = scmp.eq.s32.totalorder %s35, 0
    %p324 = por %p322, %p323
    %s326 = sadd.s32 %s325, 1
    %p329 = scmp.eq.s32.totalorder %s29, 1
    %p330 = scmp.ne.s32.totalorder %s325, %s327
    %p331 = scmp.eq.s32.totalorder %s29, 0
    %p332 = por %p330, %p331
    %p333 = scmp.ne.s32.totalorder %s325, %s327
    %p334 = scmp.eq.s32.totalorder %s34, 1
    %p335 = por %p333, %p334
    %p336 = scmp.ne.s32.totalorder %s327, %s328
    %p337 = scmp.eq.s32.totalorder %s34, 0
    %p338 = por %p336, %p337
    %p339 = scmp.ne.s32.totalorder %s327, %s328
    %p340 = scmp.eq.s32.totalorder %s35, 1
    %p341 = por %p339, %p340
    %p343 = scmp.ne.s32.totalorder %s328, %s342
    %p344 = scmp.eq.s32.totalorder %s35, 0
    %p345 = por %p343, %p344
    %s347 = sadd.s32 %s346, 1
    %p350 = scmp.eq.s32.totalorder %s29, 1
    %p351 = scmp.ne.s32.totalorder %s346, %s348
    %p352 = scmp.eq.s32.totalorder %s29, 0
    %p353 = por %p351, %p352
    %p354 = scmp.ne.s32.totalorder %s346, %s348
    %p355 = scmp.eq.s32.totalorder %s34, 1
    %p356 = por %p354, %p355
    %p357 = scmp.ne.s32.totalorder %s348, %s349
    %p358 = scmp.eq.s32.totalorder %s34, 0
    %p359 = por %p357, %p358
    %p360 = scmp.ne.s32.totalorder %s348, %s349
    %p361 = scmp.eq.s32.totalorder %s35, 1
    %p362 = por %p360, %p361
    %p364 = scmp.ne.s32.totalorder %s349, %s363
    %p365 = scmp.eq.s32.totalorder %s35, 0
    %p366 = por %p364, %p365
    %s368 = sadd.s32 %s367, 1
    %p371 = scmp.eq.s32.totalorder %s29, 1
    %p372 = scmp.ne.s32.totalorder %s367, %s369
    %p373 = scmp.eq.s32.totalorder %s29, 0
    %p374 = por %p372, %p373
    %p375 = scmp.ne.s32.totalorder %s367, %s369
    %p376 = scmp.eq.s32.totalorder %s34, 1
    %p377 = por %p375, %p376
    %p378 = scmp.ne.s32.totalorder %s369, %s370
    %p379 = scmp.eq.s32.totalorder %s34, 0
    %p380 = por %p378, %p379
    %p381 = scmp.ne.s32.totalorder %s369, %s370
    %p382 = scmp.eq.s32.totalorder %s35, 1
    %p383 = por %p381, %p382
    %p385 = scmp.ne.s32.totalorder %s370, %s384
    %p386 = scmp.eq.s32.totalorder %s35, 0
    %p387 = por %p385, %p386
    %s389 = sadd.s32 %s388, 1
    %p392 = scmp.eq.s32.totalorder %s29, 1
    %p393 = scmp.ne.s32.totalorder %s388, %s390
    %p394 = scmp.eq.s32.totalorder %s29, 0
    %p395 = por %p393, %p394
    %p396 = scmp.ne.s32.totalorder %s388, %s390
    %p397 = scmp.eq.s32.totalorder %s34, 1
    %p398 = por %p396, %p397
    %p399 = scmp.ne.s32.totalorder %s390, %s391
    %p400 = scmp.eq.s32.totalorder %s34, 0
    %p401 = por %p399, %p400
    %p402 = scmp.ne.s32.totalorder %s390, %s391
    %p403 = scmp.eq.s32.totalorder %s35, 1
    %p404 = por %p402, %p403
    %p406 = scmp.ne.s32.totalorder %s391, %s405
    %p407 = scmp.eq.s32.totalorder %s35, 0
    %p408 = por %p406, %p407
    %s410 = sadd.s32 %s409, 1
    %p413 = scmp.eq.s32.totalorder %s29, 1
    %p414 = scmp.ne.s32.totalorder %s409, %s411
    %p415 = scmp.eq.s32.totalorder %s29, 0
    %p416 = por %p414, %p415
    %p417 = scmp.ne.s32.totalorder %s409, %s411
    %p418 = scmp.eq.s32.totalorder %s34, 1
    %p419 = por %p417, %p418
    %p420 = scmp.ne.s32.totalorder %s411, %s412
    %p421 = scmp.eq.s32.totalorder %s34, 0
    %p422 = por %p420, %p421
    %p423 = scmp.ne.s32.totalorder %s411, %s412
    %p424 = scmp.eq.s32.totalorder %s35, 1
    %p425 = por %p423, %p424
    %p427 = scmp.ne.s32.totalorder %s412, %s426
    %p428 = scmp.eq.s32.totalorder %s35, 0
    %p429 = por %p427, %p428
    %s431 = sadd.s32 %s430, 1
    %p434 = scmp.eq.s32.totalorder %s29, 1
    %p435 = scmp.ne.s32.totalorder %s430, %s432
    %p436 = scmp.eq.s32.totalorder %s29, 0
    %p437 = por %p435, %p436
    %p438 = scmp.ne.s32.totalorder %s430, %s432
    %p439 = scmp.eq.s32.totalorder %s34, 1
    %p440 = por %p438, %p439
    %p441 = scmp.ne.s32.totalorder %s432, %s433
    %p442 = scmp.eq.s32.totalorder %s34, 0
    %p443 = por %p441, %p442
    %p444 = scmp.ne.s32.totalorder %s432, %s433
    %p445 = scmp.eq.s32.totalorder %s35, 1
    %p446 = por %p444, %p445
    %p448 = scmp.ne.s32.totalorder %s433, %s447
    %p449 = scmp.eq.s32.totalorder %s35, 0
    %p450 = por %p448, %p449
    %s452 = sadd.s32 %s451, 1
    %p455 = scmp.eq.s32.totalorder %s29, 1
    %p456 = scmp.ne.s32.totalorder %s451, %s453
    %p457 = scmp.eq.s32.totalorder %s29, 0
    %p458 = por %p456, %p457
    %p459 = scmp.ne.s32.totalorder %s451, %s453
    %p460 = scmp.eq.s32.totalorder %s34, 1
    %p461 = por %p459, %p460
    %p462 = scmp.ne.s32.totalorder %s453, %s454
    %p463 = scmp.eq.s32.totalorder %s34, 0
    %p464 = por %p462, %p463
    %p465 = scmp.ne.s32.totalorder %s453, %s454
    %p466 = scmp.eq.s32.totalorder %s35, 1
    %p467 = por %p465, %p466
    %p469 = scmp.ne.s32.totalorder %s454, %s468
    %p470 = scmp.eq.s32.totalorder %s35, 0
    %p471 = por %p469, %p470
    %s473 = sadd.s32 %s472, 1
    %p476 = scmp.eq.s32.totalorder %s29, 1
    %p477 = scmp.ne.s32.totalorder %s472, %s474
    %p478 = scmp.eq.s32.totalorder %s29, 0
    %p479 = por %p477, %p478
    %p480 = scmp.ne.s32.totalorder %s472, %s474
    %p481 = scmp.eq.s32.totalorder %s34, 1
    %p482 = por %p480, %p481
    %p483 = scmp.ne.s32.totalorder %s474, %s475
    %p484 = scmp.eq.s32.totalorder %s34, 0
    %p485 = por %p483, %p484
    %p486 = scmp.ne.s32.totalorder %s474, %s475
    %p487 = scmp.eq.s32.totalorder %s35, 1
    %p488 = por %p486, %p487
    %p490 = scmp.ne.s32.totalorder %s475, %s489
    %p491 = scmp.eq.s32.totalorder %s35, 0
    %p492 = por %p490, %p491
    %s494 = sadd.s32 %s493, 1
    %p497 = scmp.eq.s32.totalorder %s29, 1
    %p498 = scmp.ne.s32.totalorder %s493, %s495
    %p499 = scmp.eq.s32.totalorder %s29, 0
    %p500 = por %p498, %p499
    %p501 = scmp.ne.s32.totalorder %s493, %s495
    %p502 = scmp.eq.s32.totalorder %s34, 1
    %p503 = por %p501, %p502
    %p504 = scmp.ne.s32.totalorder %s495, %s496
    %p505 = scmp.eq.s32.totalorder %s34, 0
    %p506 = por %p504, %p505
    %p507 = scmp.ne.s32.totalorder %s495, %s496
    %p508 = scmp.eq.s32.totalorder %s35, 1
    %p509 = por %p507, %p508
    %p511 = scmp.ne.s32.totalorder %s496, %s510
    %p512 = scmp.eq.s32.totalorder %s35, 0
    %p513 = por %p511, %p512
    %s515 = sadd.s32 %s514, 1
    %p518 = scmp.eq.s32.totalorder %s29, 1
    %p519 = scmp.ne.s32.totalorder %s514, %s516
    %p520 = scmp.eq.s32.totalorder %s29, 0
    %p521 = por %p519, %p520
    %p522 = scmp.ne.s32.totalorder %s514, %s516
    %p523 = scmp.eq.s32.totalorder %s34, 1
    %p524 = por %p522, %p523
    %p525 = scmp.ne.s32.totalorder %s516, %s517
    %p526 = scmp.eq.s32.totalorder %s34, 0
    %p527 = por %p525, %p526
    %p528 = scmp.ne.s32.totalorder %s516, %s517
    %p529 = scmp.eq.s32.totalorder %s35, 1
    %p530 = por %p528, %p529
    %p532 = scmp.ne.s32.totalorder %s517, %s531
    %p533 = scmp.eq.s32.totalorder %s35, 0
    %p534 = por %p532, %p533
    %s535 = ssub.s32 %s29, %s36
    %p536 = scmp.eq.s32.totalorder %s535, 0
    %s538 = sadd.s32 %s537, 1
    %s539 = scalar_select %p536, %s537, %s538
    %p542 = pneg %p536
    %p543 = scmp.eq.s32.totalorder %s29, 1
    %p544 = por %p542, %p543
    %p545 = scmp.ne.s32.totalorder %s537, %s540
    %p546 = scmp.eq.s32.totalorder %s29, 0
    %p547 = por %p545, %p546
    %p548 = scmp.ne.s32.totalorder %s537, %s540
    %p549 = scmp.eq.s32.totalorder %s34, 1
    %p550 = por %p548, %p549
    %p551 = scmp.ne.s32.totalorder %s540, %s541
    %p552 = scmp.eq.s32.totalorder %s34, 0
    %p553 = por %p551, %p552
    %p554 = scmp.ne.s32.totalorder %s540, %s541
    %p555 = scmp.eq.s32.totalorder %s35, 1
    %p556 = por %p554, %p555
    %p558 = scmp.ne.s32.totalorder %s541, %s557
    %p559 = scmp.eq.s32.totalorder %s35, 0
    %p560 = por %p558, %p559
    %p561 = scmp.le.s32.totalorder 1, %s29
    %p562 = scmp.lt.s32.totalorder %s29, 3
    %p563 = pnand %p561, %p562
    %p564 = pneg %p563
    // Predicated region
    $region9: #{sad_forward.1} parent=5 // pred_check
      _
    $region10: #{sad_forward.1} parent=5 // pred_check_branch
      %566 = sbr.rel (%p563) target = $region12
    $region11: #{sad_forward.1} parent=5 // pred_region
      %s567 = ssub.s32 %s29, 1
      // Predicated region
      $region13: #{sad_forward.1} parent=11 // pred_check
        %p568 = pneg %p128
      $region14: #{sad_forward.1} parent=11 // pred_check_branch
        %570 = sbr.rel (%p568) target = $region16
      $region15: #{sad_forward.1} parent=11 // pred_region
        _
      $region16: #{sad_forward.1} parent=11 // pred_fallthru
        _
      // Predicated region
      $region17: #{sad_forward.1} parent=11 // pred_check
        %p571 = pneg %p149
      $region18: #{sad_forward.1} parent=11 // pred_check_branch
        %573 = sbr.rel (%p571) target = $region20
      $region19: #{sad_forward.1} parent=11 // pred_region
        _
      $region20: #{sad_forward.1} parent=11 // pred_fallthru
        _
      // Predicated region
      $region21: #{sad_forward.1} parent=11 // pred_check
        %p574 = pneg %p170
      $region22: #{sad_forward.1} parent=11 // pred_check_branch
        %576 = sbr.rel (%p574) target = $region24
      $region23: #{sad_forward.1} parent=11 // pred_region
        _
      $region24: #{sad_forward.1} parent=11 // pred_fallthru
        _
      // Predicated region
      $region25: #{sad_forward.1} parent=11 // pred_check
        %p577 = pneg %p191
      $region26: #{sad_forward.1} parent=11 // pred_check_branch
        %579 = sbr.rel (%p577) target = $region28
      $region27: #{sad_forward.1} parent=11 // pred_region
        _
      $region28: #{sad_forward.1} parent=11 // pred_fallthru
        _
      // Predicated region
      $region29: #{sad_forward.1} parent=11 // pred_check
        %p580 = pneg %p212
      $region30: #{sad_forward.1} parent=11 // pred_check_branch
        %582 = sbr.rel (%p580) target = $region32
      $region31: #{sad_forward.1} parent=11 // pred_region
        _
      $region32: #{sad_forward.1} parent=11 // pred_fallthru
        _
      // Predicated region
      $region33: #{sad_forward.1} parent=11 // pred_check
        %p583 = pneg %p233
      $region34: #{sad_forward.1} parent=11 // pred_check_branch
        %585 = sbr.rel (%p583) target = $region36
      $region35: #{sad_forward.1} parent=11 // pred_region
        _
      $region36: #{sad_forward.1} parent=11 // pred_fallthru
        _
      // Predicated region
      $region37: #{sad_forward.1} parent=11 // pred_check
        %p586 = pneg %p254
      $region38: #{sad_forward.1} parent=11 // pred_check_branch
        %588 = sbr.rel (%p586) target = $region40
      $region39: #{sad_forward.1} parent=11 // pred_region
        _
      $region40: #{sad_forward.1} parent=11 // pred_fallthru
        _
      // Predicated region
      $region41: #{sad_forward.1} parent=11 // pred_check
        %p589 = pneg %p275
      $region42: #{sad_forward.1} parent=11 // pred_check_branch
        %591 = sbr.rel (%p589) target = $region44
      $region43: #{sad_forward.1} parent=11 // pred_region
        _
      $region44: #{sad_forward.1} parent=11 // pred_fallthru
        _
      // Predicated region
      $region45: #{sad_forward.1} parent=11 // pred_check
        %p592 = pneg %p296
      $region46: #{sad_forward.1} parent=11 // pred_check_branch
        %594 = sbr.rel (%p592) target = $region48
      $region47: #{sad_forward.1} parent=11 // pred_region
        _
      $region48: #{sad_forward.1} parent=11 // pred_fallthru
        _
      // Predicated region
      $region49: #{sad_forward.1} parent=11 // pred_check
        %p595 = pneg %p317
      $region50: #{sad_forward.1} parent=11 // pred_check_branch
        %597 = sbr.rel (%p595) target = $region52
      $region51: #{sad_forward.1} parent=11 // pred_region
        _
      $region52: #{sad_forward.1} parent=11 // pred_fallthru
        _
      // Predicated region
      $region53: #{sad_forward.1} parent=11 // pred_check
        %p598 = pneg %p338
      $region54: #{sad_forward.1} parent=11 // pred_check_branch
        %600 = sbr.rel (%p598) target = $region56
      $region55: #{sad_forward.1} parent=11 // pred_region
        _
      $region56: #{sad_forward.1} parent=11 // pred_fallthru
        _
      // Predicated region
      $region57: #{sad_forward.1} parent=11 // pred_check
        %p601 = pneg %p359
      $region58: #{sad_forward.1} parent=11 // pred_check_branch
        %603 = sbr.rel (%p601) target = $region60
      $region59: #{sad_forward.1} parent=11 // pred_region
        _
      $region60: #{sad_forward.1} parent=11 // pred_fallthru
        _
      // Predicated region
      $region61: #{sad_forward.1} parent=11 // pred_check
        %p604 = pneg %p380
      $region62: #{sad_forward.1} parent=11 // pred_check_branch
        %606 = sbr.rel (%p604) target = $region64
      $region63: #{sad_forward.1} parent=11 // pred_region
        _
      $region64: #{sad_forward.1} parent=11 // pred_fallthru
        _
      // Predicated region
      $region65: #{sad_forward.1} parent=11 // pred_check
        %p607 = pneg %p401
      $region66: #{sad_forward.1} parent=11 // pred_check_branch
        %609 = sbr.rel (%p607) target = $region68
      $region67: #{sad_forward.1} parent=11 // pred_region
        _
      $region68: #{sad_forward.1} parent=11 // pred_fallthru
        _
      // Predicated region
      $region69: #{sad_forward.1} parent=11 // pred_check
        %p610 = pneg %p422
      $region70: #{sad_forward.1} parent=11 // pred_check_branch
        %612 = sbr.rel (%p610) target = $region72
      $region71: #{sad_forward.1} parent=11 // pred_region
        _
      $region72: #{sad_forward.1} parent=11 // pred_fallthru
        _
      // Predicated region
      $region73: #{sad_forward.1} parent=11 // pred_check
        %p613 = pneg %p443
      $region74: #{sad_forward.1} parent=11 // pred_check_branch
        %615 = sbr.rel (%p613) target = $region76
      $region75: #{sad_forward.1} parent=11 // pred_region
        _
      $region76: #{sad_forward.1} parent=11 // pred_fallthru
        _
      // Predicated region
      $region77: #{sad_forward.1} parent=11 // pred_check
        %p616 = pneg %p464
      $region78: #{sad_forward.1} parent=11 // pred_check_branch
        %618 = sbr.rel (%p616) target = $region80
      $region79: #{sad_forward.1} parent=11 // pred_region
        _
      $region80: #{sad_forward.1} parent=11 // pred_fallthru
        _
      // Predicated region
      $region81: #{sad_forward.1} parent=11 // pred_check
        %p619 = pneg %p485
      $region82: #{sad_forward.1} parent=11 // pred_check_branch
        %621 = sbr.rel (%p619) target = $region84
      $region83: #{sad_forward.1} parent=11 // pred_region
        _
      $region84: #{sad_forward.1} parent=11 // pred_fallthru
        _
      // Predicated region
      $region85: #{sad_forward.1} parent=11 // pred_check
        %p622 = pneg %p506
      $region86: #{sad_forward.1} parent=11 // pred_check_branch
        %624 = sbr.rel (%p622) target = $region88
      $region87: #{sad_forward.1} parent=11 // pred_region
        _
      $region88: #{sad_forward.1} parent=11 // pred_fallthru
        _
      // Predicated region
      $region89: #{sad_forward.1} parent=11 // pred_check
        %p625 = pneg %p527
      $region90: #{sad_forward.1} parent=11 // pred_check_branch
        %627 = sbr.rel (%p625) target = $region92
      $region91: #{sad_forward.1} parent=11 // pred_region
        _
      $region92: #{sad_forward.1} parent=11 // pred_fallthru
        _
    $region12: #{sad_forward.1} parent=5 // pred_fallthru
      _
    %p628 = scmp.lt.s32.totalorder %s29, 2
    // Predicated region
    $region93: #{sad_forward.1} parent=5 // pred_check
      %p629 = pneg %p628
    $region94: #{sad_forward.1} parent=5 // pred_check_branch
      %631 = sbr.rel (%p629) target = $region96
    $region95: #{sad_forward.1} parent=5 // pred_region
      // Predicated region
      $region97: #{sad_forward.1} parent=95 // pred_check
        %p632 = pneg %p49
      $region98: #{sad_forward.1} parent=95 // pred_check_branch
        %634 = sbr.rel (%p632) target = $region100
      $region99: #{sad_forward.1} parent=95 // pred_region
        %p635 = scmp.lt.s32.totalorder %s29, 1
        %s636 = scalar_select %p635, %s29, 1
        %s637 = smul.addr %s636, 4
        %s638 = scalar_lea.vmem %s0, %s637
      $region100: #{sad_forward.1} parent=95 // pred_fallthru
        _
      // Predicated region
      $region101: #{sad_forward.1} parent=95 // pred_check
        %p639 = pneg %p75
      $region102: #{sad_forward.1} parent=95 // pred_check_branch
        %641 = sbr.rel (%p639) target = $region104
      $region103: #{sad_forward.1} parent=95 // pred_region
        %p642 = scmp.lt.s32.totalorder %s29, 1
        %s643 = scalar_select %p642, %s29, 1
        %s644 = smul.addr %s643, 4
        %s645 = scalar_lea.vmem %s1, %s644
      $region104: #{sad_forward.1} parent=95 // pred_fallthru
        _
      // Predicated region
      $region105: #{sad_forward.1} parent=95 // pred_check
        %p646 = pneg %p101
      $region106: #{sad_forward.1} parent=95 // pred_check_branch
        %648 = sbr.rel (%p646) target = $region108
      $region107: #{sad_forward.1} parent=95 // pred_region
        %p649 = scmp.lt.s32.totalorder %s29, 1
        %s650 = scalar_select %p649, %s29, 1
        %s651 = smul.addr %s650, 2
        %s652 = smul.addr %s651, 4
        %s653 = scalar_lea.vmem %s2, %s652
      $region108: #{sad_forward.1} parent=95 // pred_fallthru
        _
    $region96: #{sad_forward.1} parent=5 // pred_fallthru
      _
    %p654 = scmp.le.s32.totalorder 1, %s29
    %p655 = scmp.lt.s32.totalorder %s29, 3
    %p656 = pnand %p654, %p655
    %p657 = pneg %p656
    // Predicated region
    $region109: #{sad_forward.1} parent=5 // pred_check
      _
    $region110: #{sad_forward.1} parent=5 // pred_check_branch
      %659 = sbr.rel (%p656) target = $region112
    $region111: #{sad_forward.1} parent=5 // pred_region
      %s660 = ssub.s32 %s29, 1
      %p661 = scmp.lt.s32.totalorder %s34, 1
      %s662 = scalar_select %p661, %s34, 1
      %s663 = smul.addr %s662, 4
      %s664 = scalar_lea.vmem %s0, %s663
      %p665 = pneg %p55
      %p666 = pneg %p52
      %p667 = scmp.lt.s32.totalorder %s34, 1
      %s668 = scalar_select %p667, %s34, 1
      %s669 = smul.addr %s668, 4
      %s670 = scalar_lea.vmem %s1, %s669
      %p671 = pneg %p81
      %p672 = pneg %p78
      %p673 = scmp.lt.s32.totalorder %s34, 1
      %s674 = scalar_select %p673, %s34, 1
      %s675 = smul.addr %s674, 2
      %s676 = smul.addr %s675, 4
      %s677 = scalar_lea.vmem %s2, %s676
      %p678 = pneg %p107
      %p679 = pneg %p104
      %p680 = pneg %p128
      %p681 = pneg %p125
      %p682 = pneg %p149
      %p683 = pneg %p146
      %p684 = pneg %p170
      %p685 = pneg %p167
      %p686 = pneg %p191
      %p687 = pneg %p188
      %p688 = pneg %p212
      %p689 = pneg %p209
      %p690 = pneg %p233
      %p691 = pneg %p230
      %p692 = pneg %p254
      %p693 = pneg %p251
      %p694 = pneg %p275
      %p695 = pneg %p272
      %p696 = pneg %p296
      %p697 = pneg %p293
      %p698 = pneg %p317
      %p699 = pneg %p314
      %p700 = pneg %p338
      %p701 = pneg %p335
      %p702 = pneg %p359
      %p703 = pneg %p356
      %p704 = pneg %p380
      %p705 = pneg %p377
      %p706 = pneg %p401
      %p707 = pneg %p398
      %p708 = pneg %p422
      %p709 = pneg %p419
      %p710 = pneg %p443
      %p711 = pneg %p440
      %p712 = pneg %p464
      %p713 = pneg %p461
      %p714 = pneg %p485
      %p715 = pneg %p482
      %p716 = pneg %p506
      %p717 = pneg %p503
      %p718 = pneg %p527
      %p719 = pneg %p524
      %p720 = pneg %p553
      %p721 = pneg %p550
      %p722 = scmp.lt.s32.totalorder %s34, 1
      %s723 = scalar_select %p722, %s34, 1
      %s724 = smul.addr %s723, 2
      %s725 = smul.addr %s724, 4
      %s726 = scalar_lea.vmem %s23, %s725
      %p727 = scmp.lt.s32.totalorder %s34, 1
      %s728 = scalar_select %p727, %s34, 1
      %s729 = smul.addr %s728, 4
      %s730 = scalar_lea.vmem %s0, %s729
      %p731 = scmp.lt.s32.totalorder %s34, 1
      %s732 = scalar_select %p731, %s34, 1
      %s733 = smul.addr %s732, 4
      %s734 = scalar_lea.vmem %s1, %s733
      %p735 = scmp.lt.s32.totalorder %s34, 1
      %s736 = scalar_select %p735, %s34, 1
      %s737 = smul.addr %s736, 2
      %s738 = smul.addr %s737, 4
      %s739 = scalar_lea.vmem %s2, %s738
      %p740 = scmp.lt.s32.totalorder %s34, 1
      %s741 = scalar_select %p740, %s34, 1
      %s742 = smul.addr %s741, 2
      %s743 = smul.addr %s742, 4
      %s744 = scalar_lea.vmem %s23, %s743
      %vm745 = vcmask 72704
      %746 = vst.msk [vmem:[#allocation2] sm:$0xff] %vm745, 0.0
      %vm747 = vcmask 671304
      %748 = vst.msk [vmem:[#allocation2] sm:$0xff] %vm747, 0.0
      %vm749 = vcmask 138240
      %750 = vst.msk [vmem:[#allocation3] sm:$0xff] %vm749, 0.0
      %vm751 = vcmask 134144
      %752 = vst.msk [vmem:[#allocation3 + $0x18] sm:$0xf] %vm751, 0.0
      %vm753 = vcmask 277640
      %754 = vst.msk [vmem:[#allocation3 + $0x10] sm:$0xff] %vm753, 0.0
      %vm755 = vcmask 273544
      %756 = vst.msk [vmem:[#allocation3 + $0x28] sm:$0xf] %vm755, 0.0
      %v757 = vld [vmem:[%s730] sm:$0xf]
      %v758 = vld [vmem:[%s734] sm:$0xf]
      %v759 = vld [vmem:[%s739] sm:$0xff]
      %v760 = vld [vmem:[%s3] sm:$0xff]
      %v761 = vld [vmem:[%s3 + $0x8] sm:$0xff]
      %vm762 = vcmask 130048
      %v764 = vsel %vm762, %v757, 0
      %766 = vmatprep.subr.mxu0 0.0
      %767 = vmatpush1.msra.mxu0 0.0
      %768 = vmatprep.subr.mxu0 0.0
      %769 = vmatpush1.msra.mxu0 0.0
      %770 = vmatprep.subr.mxu0 0.0
      %771 = vmatpush1.msra.mxu0 0.0
      %772 = vmatprep.subr.mxu0 0.0
      %773 = vmatpush1.msra.mxu0 0.0
      %774 = vmatprep.subr.mxu0 0.0
      %775 = vmatpush1.msra.mxu0 0.0
      %776 = vmatprep.subr.mxu0 0.0
      %777 = vmatpush1.msra.mxu0 0.0
      %778 = vmatprep.subr.mxu0 0.0
      %779 = vmatpush1.msra.mxu0 0.0
      %780 = vmatprep.subr.mxu0 0.0
      %781 = vmatpush1.msra.mxu0 0.0
      %782 = vmatprep.subr.mxu0 0.0
      %783 = vmatpush1.msra.mxu0 0.0
      %784 = vmatprep.subr.mxu0 0.0
      %785 = vmatpush1.msra.mxu0 0.0
      %786 = vmatprep.subr.mxu0 0.0
      %787 = vmatpush1.msra.mxu0 0.0
      %788 = vmatprep.subr.mxu0 0.0
      %789 = vmatpush1.msra.mxu0 0.0
      %790 = vmatprep.subr.mxu0 0.0
      %791 = vmatpush1.msra.mxu0 0.0
      %792 = vmatprep.subr.mxu0 0.0
      %793 = vmatpush1.msra.mxu0 0.0
      %794 = vmatprep.subr.mxu0 0.0
      %795 = vmatpush1.msra.mxu0 %v761
      %796 = vmatprep.subr.mxu0 0.0
      %797 = vmatpush1.msra.mxu0 %v760
      %798 = vmatprep.subr.mxu0 0.0
      %799 = vmatpush2.msra.mxu0 0.0
      %800 = vmatprep.subr.mxu0 0.0
      %801 = vmatpush2.msra.mxu0 0.0
      %802 = vmatprep.subr.mxu0 0.0
      %803 = vmatpush2.msra.mxu0 0.0
      %804 = vmatprep.subr.mxu0 0.0
      %805 = vmatpush2.msra.mxu0 0.0
      %806 = vmatprep.subr.mxu0 0.0
      %807 = vmatpush2.msra.mxu0 0.0
      %808 = vmatprep.subr.mxu0 0.0
      %809 = vmatpush2.msra.mxu0 0.0
      %810 = vmatprep.subr.mxu0 0.0
      %811 = vmatpush2.msra.mxu0 0.0
      %812 = vmatprep.subr.mxu0 0.0
      %813 = vmatpush2.msra.mxu0 0.0
      %814 = vmatprep.subr.mxu0 0.0
      %815 = vmatpush2.msra.mxu0 0.0
      %816 = vmatprep.subr.mxu0 0.0
      %817 = vmatpush2.msra.mxu0 0.0
      %818 = vmatprep.subr.mxu0 0.0
      %819 = vmatpush2.msra.mxu0 0.0
      %820 = vmatprep.subr.mxu0 0.0
      %821 = vmatpush2.msra.mxu0 0.0
      %822 = vmatprep.subr.mxu0 0.0
      %823 = vmatpush2.msra.mxu0 0.0
      %824 = vmatprep.subr.mxu0 0.0
      %825 = vmatpush2.msra.mxu0 0.0
      %826 = vmatprep.subr.mxu0 0.0
      %827 = vmatpush2.msra.mxu0 0.0
      %828 = vmatprep.subr.mxu0 0.0
      %829 = vmatpush2.msra.mxu0 0.0
      %830 = vmatprep.mubr.f32.mxu0 0.0
      %831 = vmatmul.mubr.f32.gmra.mxu0 %v764
      %v832 = vpop.f32.mrf.mxu0
      %v833 = vadd.f32 0.0, %v832
      %v834 = vpop.f32.mrf.mxu0
      %835 = vdwg.mxu0
      %837 = vrot.lane.b32.xlu0 %v833, 9
      %v838 = vpop.permute.xlu0 %837
      %vm840 = vcmask 592968
      %841 = vst.msk [vmem:[#allocation2] sm:$0xf] %vm840, %v838
      %v842 = vld [vmem:[#allocation2] sm:$0xf]
      %v843 = vld [vmem:[%s5] sm:$0x1]
      %v844 = vlaneseq
      %v845 = vshrl.u32 %v844, 7
      %v846 = vsub.s32 0, %v845
      %v847 = vrot.slane %v843, %v846
      %v848 = vmul.f32 %v842, %v847
      %vm849 = vcmask 519168
      %850 = vst.msk [vmem:[#allocation4] sm:$0xf] %vm849, %v848
      %v851 = vld [vmem:[#allocation2] sm:$0xf]
      %v853 = vrot.slane %v851, 4
      %854 = vrot.lane.b32.xlu0 %v853, 127
      %v855 = vpop.permute.xlu0 %854
      %vm857 = vcmask 523268
      %858 = vst.msk [vmem:[#allocation4] sm:$0xf0] %vm857, %v855
      %v859 = vld [vmem:[#allocation2] sm:$0xf]
      %v860 = vld [vmem:[%s5 + $0x1] sm:$0x1]
      %v861 = vlaneseq
      %v862 = vshrl.u32 %v861, 7
      %v863 = vsub.s32 0, %v862
      %v864 = vrot.slane %v860, %v863
      %866 = vrot.lane.b32.xlu0 %v864, 2
      %v867 = vpop.permute.xlu0 %866
      %v869 = vmul.f32 %v859, %v867
      %871 = vrot.lane.b32.xlu0 %v869, 126
      %v872 = vpop.permute.xlu0 %871
      %874 = vst.msk [vmem:[#allocation4 + $0x10] sm:$0xf] %vm849, %v872
      %v875 = vld [vmem:[#allocation2] sm:$0xf]
      %v876 = vld [vmem:[%s5] sm:$0x1]
      %v877 = vlaneseq
      %v878 = vshrl.u32 %v877, 7
      %v879 = vsub.s32 0, %v878
      %v880 = vrot.slane %v876, %v879
      %882 = vrot.lane.b32.xlu0 %v880, 8
      %v883 = vpop.permute.xlu0 %882
      %v885 = vmul.f32 %v875, %v883
      %v887 = vrot.slane %v885, 4
      %888 = vrot.lane.b32.xlu0 %v887, 120
      %v889 = vpop.permute.xlu0 %888
      %891 = vst.msk [vmem:[#allocation4 + $0x10] sm:$0xf0] %vm857, %v889
      %v892 = vld [vmem:[#allocation2] sm:$0xf]
      %894 = vrot.lane.b32.xlu0 %v892, 119
      %v895 = vpop.permute.xlu0 %894
      %897 = vst.msk [vmem:[#allocation4 + $0x20] sm:$0xf] %vm849, %v895
      %v898 = vld [vmem:[#allocation2] sm:$0xf]
      %v899 = vld [vmem:[%s5 + $0x1] sm:$0x1]
      %v900 = vlaneseq
      %v901 = vshrl.u32 %v900, 7
      %v902 = vsub.s32 0, %v901
      %v903 = vrot.slane %v899, %v902
      %905 = vrot.lane.b32.xlu0 %v903, 10
      %v906 = vpop.permute.xlu0 %905
      %v908 = vmul.f32 %v898, %v906
      %v910 = vrot.slane %v908, 4
      %911 = vrot.lane.b32.xlu0 %v910, 118
      %v912 = vpop.permute.xlu0 %911
      %914 = vst.msk [vmem:[#allocation4 + $0x20] sm:$0xf0] %vm857, %v912
      %v915 = vld [vmem:[#allocation2] sm:$0xf]
      %v916 = vld [vmem:[%s5] sm:$0x1]
      %v917 = vlaneseq
      %v918 = vshrl.u32 %v917, 7
      %v919 = vsub.s32 0, %v918
      %v920 = vrot.slane %v916, %v919
      %922 = vrot.lane.b32.xlu0 %v920, 16
      %v923 = vpop.permute.xlu0 %922
      %v925 = vmul.f32 %v915, %v923
      %927 = vrot.lane.b32.xlu0 %v925, 112
      %v928 = vpop.permute.xlu0 %927
      %930 = vst.msk [vmem:[#allocation4 + $0x30] sm:$0xf] %vm849, %v928
      %v931 = vld [vmem:[#allocation2] sm:$0xf]
      %v933 = vrot.slane %v931, 4
      %934 = vrot.lane.b32.xlu0 %v933, 111
      %v935 = vpop.permute.xlu0 %934
      %937 = vst.msk [vmem:[#allocation4 + $0x30] sm:$0xf0] %vm857, %v935
      %v938 = vld [vmem:[#allocation2] sm:$0xf]
      %v939 = vld [vmem:[%s5 + $0x1] sm:$0x1]
      %v940 = vlaneseq
      %v941 = vshrl.u32 %v940, 7
      %v942 = vsub.s32 0, %v941
      %v943 = vrot.slane %v939, %v942
      %945 = vrot.lane.b32.xlu0 %v943, 18
      %v946 = vpop.permute.xlu0 %945
      %v948 = vmul.f32 %v938, %v946
      %950 = vrot.lane.b32.xlu0 %v948, 110
      %v951 = vpop.permute.xlu0 %950
      %953 = vst.msk [vmem:[#allocation4 + $0x40] sm:$0xf] %vm849, %v951
      %v954 = vld [vmem:[%s7] sm:$0xff]
      %v955 = vld [vmem:[#allocation4] sm:$0xff]
      %v956 = vld [vmem:[#allocation4 + $0x10] sm:$0xff]
      %v957 = vld [vmem:[#allocation4 + $0x20] sm:$0xff]
      %v958 = vld [vmem:[#allocation4 + $0x30] sm:$0xff]
      %v959 = vld [vmem:[#allocation4 + $0x40] sm:$0xf]
      %v960 = vld [vmem:[%s8] sm:$0xff]
      %962 = vset.pattern.permute.xlu0 0
      %963 = vperm.xlu0 %962, %v960
      %v964 = vpop.permute.xlu0 %963
      %vm966 = vcmask 293888
      %v968 = vsel %vm966, %v954, 0
      %vm970 = vcmask 1043456
      %v972 = vsel %vm970, %v959, 0
      %974 = vmatprep.subr.mxu0 0.0
      %975 = vmatpush1.msra.mxu0 0.0
      %976 = vmatprep.subr.mxu0 0.0
      %977 = vmatpush1.msra.mxu0 0.0
      %978 = vmatprep.subr.mxu0 0.0
      %979 = vmatpush1.msra.mxu0 0.0
      %980 = vmatprep.subr.mxu0 0.0
      %981 = vmatpush1.msra.mxu0 0.0
      %982 = vmatprep.subr.mxu0 0.0
      %983 = vmatpush1.msra.mxu0 0.0
      %984 = vmatprep.subr.mxu0 0.0
      %985 = vmatpush1.msra.mxu0 0.0
      %986 = vmatprep.subr.mxu0 0.0
      %987 = vmatpush1.msra.mxu0 0.0
      %988 = vmatprep.subr.mxu0 0.0
      %989 = vmatpush1.msra.mxu0 0.0
      %990 = vmatprep.subr.mxu0 0.0
      %991 = vmatpush1.msra.mxu0 0.0
      %992 = vmatprep.subr.mxu0 0.0
      %993 = vmatpush1.msra.mxu0 0.0
      %994 = vmatprep.subr.mxu0 0.0
      %995 = vmatpush1.msra.mxu0 0.0
      %996 = vmatprep.subr.mxu0 0.0
      %997 = vmatpush1.msra.mxu0 %v972
      %998 = vmatprep.subr.mxu0 0.0
      %999 = vmatpush1.msra.mxu0 %v958
      %1000 = vmatprep.subr.mxu0 0.0
      %1001 = vmatpush1.msra.mxu0 %v957
      %1002 = vmatprep.subr.mxu0 0.0
      %1003 = vmatpush1.msra.mxu0 %v956
      %1004 = vmatprep.subr.mxu0 0.0
      %1005 = vmatpush1.msra.mxu0 %v955
      %1006 = vmatprep.subr.mxu0 0.0
      %1007 = vmatpush2.msra.mxu0 0.0
      %1008 = vmatprep.subr.mxu0 0.0
      %1009 = vmatpush2.msra.mxu0 0.0
      %1010 = vmatprep.subr.mxu0 0.0
      %1011 = vmatpush2.msra.mxu0 0.0
      %1012 = vmatprep.subr.mxu0 0.0
      %1013 = vmatpush2.msra.mxu0 0.0
      %1014 = vmatprep.subr.mxu0 0.0
      %1015 = vmatpush2.msra.mxu0 0.0
      %1016 = vmatprep.subr.mxu0 0.0
      %1017 = vmatpush2.msra.mxu0 0.0
      %1018 = vmatprep.subr.mxu0 0.0
      %1019 = vmatpush2.msra.mxu0 0.0
      %1020 = vmatprep.subr.mxu0 0.0
      %1021 = vmatpush2.msra.mxu0 0.0
      %1022 = vmatprep.subr.mxu0 0.0
      %1023 = vmatpush2.msra.mxu0 0.0
      %1024 = vmatprep.subr.mxu0 0.0
      %1025 = vmatpush2.msra.mxu0 0.0
      %1026 = vmatprep.subr.mxu0 0.0
      %1027 = vmatpush2.msra.mxu0 0.0
      %1028 = vmatprep.subr.mxu0 0.0
      %1029 = vmatpush2.msra.mxu0 0.0
      %1030 = vmatprep.subr.mxu0 0.0
      %1031 = vmatpush2.msra.mxu0 0.0
      %1032 = vmatprep.subr.mxu0 0.0
      %1033 = vmatpush2.msra.mxu0 0.0
      %1034 = vmatprep.subr.mxu0 0.0
      %1035 = vmatpush2.msra.mxu0 0.0
      %1036 = vmatprep.subr.mxu0 0.0
      %1037 = vmatpush2.msra.mxu0 0.0
      %1038 = vmatprep.mubr.f32.mxu0 0.0
      %1039 = vmatmul.mubr.f32.gmra.mxu0 %v968
      %v1040 = vpop.f32.mrf.mxu0
      %v1041 = vadd.f32 %v964, %v1040
      %v1042 = vpop.f32.mrf.mxu0
      %1043 = vdwg.mxu0
      %v1044 = vmul.f32 %v1041, %v758
      %1046 = vrot.lane.b32.xlu0 %v1044, 9
      %v1047 = vpop.permute.xlu0 %1046
      %1049 = vst.msk [vmem:[#allocation2] sm:$0xf] %vm840, %v1047
      %1051 = vrot.lane.b32.xlu0 %v1041, 9
      %v1052 = vpop.permute.xlu0 %1051
      %vm1054 = vcmask 597068
      %1055 = vst.msk [vmem:[#allocation2] sm:$0xf0] %vm1054, %v1052
      %v1056 = vld [vmem:[#allocation2] sm:$0xff]
      %v1057 = vld [vmem:[%s5] sm:$0x1]
      %v1058 = vlaneseq
      %v1059 = vshrl.u32 %v1058, 7
      %v1060 = vsub.s32 0, %v1059
      %v1061 = vrot.slane %v1057, %v1060
      %v1062 = vmul.f32 %v1056, %v1061
      %vm1063 = vcmask 523264
      %1064 = vst.msk [vmem:[#allocation4] sm:$0xff] %vm1063, %v1062
      %v1065 = vld [vmem:[#allocation2] sm:$0xff]
      %1067 = vrot.lane.b32.xlu0 %v1065, 127
      %v1068 = vpop.permute.xlu0 %1067
      %1070 = vst.msk [vmem:[#allocation4 + $0x10] sm:$0xff] %vm1063, %v1068
      %v1071 = vld [vmem:[#allocation2] sm:$0xff]
      %v1072 = vld [vmem:[%s5 + $0x1] sm:$0x1]
      %v1073 = vlaneseq
      %v1074 = vshrl.u32 %v1073, 7
      %v1075 = vsub.s32 0, %v1074
      %v1076 = vrot.slane %v1072, %v1075
      %1078 = vrot.lane.b32.xlu0 %v1076, 2
      %v1079 = vpop.permute.xlu0 %1078
      %v1081 = vmul.f32 %v1071, %v1079
      %1083 = vrot.lane.b32.xlu0 %v1081, 126
      %v1084 = vpop.permute.xlu0 %1083
      %1086 = vst.msk [vmem:[#allocation4 + $0x20] sm:$0xff] %vm1063, %v1084
      %v1087 = vld [vmem:[#allocation2] sm:$0xff]
      %v1088 = vld [vmem:[%s5] sm:$0x1]
      %v1089 = vlaneseq
      %v1090 = vshrl.u32 %v1089, 7
      %v1091 = vsub.s32 0, %v1090
      %v1092 = vrot.slane %v1088, %v1091
      %1094 = vrot.lane.b32.xlu0 %v1092, 8
      %v1095 = vpop.permute.xlu0 %1094
      %v1097 = vmul.f32 %v1087, %v1095
      %1099 = vrot.lane.b32.xlu0 %v1097, 120
      %v1100 = vpop.permute.xlu0 %1099
      %1102 = vst.msk [vmem:[#allocation4 + $0x30] sm:$0xff] %vm1063, %v1100
      %v1103 = vld [vmem:[#allocation2] sm:$0xff]
      %1105 = vrot.lane.b32.xlu0 %v1103, 119
      %v1106 = vpop.permute.xlu0 %1105
      %1108 = vst.msk [vmem:[#allocation4 + $0x40] sm:$0xff] %vm1063, %v1106
      %v1109 = vld [vmem:[#allocation2] sm:$0xff]
      %v1110 = vld [vmem:[%s5 + $0x1] sm:$0x1]
      %v1111 = vlaneseq
      %v1112 = vshrl.u32 %v1111, 7
      %v1113 = vsub.s32 0, %v1112
      %v1114 = vrot.slane %v1110, %v1113
      %1116 = vrot.lane.b32.xlu0 %v1114, 10
      %v1117 = vpop.permute.xlu0 %1116
      %v1119 = vmul.f32 %v1109, %v1117
      %1121 = vrot.lane.b32.xlu0 %v1119, 118
      %v1122 = vpop.permute.xlu0 %1121
      %1124 = vst.msk [vmem:[#allocation4 + $0x50] sm:$0xff] %vm1063, %v1122
      %v1125 = vld [vmem:[#allocation2] sm:$0xff]
      %v1126 = vld [vmem:[%s5] sm:$0x1]
      %v1127 = vlaneseq
      %v1128 = vshrl.u32 %v1127, 7
      %v1129 = vsub.s32 0, %v1128
      %v1130 = vrot.slane %v1126, %v1129
      %1132 = vrot.lane.b32.xlu0 %v1130, 16
      %v1133 = vpop.permute.xlu0 %1132
      %v1135 = vmul.f32 %v1125, %v1133
      %1137 = vrot.lane.b32.xlu0 %v1135, 112
      %v1138 = vpop.permute.xlu0 %1137
      %1140 = vst.msk [vmem:[#allocation4 + $0x60] sm:$0xff] %vm1063, %v1138
      %v1141 = vld [vmem:[#allocation2] sm:$0xff]
      %1143 = vrot.lane.b32.xlu0 %v1141, 111
      %v1144 = vpop.permute.xlu0 %1143
      %1146 = vst.msk [vmem:[#allocation4 + $0x70] sm:$0xff] %vm1063, %v1144
      %v1147 = vld [vmem:[#allocation2] sm:$0xff]
      %v1148 = vld [vmem:[%s5 + $0x1] sm:$0x1]
      %v1149 = vlaneseq
      %v1150 = vshrl.u32 %v1149, 7
      %v1151 = vsub.s32 0, %v1150
      %v1152 = vrot.slane %v1148, %v1151
      %1154 = vrot.lane.b32.xlu0 %v1152, 18
      %v1155 = vpop.permute.xlu0 %1154
      %v1157 = vmul.f32 %v1147, %v1155
      %1159 = vrot.lane.b32.xlu0 %v1157, 110
      %v1160 = vpop.permute.xlu0 %1159
      %1162 = vst.msk [vmem:[#allocation4 + $0x80] sm:$0xff] %vm1063, %v1160
      %v1163 = vld [vmem:[%s13] sm:$0xff]
      %v1164 = vld [vmem:[#allocation4] sm:$0xff]
      %v1165 = vld [vmem:[#allocation4 + $0x10] sm:$0xff]
      %v1166 = vld [vmem:[#allocation4 + $0x20] sm:$0xff]
      %v1167 = vld [vmem:[#allocation4 + $0x30] sm:$0xff]
      %v1168 = vld [vmem:[#allocation4 + $0x40] sm:$0xff]
      %v1169 = vld [vmem:[#allocation4 + $0x50] sm:$0xff]
      %v1170 = vld [vmem:[#allocation4 + $0x60] sm:$0xff]
      %v1171 = vld [vmem:[#allocation4 + $0x70] sm:$0xff]
      %v1172 = vld [vmem:[#allocation4 + $0x80] sm:$0xff]
      %v1173 = vld [vmem:[%s14] sm:$0xff]
      %1175 = vset.pattern.permute.xlu0 0
      %1176 = vperm.xlu0 %1175, %v1173
      %v1177 = vpop.permute.xlu0 %1176
      %vm1179 = vcmask 588800
      %v1181 = vsel %vm1179, %v1163, 0
      %1183 = vmatprep.subr.mxu0 0.0
      %1184 = vmatpush1.msra.mxu0 0.0
      %1185 = vmatprep.subr.mxu0 0.0
      %1186 = vmatpush1.msra.mxu0 0.0
      %1187 = vmatprep.subr.mxu0 0.0
      %1188 = vmatpush1.msra.mxu0 0.0
      %1189 = vmatprep.subr.mxu0 0.0
      %1190 = vmatpush1.msra.mxu0 0.0
      %1191 = vmatprep.subr.mxu0 0.0
      %1192 = vmatpush1.msra.mxu0 0.0
      %1193 = vmatprep.subr.mxu0 0.0
      %1194 = vmatpush1.msra.mxu0 0.0
      %1195 = vmatprep.subr.mxu0 0.0
      %1196 = vmatpush1.msra.mxu0 0.0
      %1197 = vmatprep.subr.mxu0 0.0
      %1198 = vmatpush1.msra.mxu0 %v1172
      %1199 = vmatprep.subr.mxu0 0.0
      %1200 = vmatpush1.msra.mxu0 %v1171
      %1201 = vmatprep.subr.mxu0 0.0
      %1202 = vmatpush1.msra.mxu0 %v1170
      %1203 = vmatprep.subr.mxu0 0.0
      %1204 = vmatpush1.msra.mxu0 %v1169
      %1205 = vmatprep.subr.mxu0 0.0
      %1206 = vmatpush1.msra.mxu0 %v1168
      %1207 = vmatprep.subr.mxu0 0.0
      %1208 = vmatpush1.msra.mxu0 %v1167
      %1209 = vmatprep.subr.mxu0 0.0
      %1210 = vmatpush1.msra.mxu0 %v1166
      %1211 = vmatprep.subr.mxu0 0.0
      %1212 = vmatpush1.msra.mxu0 %v1165
      %1213 = vmatprep.subr.mxu0 0.0
      %1214 = vmatpush1.msra.mxu0 %v1164
      %1215 = vmatprep.subr.mxu0 0.0
      %1216 = vmatpush2.msra.mxu0 0.0
      %1217 = vmatprep.subr.mxu0 0.0
      %1218 = vmatpush2.msra.mxu0 0.0
      %1219 = vmatprep.subr.mxu0 0.0
      %1220 = vmatpush2.msra.mxu0 0.0
      %1221 = vmatprep.subr.mxu0 0.0
      %1222 = vmatpush2.msra.mxu0 0.0
      %1223 = vmatprep.subr.mxu0 0.0
      %1224 = vmatpush2.msra.mxu0 0.0
      %1225 = vmatprep.subr.mxu0 0.0
      %1226 = vmatpush2.msra.mxu0 0.0
      %1227 = vmatprep.subr.mxu0 0.0
      %1228 = vmatpush2.msra.mxu0 0.0
      %1229 = vmatprep.subr.mxu0 0.0
      %1230 = vmatpush2.msra.mxu0 0.0
      %1231 = vmatprep.subr.mxu0 0.0
      %1232 = vmatpush2.msra.mxu0 0.0
      %1233 = vmatprep.subr.mxu0 0.0
      %1234 = vmatpush2.msra.mxu0 0.0
      %1235 = vmatprep.subr.mxu0 0.0
      %1236 = vmatpush2.msra.mxu0 0.0
      %1237 = vmatprep.subr.mxu0 0.0
      %1238 = vmatpush2.msra.mxu0 0.0
      %1239 = vmatprep.subr.mxu0 0.0
      %1240 = vmatpush2.msra.mxu0 0.0
      %1241 = vmatprep.subr.mxu0 0.0
      %1242 = vmatpush2.msra.mxu0 0.0
      %1243 = vmatprep.subr.mxu0 0.0
      %1244 = vmatpush2.msra.mxu0 0.0
      %1245 = vmatprep.subr.mxu0 0.0
      %1246 = vmatpush2.msra.mxu0 0.0
      %1247 = vmatprep.mubr.f32.mxu0 0.0
      %1248 = vmatmul.mubr.f32.gmra.mxu0 %v1181
      %v1249 = vpop.f32.mrf.mxu0
      %v1250 = vadd.f32 %v1177, %v1249
      %v1251 = vpop.f32.mrf.mxu0
      %1252 = vdwg.mxu0
      %v1253 = vld [vmem:[%s4] sm:$0xff]
      %v1254 = vld [vmem:[%s4 + $0x8] sm:$0xff]
      %v1255 = vld [vmem:[%s4 + $0x10] sm:$0xff]
      %v1256 = vld [vmem:[%s4 + $0x18] sm:$0xff]
      %v1257 = vld [vmem:[%s4 + $0x20] sm:$0xff]
      %v1258 = vld [vmem:[%s4 + $0x28] sm:$0xff]
      %v1259 = vld [vmem:[%s4 + $0x30] sm:$0xff]
      %v1260 = vld [vmem:[%s4 + $0x38] sm:$0xff]
      %v1261 = vld [vmem:[%s4 + $0x40] sm:$0xff]
      %v1262 = vld [vmem:[%s4 + $0x48] sm:$0xff]
      %v1263 = vld [vmem:[%s4 + $0x50] sm:$0xff]
      %v1264 = vld [vmem:[%s4 + $0x58] sm:$0xff]
      %v1265 = vld [vmem:[%s4 + $0x60] sm:$0xff]
      %v1266 = vld [vmem:[%s4 + $0x68] sm:$0xff]
      %v1267 = vld [vmem:[%s4 + $0x70] sm:$0xff]
      %v1268 = vld [vmem:[%s4 + $0x78] sm:$0xff]
      %v1269 = vsel %vm1063, %v1044, 0
      %1271 = vmatprep.subr.mxu0 0.0
      %1272 = vmatpush1.msra.mxu0 0.0
      %1273 = vmatprep.subr.mxu0 0.0
      %1274 = vmatpush1.msra.mxu0 0.0
      %1275 = vmatprep.subr.mxu0 0.0
      %1276 = vmatpush1.msra.mxu0 0.0
      %1277 = vmatprep.subr.mxu0 0.0
      %1278 = vmatpush1.msra.mxu0 0.0
      %1279 = vmatprep.subr.mxu0 0.0
      %1280 = vmatpush1.msra.mxu0 0.0
      %1281 = vmatprep.subr.mxu0 0.0
      %1282 = vmatpush1.msra.mxu0 0.0
      %1283 = vmatprep.subr.mxu0 0.0
      %1284 = vmatpush1.msra.mxu0 0.0
      %1285 = vmatprep.subr.mxu0 0.0
      %1286 = vmatpush1.msra.mxu0 0.0
      %1287 = vmatprep.subr.mxu0 %v1268
      %1288 = vmatpush1.msra.mxu0 %v1267
      %1289 = vmatprep.subr.mxu0 %v1266
      %1290 = vmatpush1.msra.mxu0 %v1265
      %1291 = vmatprep.subr.mxu0 %v1264
      %1292 = vmatpush1.msra.mxu0 %v1263
      %1293 = vmatprep.subr.mxu0 %v1262
      %1294 = vmatpush1.msra.mxu0 %v1261
      %1295 = vmatprep.subr.mxu0 %v1260
      %1296 = vmatpush1.msra.mxu0 %v1259
      %1297 = vmatprep.subr.mxu0 %v1258
      %1298 = vmatpush1.msra.mxu0 %v1257
      %1299 = vmatprep.subr.mxu0 %v1256
      %1300 = vmatpush1.msra.mxu0 %v1255
      %1301 = vmatprep.subr.mxu0 %v1254
      %1302 = vmatpush1.msra.mxu0 %v1253
      %1303 = vmatprep.subr.mxu0 0.0
      %1304 = vmatpush2.msra.mxu0 0.0
      %1305 = vmatprep.subr.mxu0 0.0
      %1306 = vmatpush2.msra.mxu0 0.0
      %1307 = vmatprep.subr.mxu0 0.0
      %1308 = vmatpush2.msra.mxu0 0.0
      %1309 = vmatprep.subr.mxu0 0.0
      %1310 = vmatpush2.msra.mxu0 0.0
      %1311 = vmatprep.subr.mxu0 0.0
      %1312 = vmatpush2.msra.mxu0 0.0
      %1313 = vmatprep.subr.mxu0 0.0
      %1314 = vmatpush2.msra.mxu0 0.0
      %1315 = vmatprep.subr.mxu0 0.0
      %1316 = vmatpush2.msra.mxu0 0.0
      %1317 = vmatprep.subr.mxu0 0.0
      %1318 = vmatpush2.msra.mxu0 0.0
      %1319 = vmatprep.subr.mxu0 0.0
      %1320 = vmatpush2.msra.mxu0 0.0
      %1321 = vmatprep.subr.mxu0 0.0
      %1322 = vmatpush2.msra.mxu0 0.0
      %1323 = vmatprep.subr.mxu0 0.0
      %1324 = vmatpush2.msra.mxu0 0.0
      %1325 = vmatprep.subr.mxu0 0.0
      %1326 = vmatpush2.msra.mxu0 0.0
      %1327 = vmatprep.subr.mxu0 0.0
      %1328 = vmatpush2.msra.mxu0 0.0
      %1329 = vmatprep.subr.mxu0 0.0
      %1330 = vmatpush2.msra.mxu0 0.0
      %1331 = vmatprep.subr.mxu0 0.0
      %1332 = vmatpush2.msra.mxu0 0.0
      %1333 = vmatprep.subr.mxu0 0.0
      %1334 = vmatpush2.msra.mxu0 0.0
      %1335 = vmatprep.mubr.f32.mxu0 0.0
      %1336 = vmatmul.mubr.f32.gmra.mxu0 %v1269
      %v1337 = vpop.f32.mrf.mxu0
      %v1338 = vadd.f32 0.0, %v1337
      %v1339 = vpop.f32.mrf.mxu0
      %v1340 = vadd.f32 0.0, %v1339
      %1341 = vdwg.mxu0
      %1344 = vrot.lane.b32.xlu0 %v1338, 17
      %v1345 = vpop.permute.xlu0 %1344
      %1346 = vrot.lane.b32.xlu0 %v1340, 17
      %v1347 = vpop.permute.xlu0 %1346
      %v1348 = vsel %vm749, %v1345, %v1347
      %vm1352 = vcmask 1043592
      %1353 = vst.msk [vmem:[#allocation3] sm:$0xf] %vm1352, %v1345
      %1354 = vst [vmem:[#allocation3 + $0x8] sm:$0xf] %v1348
      %1355 = vst.msk [vmem:[#allocation3 + $0x10] sm:$0xf] %vm751, %v1347
      %v1356 = vld [vmem:[#allocation3] sm:$0xf]
      %v1357 = vld [vmem:[#allocation3 + $0x8] sm:$0xf]
      %v1358 = vld [vmem:[%s6] ss:$2 sm:$0x3]
      %v1360 = vlaneseq
      %v1361 = vshrl.u32 %v1360, 7
      %v1362 = vsub.s32 0, %v1361
      %v1363 = vrot.slane %v1358, %v1362
      %v1364 = vlaneseq
      %v1365 = vshrl.u32 %v1364, 7
      %v1366 = vsub.s32 1, %v1365
      %v1367 = vrot.slane %v1358, %v1366
      %v1370 = vmul.f32 %v1356, %v1363
      %v1371 = vmul.f32 %v1357, %v1367
      %1372 = vst [vmem:[#allocation4] sm:$0xf] %v1370
      %1373 = vst [vmem:[#allocation4 + $0x8] sm:$0xf] %v1371
      %v1374 = vld [vmem:[#allocation3] sm:$0xf]
      %v1375 = vld [vmem:[#allocation3 + $0x8] sm:$0xf]
      %v1376 = vld [vmem:[#allocation3 + $0x10] sm:$0xf]
      %v1380 = vrot.slane %v1374, 4
      %v1381 = vrot.slane %v1375, 4
      %v1382 = vrot.slane %v1376, 4
      %1383 = vrot.lane.b32.xlu0 %v1380, 127
      %v1384 = vpop.permute.xlu0 %1383
      %1385 = vrot.lane.b32.xlu0 %v1381, 127
      %v1386 = vpop.permute.xlu0 %1385
      %1387 = vrot.lane.b32.xlu0 %v1382, 127
      %v1388 = vpop.permute.xlu0 %1387
      %vm1389 = vcmask 1039360
      %v1390 = vsel %vm1389, %v1384, %v1386
      %v1391 = vsel %vm1389, %v1386, %v1388
      %1394 = vst [vmem:[#allocation4] sm:$0xf0] %v1390
      %1395 = vst [vmem:[#allocation4 + $0x8] sm:$0xf0] %v1391
      %v1396 = vld [vmem:[#allocation3] sm:$0xf]
      %v1397 = vld [vmem:[#allocation3 + $0x8] sm:$0xf]
      %v1398 = vld [vmem:[#allocation3 + $0x10] sm:$0xf]
      %s1399 = scalar_lea.vmem %s6, 1
      %v1400 = vld [vmem:[%s1399] ss:$2 sm:$0x3]
      %v1402 = vlaneseq
      %v1403 = vshrl.u32 %v1402, 7
      %v1404 = vsub.s32 0, %v1403
      %v1405 = vrot.slane %v1400, %v1404
      %v1406 = vlaneseq
      %v1407 = vshrl.u32 %v1406, 7
      %v1408 = vsub.s32 1, %v1407
      %v1409 = vrot.slane %v1400, %v1408
      %1410 = vrot.lane.b32.xlu0 %v1405, 2
      %v1411 = vpop.permute.xlu0 %1410
      %1412 = vrot.lane.b32.xlu0 %v1409, 2
      %v1413 = vpop.permute.xlu0 %1412
      %vm1414 = vcmask 15360
      %v1415 = vsel %vm1414, %v1411, %v1413
      %v1419 = vmul.f32 %v1396, %v1411
      %v1420 = vmul.f32 %v1397, %v1415
      %v1421 = vmul.f32 %v1398, %v1413
      %1425 = vrot.lane.b32.xlu0 %v1419, 126
      %v1426 = vpop.permute.xlu0 %1425
      %1427 = vrot.lane.b32.xlu0 %v1420, 126
      %v1428 = vpop.permute.xlu0 %1427
      %1429 = vrot.lane.b32.xlu0 %v1421, 126
      %v1430 = vpop.permute.xlu0 %1429
      %vm1431 = vcmask 1031168
      %v1432 = vsel %vm1431, %v1426, %v1428
      %v1433 = vsel %vm1431, %v1428, %v1430
      %1436 = vst [vmem:[#allocation4 + $0x10] sm:$0xf] %v1432
      %1437 = vst [vmem:[#allocation4 + $0x18] sm:$0xf] %v1433
      %v1438 = vld [vmem:[#allocation3] sm:$0xf]
      %v1439 = vld [vmem:[#allocation3 + $0x8] sm:$0xf]
      %v1440 = vld [vmem:[#allocation3 + $0x10] sm:$0xf]
      %v1441 = vld [vmem:[%s6] ss:$2 sm:$0x3]
      %v1443 = vlaneseq
      %v1444 = vshrl.u32 %v1443, 7
      %v1445 = vsub.s32 0, %v1444
      %v1446 = vrot.slane %v1441, %v1445
      %v1447 = vlaneseq
      %v1448 = vshrl.u32 %v1447, 7
      %v1449 = vsub.s32 1, %v1448
      %v1450 = vrot.slane %v1441, %v1449
      %1451 = vrot.lane.b32.xlu0 %v1446, 16
      %v1452 = vpop.permute.xlu0 %1451
      %1453 = vrot.lane.b32.xlu0 %v1450, 16
      %v1454 = vpop.permute.xlu0 %1453
      %v1455 = vsel %vm762, %v1452, %v1454
      %v1459 = vmul.f32 %v1438, %v1452
      %v1460 = vmul.f32 %v1439, %v1455
      %v1461 = vmul.f32 %v1440, %v1454
      %v1465 = vrot.slane %v1459, 4
      %v1466 = vrot.slane %v1460, 4
      %v1467 = vrot.slane %v1461, 4
      %1468 = vrot.lane.b32.xlu0 %v1465, 112
      %v1469 = vpop.permute.xlu0 %1468
      %1470 = vrot.lane.b32.xlu0 %v1466, 112
      %v1471 = vpop.permute.xlu0 %1470
      %1472 = vrot.lane.b32.xlu0 %v1467, 112
      %v1473 = vpop.permute.xlu0 %1472
      %vm1474 = vcmask 916480
      %v1475 = vsel %vm1474, %v1469, %v1471
      %v1476 = vsel %vm1474, %v1471, %v1473
      %1479 = vst [vmem:[#allocation4 + $0x10] sm:$0xf0] %v1475
      %1480 = vst [vmem:[#allocation4 + $0x18] sm:$0xf0] %v1476
      %v1481 = vld [vmem:[#allocation3] sm:$0xf]
      %v1482 = vld [vmem:[#allocation3 + $0x8] sm:$0xf]
      %v1483 = vld [vmem:[#allocation3 + $0x10] sm:$0xf]
      %1487 = vrot.lane.b32.xlu0 %v1481, 111
      %v1488 = vpop.permute.xlu0 %1487
      %1489 = vrot.lane.b32.xlu0 %v1482, 111
      %v1490 = vpop.permute.xlu0 %1489
      %1491 = vrot.lane.b32.xlu0 %v1483, 111
      %v1492 = vpop.permute.xlu0 %1491
      %vm1493 = vcmask 908288
      %v1494 = vsel %vm1493, %v1488, %v1490
      %v1495 = vsel %vm1493, %v1490, %v1492
      %1498 = vst [vmem:[#allocation4 + $0x20] sm:$0xf] %v1494
      %1499 = vst [vmem:[#allocation4 + $0x28] sm:$0xf] %v1495
      %v1500 = vld [vmem:[#allocation3] sm:$0xf]
      %v1501 = vld [vmem:[#allocation3 + $0x8] sm:$0xf]
      %v1502 = vld [vmem:[#allocation3 + $0x10] sm:$0xf]
      %v1503 = vld [vmem:[%s1399] ss:$2 sm:$0x3]
      %v1505 = vlaneseq
      %v1506 = vshrl.u32 %v1505, 7
      %v1507 = vsub.s32 0, %v1506
      %v1508 = vrot.slane %v1503, %v1507
      %v1509 = vlaneseq
      %v1510 = vshrl.u32 %v1509, 7
      %v1511 = vsub.s32 1, %v1510
      %v1512 = vrot.slane %v1503, %v1511
      %1513 = vrot.lane.b32.xlu0 %v1508, 18
      %v1514 = vpop.permute.xlu0 %1513
      %1515 = vrot.lane.b32.xlu0 %v1512, 18
      %v1516 = vpop.permute.xlu0 %1515
      %vm1517 = vcmask 146432
      %v1518 = vsel %vm1517, %v1514, %v1516
      %v1522 = vmul.f32 %v1500, %v1514
      %v1523 = vmul.f32 %v1501, %v1518
      %v1524 = vmul.f32 %v1502, %v1516
      %v1528 = vrot.slane %v1522, 4
      %v1529 = vrot.slane %v1523, 4
      %v1530 = vrot.slane %v1524, 4
      %1531 = vrot.lane.b32.xlu0 %v1528, 110
      %v1532 = vpop.permute.xlu0 %1531
      %1533 = vrot.lane.b32.xlu0 %v1529, 110
      %v1534 = vpop.permute.xlu0 %1533
      %1535 = vrot.lane.b32.xlu0 %v1530, 110
      %v1536 = vpop.permute.xlu0 %1535
      %vm1537 = vcmask 900096
      %v1538 = vsel %vm1537, %v1532, %v1534
      %v1539 = vsel %vm1537, %v1534, %v1536
      %1542 = vst [vmem:[#allocation4 + $0x20] sm:$0xf0] %v1538
      %1543 = vst [vmem:[#allocation4 + $0x28] sm:$0xf0] %v1539
      %v1544 = vld [vmem:[#allocation3] sm:$0xf]
      %v1545 = vld [vmem:[#allocation3 + $0x8] sm:$0xf]
      %v1546 = vld [vmem:[#allocation3 + $0x10] sm:$0xf]
      %v1547 = vld [vmem:[%s6] ss:$2 sm:$0x3]
      %v1549 = vlaneseq
      %v1550 = vshrl.u32 %v1549, 7
      %v1551 = vsub.s32 0, %v1550
      %v1552 = vrot.slane %v1547, %v1551
      %v1553 = vlaneseq
      %v1554 = vshrl.u32 %v1553, 7
      %v1555 = vsub.s32 1, %v1554
      %v1556 = vrot.slane %v1547, %v1555
      %1557 = vrot.lane.b32.xlu0 %v1552, 32
      %v1558 = vpop.permute.xlu0 %1557
      %1559 = vrot.lane.b32.xlu0 %v1556, 32
      %v1560 = vpop.permute.xlu0 %1559
      %vm1561 = vcmask 261120
      %v1562 = vsel %vm1561, %v1558, %v1560
      %v1566 = vmul.f32 %v1544, %v1558
      %v1567 = vmul.f32 %v1545, %v1562
      %v1568 = vmul.f32 %v1546, %v1560
      %1572 = vrot.lane.b32.xlu0 %v1566, 96
      %v1573 = vpop.permute.xlu0 %1572
      %1574 = vrot.lane.b32.xlu0 %v1567, 96
      %v1575 = vpop.permute.xlu0 %1574
      %1576 = vrot.lane.b32.xlu0 %v1568, 96
      %v1577 = vpop.permute.xlu0 %1576
      %vm1578 = vcmask 785408
      %v1579 = vsel %vm1578, %v1573, %v1575
      %v1580 = vsel %vm1578, %v1575, %v1577
      %1583 = vst [vmem:[#allocation4 + $0x30] sm:$0xf] %v1579
      %1584 = vst [vmem:[#allocation4 + $0x38] sm:$0xf] %v1580
      %v1585 = vld [vmem:[#allocation3] sm:$0xf]
      %v1586 = vld [vmem:[#allocation3 + $0x8] sm:$0xf]
      %v1587 = vld [vmem:[#allocation3 + $0x10] sm:$0xf]
      %v1591 = vrot.slane %v1585, 4
      %v1592 = vrot.slane %v1586, 4
      %v1593 = vrot.slane %v1587, 4
      %1594 = vrot.lane.b32.xlu0 %v1591, 95
      %v1595 = vpop.permute.xlu0 %1594
      %1596 = vrot.lane.b32.xlu0 %v1592, 95
      %v1597 = vpop.permute.xlu0 %1596
      %1598 = vrot.lane.b32.xlu0 %v1593, 95
      %v1599 = vpop.permute.xlu0 %1598
      %vm1600 = vcmask 777216
      %v1601 = vsel %vm1600, %v1595, %v1597
      %v1602 = vsel %vm1600, %v1597, %v1599
      %1605 = vst [vmem:[#allocation4 + $0x30] sm:$0xf0] %v1601
      %1606 = vst [vmem:[#allocation4 + $0x38] sm:$0xf0] %v1602
      %v1607 = vld [vmem:[#allocation3] sm:$0xf]
      %v1608 = vld [vmem:[#allocation3 + $0x8] sm:$0xf]
      %v1609 = vld [vmem:[#allocation3 + $0x10] sm:$0xf]
      %v1610 = vld [vmem:[%s1399] ss:$2 sm:$0x3]
      %v1612 = vlaneseq
      %v1613 = vshrl.u32 %v1612, 7
      %v1614 = vsub.s32 0, %v1613
      %v1615 = vrot.slane %v1610, %v1614
      %v1616 = vlaneseq
      %v1617 = vshrl.u32 %v1616, 7
      %v1618 = vsub.s32 1, %v1617
      %v1619 = vrot.slane %v1610, %v1618
      %1620 = vrot.lane.b32.xlu0 %v1615, 34
      %v1621 = vpop.permute.xlu0 %1620
      %1622 = vrot.lane.b32.xlu0 %v1619, 34
      %v1623 = vpop.permute.xlu0 %1622
      %vm1624 = vcmask 277504
      %v1625 = vsel %vm1624, %v1621, %v1623
      %v1629 = vmul.f32 %v1607, %v1621
      %v1630 = vmul.f32 %v1608, %v1625
      %v1631 = vmul.f32 %v1609, %v1623
      %1635 = vrot.lane.b32.xlu0 %v1629, 94
      %v1636 = vpop.permute.xlu0 %1635
      %1637 = vrot.lane.b32.xlu0 %v1630, 94
      %v1638 = vpop.permute.xlu0 %1637
      %1639 = vrot.lane.b32.xlu0 %v1631, 94
      %v1640 = vpop.permute.xlu0 %1639
      %vm1641 = vcmask 769024
      %v1642 = vsel %vm1641, %v1636, %v1638
      %v1643 = vsel %vm1641, %v1638, %v1640
      %1646 = vst [vmem:[#allocation4 + $0x40] sm:$0xf] %v1642
      %1647 = vst [vmem:[#allocation4 + $0x48] sm:$0xf] %v1643
      %v1648 = vld [vmem:[%s9] sm:$0xf]
      %v1649 = vld [vmem:[#allocation4] sm:$0xff]
      %v1650 = vld [vmem:[#allocation4 + $0x8] sm:$0xff]
      %v1651 = vld [vmem:[#allocation4 + $0x10] sm:$0xff]
      %v1652 = vld [vmem:[#allocation4 + $0x18] sm:$0xff]
      %v1653 = vld [vmem:[#allocation4 + $0x20] sm:$0xff]
      %v1654 = vld [vmem:[#allocation4 + $0x28] sm:$0xff]
      %v1655 = vld [vmem:[#allocation4 + $0x30] sm:$0xff]
      %v1656 = vld [vmem:[#allocation4 + $0x38] sm:$0xff]
      %v1657 = vld [vmem:[#allocation4 + $0x40] sm:$0xf]
      %v1658 = vld [vmem:[#allocation4 + $0x48] sm:$0xf]
      %v1659 = vld [vmem:[%s10] sm:$0xf]
      %1661 = vset.pattern.permute.xlu0 0
      %1662 = vperm.xlu0 %1661, %v1659
      %v1663 = vpop.permute.xlu0 %1662
      %v1666 = vsel %vm966, %v1648, 0
      %v1669 = vsel %vm970, %v1657, 0
      %v1672 = vsel %vm970, %v1658, 0
      %1674 = vmatprep.subr.mxu0 0.0
      %1675 = vmatpush1.msra.mxu0 0.0
      %1676 = vmatprep.subr.mxu0 0.0
      %1677 = vmatpush1.msra.mxu0 0.0
      %1678 = vmatprep.subr.mxu0 0.0
      %1679 = vmatpush1.msra.mxu0 0.0
      %1680 = vmatprep.subr.mxu0 0.0
      %1681 = vmatpush1.msra.mxu0 0.0
      %1682 = vmatprep.subr.mxu0 0.0
      %1683 = vmatpush1.msra.mxu0 0.0
      %1684 = vmatprep.subr.mxu0 0.0
      %1685 = vmatpush1.msra.mxu0 0.0
      %1686 = vmatprep.subr.mxu0 0.0
      %1687 = vmatpush1.msra.mxu0 0.0
      %1688 = vmatprep.subr.mxu0 0.0
      %1689 = vmatpush1.msra.mxu0 0.0
      %1690 = vmatprep.subr.mxu0 0.0
      %1691 = vmatpush1.msra.mxu0 0.0
      %1692 = vmatprep.subr.mxu0 0.0
      %1693 = vmatpush1.msra.mxu0 0.0
      %1694 = vmatprep.subr.mxu0 0.0
      %1695 = vmatpush1.msra.mxu0 0.0
      %1696 = vmatprep.subr.mxu0 %v1672
      %1697 = vmatpush1.msra.mxu0 %v1669
      %1698 = vmatprep.subr.mxu0 %v1656
      %1699 = vmatpush1.msra.mxu0 %v1655
      %1700 = vmatprep.subr.mxu0 %v1654
      %1701 = vmatpush1.msra.mxu0 %v1653
      %1702 = vmatprep.subr.mxu0 %v1652
      %1703 = vmatpush1.msra.mxu0 %v1651
      %1704 = vmatprep.subr.mxu0 %v1650
      %1705 = vmatpush1.msra.mxu0 %v1649
      %1706 = vmatprep.subr.mxu0 0.0
      %1707 = vmatpush2.msra.mxu0 0.0
      %1708 = vmatprep.subr.mxu0 0.0
      %1709 = vmatpush2.msra.mxu0 0.0
      %1710 = vmatprep.subr.mxu0 0.0
      %1711 = vmatpush2.msra.mxu0 0.0
      %1712 = vmatprep.subr.mxu0 0.0
      %1713 = vmatpush2.msra.mxu0 0.0
      %1714 = vmatprep.subr.mxu0 0.0
      %1715 = vmatpush2.msra.mxu0 0.0
      %1716 = vmatprep.subr.mxu0 0.0
      %1717 = vmatpush2.msra.mxu0 0.0
      %1718 = vmatprep.subr.mxu0 0.0
      %1719 = vmatpush2.msra.mxu0 0.0
      %1720 = vmatprep.subr.mxu0 0.0
      %1721 = vmatpush2.msra.mxu0 0.0
      %1722 = vmatprep.subr.mxu0 0.0
      %1723 = vmatpush2.msra.mxu0 0.0
      %1724 = vmatprep.subr.mxu0 0.0
      %1725 = vmatpush2.msra.mxu0 0.0
      %1726 = vmatprep.subr.mxu0 0.0
      %1727 = vmatpush2.msra.mxu0 0.0
      %1728 = vmatprep.subr.mxu0 0.0
      %1729 = vmatpush2.msra.mxu0 0.0
      %1730 = vmatprep.subr.mxu0 0.0
      %1731 = vmatpush2.msra.mxu0 0.0
      %1732 = vmatprep.subr.mxu0 0.0
      %1733 = vmatpush2.msra.mxu0 0.0
      %1734 = vmatprep.subr.mxu0 0.0
      %1735 = vmatpush2.msra.mxu0 0.0
      %1736 = vmatprep.subr.mxu0 0.0
      %1737 = vmatpush2.msra.mxu0 0.0
      %1738 = vmatprep.mubr.f32.mxu0 0.0
      %1739 = vmatmul.mubr.f32.gmra.mxu0 %v1666
      %v1740 = vpop.f32.mrf.mxu0
      %v1741 = vadd.f32 %v1663, %v1740
      %v1742 = vpop.f32.mrf.mxu0
      %v1743 = vadd.f32 %v1663, %v1742
      %1744 = vdwg.mxu0
      %v1745 = vld [vmem:[%s4] sm:$0xff]
      %v1746 = vld [vmem:[%s4 + $0x8] sm:$0xff]
      %v1747 = vld [vmem:[%s4 + $0x10] sm:$0xff]
      %v1748 = vld [vmem:[%s4 + $0x18] sm:$0xff]
      %v1749 = vld [vmem:[%s4 + $0x20] sm:$0xff]
      %v1750 = vld [vmem:[%s4 + $0x28] sm:$0xff]
      %v1751 = vld [vmem:[%s4 + $0x30] sm:$0xff]
      %v1752 = vld [vmem:[%s4 + $0x38] sm:$0xff]
      %v1753 = vld [vmem:[%s4 + $0x40] sm:$0xff]
      %v1754 = vld [vmem:[%s4 + $0x48] sm:$0xff]
      %v1755 = vld [vmem:[%s4 + $0x50] sm:$0xff]
      %v1756 = vld [vmem:[%s4 + $0x58] sm:$0xff]
      %v1757 = vld [vmem:[%s4 + $0x60] sm:$0xff]
      %v1758 = vld [vmem:[%s4 + $0x68] sm:$0xff]
      %v1759 = vld [vmem:[%s4 + $0x70] sm:$0xff]
      %v1760 = vld [vmem:[%s4 + $0x78] sm:$0xff]
      %v1762 = vsel %vm1063, %v758, 0
      %1764 = vmatprep.subr.mxu0 0.0
      %1765 = vmatpush1.msra.mxu0 0.0
      %1766 = vmatprep.subr.mxu0 0.0
      %1767 = vmatpush1.msra.mxu0 0.0
      %1768 = vmatprep.subr.mxu0 0.0
      %1769 = vmatpush1.msra.mxu0 0.0
      %1770 = vmatprep.subr.mxu0 0.0
      %1771 = vmatpush1.msra.mxu0 0.0
      %1772 = vmatprep.subr.mxu0 0.0
      %1773 = vmatpush1.msra.mxu0 0.0
      %1774 = vmatprep.subr.mxu0 0.0
      %1775 = vmatpush1.msra.mxu0 0.0
      %1776 = vmatprep.subr.mxu0 0.0
      %1777 = vmatpush1.msra.mxu0 0.0
      %1778 = vmatprep.subr.mxu0 0.0
      %1779 = vmatpush1.msra.mxu0 0.0
      %1780 = vmatprep.subr.mxu0 %v1760
      %1781 = vmatpush1.msra.mxu0 %v1759
      %1782 = vmatprep.subr.mxu0 %v1758
      %1783 = vmatpush1.msra.mxu0 %v1757
      %1784 = vmatprep.subr.mxu0 %v1756
      %1785 = vmatpush1.msra.mxu0 %v1755
      %1786 = vmatprep.subr.mxu0 %v1754
      %1787 = vmatpush1.msra.mxu0 %v1753
      %1788 = vmatprep.subr.mxu0 %v1752
      %1789 = vmatpush1.msra.mxu0 %v1751
      %1790 = vmatprep.subr.mxu0 %v1750
      %1791 = vmatpush1.msra.mxu0 %v1749
      %1792 = vmatprep.subr.mxu0 %v1748
      %1793 = vmatpush1.msra.mxu0 %v1747
      %1794 = vmatprep.subr.mxu0 %v1746
      %1795 = vmatpush1.msra.mxu0 %v1745
      %1796 = vmatprep.subr.mxu0 0.0
      %1797 = vmatpush2.msra.mxu0 0.0
      %1798 = vmatprep.subr.mxu0 0.0
      %1799 = vmatpush2.msra.mxu0 0.0
      %1800 = vmatprep.subr.mxu0 0.0
      %1801 = vmatpush2.msra.mxu0 0.0
      %1802 = vmatprep.subr.mxu0 0.0
      %1803 = vmatpush2.msra.mxu0 0.0
      %1804 = vmatprep.subr.mxu0 0.0
      %1805 = vmatpush2.msra.mxu0 0.0
      %1806 = vmatprep.subr.mxu0 0.0
      %1807 = vmatpush2.msra.mxu0 0.0
      %1808 = vmatprep.subr.mxu0 0.0
      %1809 = vmatpush2.msra.mxu0 0.0
      %1810 = vmatprep.subr.mxu0 0.0
      %1811 = vmatpush2.msra.mxu0 0.0
      %1812 = vmatprep.subr.mxu0 0.0
      %1813 = vmatpush2.msra.mxu0 0.0
      %1814 = vmatprep.subr.mxu0 0.0
      %1815 = vmatpush2.msra.mxu0 0.0
      %1816 = vmatprep.subr.mxu0 0.0
      %1817 = vmatpush2.msra.mxu0 0.0
      %1818 = vmatprep.subr.mxu0 0.0
      %1819 = vmatpush2.msra.mxu0 0.0
      %1820 = vmatprep.subr.mxu0 0.0
      %1821 = vmatpush2.msra.mxu0 0.0
      %1822 = vmatprep.subr.mxu0 0.0
      %1823 = vmatpush2.msra.mxu0 0.0
      %1824 = vmatprep.subr.mxu0 0.0
      %1825 = vmatpush2.msra.mxu0 0.0
      %1826 = vmatprep.subr.mxu0 0.0
      %1827 = vmatpush2.msra.mxu0 0.0
      %1828 = vmatprep.mubr.f32.mxu0 0.0
      %1829 = vmatmul.mubr.f32.gmra.mxu0 %v1762
      %v1830 = vpop.f32.mrf.mxu0
      %v1831 = vadd.f32 0.0, %v1830
      %v1832 = vpop.f32.mrf.mxu0
      %v1833 = vadd.f32 0.0, %v1832
      %1834 = vdwg.mxu0
      %1837 = vrot.lane.b32.xlu0 %v1831, 17
      %v1838 = vpop.permute.xlu0 %1837
      %1839 = vrot.lane.b32.xlu0 %v1833, 17
      %v1840 = vpop.permute.xlu0 %1839
      %v1841 = vsel %vm749, %v1838, %v1840
      %1845 = vst.msk [vmem:[#allocation3] sm:$0xf] %vm1352, %v1838
      %1846 = vst [vmem:[#allocation3 + $0x8] sm:$0xf] %v1841
      %1847 = vst.msk [vmem:[#allocation3 + $0x10] sm:$0xf] %vm751, %v1840
      %v1848 = vld [vmem:[#allocation3] sm:$0xf]
      %v1849 = vld [vmem:[#allocation3 + $0x8] sm:$0xf]
      %v1850 = vld [vmem:[%s6] ss:$2 sm:$0x3]
      %v1852 = vlaneseq
      %v1853 = vshrl.u32 %v1852, 7
      %v1854 = vsub.s32 0, %v1853
      %v1855 = vrot.slane %v1850, %v1854
      %v1856 = vlaneseq
      %v1857 = vshrl.u32 %v1856, 7
      %v1858 = vsub.s32 1, %v1857
      %v1859 = vrot.slane %v1850, %v1858
      %v1862 = vmul.f32 %v1848, %v1855
      %v1863 = vmul.f32 %v1849, %v1859
      %1864 = vst [vmem:[#allocation4] sm:$0xf] %v1862
      %1865 = vst [vmem:[#allocation4 + $0x8] sm:$0xf] %v1863
      %v1866 = vld [vmem:[#allocation3] sm:$0xf]
      %v1867 = vld [vmem:[#allocation3 + $0x8] sm:$0xf]
      %v1868 = vld [vmem:[#allocation3 + $0x10] sm:$0xf]
      %v1872 = vrot.slane %v1866, 4
      %v1873 = vrot.slane %v1867, 4
      %v1874 = vrot.slane %v1868, 4
      %1875 = vrot.lane.b32.xlu0 %v1872, 127
      %v1876 = vpop.permute.xlu0 %1875
      %1877 = vrot.lane.b32.xlu0 %v1873, 127
      %v1878 = vpop.permute.xlu0 %1877
      %1879 = vrot.lane.b32.xlu0 %v1874, 127
      %v1880 = vpop.permute.xlu0 %1879
      %v1881 = vsel %vm1389, %v1876, %v1878
      %v1882 = vsel %vm1389, %v1878, %v1880
      %1885 = vst [vmem:[#allocation4] sm:$0xf0] %v1881
      %1886 = vst [vmem:[#allocation4 + $0x8] sm:$0xf0] %v1882
      %v1887 = vld [vmem:[#allocation3] sm:$0xf]
      %v1888 = vld [vmem:[#allocation3 + $0x8] sm:$0xf]
      %v1889 = vld [vmem:[#allocation3 + $0x10] sm:$0xf]
      %v1890 = vld [vmem:[%s1399] ss:$2 sm:$0x3]
      %v1892 = vlaneseq
      %v1893 = vshrl.u32 %v1892, 7
      %v1894 = vsub.s32 0, %v1893
      %v1895 = vrot.slane %v1890, %v1894
      %v1896 = vlaneseq
      %v1897 = vshrl.u32 %v1896, 7
      %v1898 = vsub.s32 1, %v1897
      %v1899 = vrot.slane %v1890, %v1898
      %1900 = vrot.lane.b32.xlu0 %v1895, 2
      %v1901 = vpop.permute.xlu0 %1900
      %1902 = vrot.lane.b32.xlu0 %v1899, 2
      %v1903 = vpop.permute.xlu0 %1902
      %v1904 = vsel %vm1414, %v1901, %v1903
      %v1908 = vmul.f32 %v1887, %v1901
      %v1909 = vmul.f32 %v1888, %v1904
      %v1910 = vmul.f32 %v1889, %v1903
      %1914 = vrot.lane.b32.xlu0 %v1908, 126
      %v1915 = vpop.permute.xlu0 %1914
      %1916 = vrot.lane.b32.xlu0 %v1909, 126
      %v1917 = vpop.permute.xlu0 %1916
      %1918 = vrot.lane.b32.xlu0 %v1910, 126
      %v1919 = vpop.permute.xlu0 %1918
      %v1920 = vsel %vm1431, %v1915, %v1917
      %v1921 = vsel %vm1431, %v1917, %v1919
      %1924 = vst [vmem:[#allocation4 + $0x10] sm:$0xf] %v1920
      %1925 = vst [vmem:[#allocation4 + $0x18] sm:$0xf] %v1921
      %v1926 = vld [vmem:[#allocation3] sm:$0xf]
      %v1927 = vld [vmem:[#allocation3 + $0x8] sm:$0xf]
      %v1928 = vld [vmem:[#allocation3 + $0x10] sm:$0xf]
      %v1929 = vld [vmem:[%s6] ss:$2 sm:$0x3]
      %v1931 = vlaneseq
      %v1932 = vshrl.u32 %v1931, 7
      %v1933 = vsub.s32 0, %v1932
      %v1934 = vrot.slane %v1929, %v1933
      %v1935 = vlaneseq
      %v1936 = vshrl.u32 %v1935, 7
      %v1937 = vsub.s32 1, %v1936
      %v1938 = vrot.slane %v1929, %v1937
      %1939 = vrot.lane.b32.xlu0 %v1934, 16
      %v1940 = vpop.permute.xlu0 %1939
      %1941 = vrot.lane.b32.xlu0 %v1938, 16
      %v1942 = vpop.permute.xlu0 %1941
      %v1943 = vsel %vm762, %v1940, %v1942
      %v1947 = vmul.f32 %v1926, %v1940
      %v1948 = vmul.f32 %v1927, %v1943
      %v1949 = vmul.f32 %v1928, %v1942
      %v1953 = vrot.slane %v1947, 4
      %v1954 = vrot.slane %v1948, 4
      %v1955 = vrot.slane %v1949, 4
      %1956 = vrot.lane.b32.xlu0 %v1953, 112
      %v1957 = vpop.permute.xlu0 %1956
      %1958 = vrot.lane.b32.xlu0 %v1954, 112
      %v1959 = vpop.permute.xlu0 %1958
      %1960 = vrot.lane.b32.xlu0 %v1955, 112
      %v1961 = vpop.permute.xlu0 %1960
      %v1962 = vsel %vm1474, %v1957, %v1959
      %v1963 = vsel %vm1474, %v1959, %v1961
      %1966 = vst [vmem:[#allocation4 + $0x10] sm:$0xf0] %v1962
      %1967 = vst [vmem:[#allocation4 + $0x18] sm:$0xf0] %v1963
      %v1968 = vld [vmem:[#allocation3] sm:$0xf]
      %v1969 = vld [vmem:[#allocation3 + $0x8] sm:$0xf]
      %v1970 = vld [vmem:[#allocation3 + $0x10] sm:$0xf]
      %1974 = vrot.lane.b32.xlu0 %v1968, 111
      %v1975 = vpop.permute.xlu0 %1974
      %1976 = vrot.lane.b32.xlu0 %v1969, 111
      %v1977 = vpop.permute.xlu0 %1976
      %1978 = vrot.lane.b32.xlu0 %v1970, 111
      %v1979 = vpop.permute.xlu0 %1978
      %v1980 = vsel %vm1493, %v1975, %v1977
      %v1981 = vsel %vm1493, %v1977, %v1979
      %1984 = vst [vmem:[#allocation4 + $0x20] sm:$0xf] %v1980
      %1985 = vst [vmem:[#allocation4 + $0x28] sm:$0xf] %v1981
      %v1986 = vld [vmem:[#allocation3] sm:$0xf]
      %v1987 = vld [vmem:[#allocation3 + $0x8] sm:$0xf]
      %v1988 = vld [vmem:[#allocation3 + $0x10] sm:$0xf]
      %v1989 = vld [vmem:[%s1399] ss:$2 sm:$0x3]
      %v1991 = vlaneseq
      %v1992 = vshrl.u32 %v1991, 7
      %v1993 = vsub.s32 0, %v1992
      %v1994 = vrot.slane %v1989, %v1993
      %v1995 = vlaneseq
      %v1996 = vshrl.u32 %v1995, 7
      %v1997 = vsub.s32 1, %v1996
      %v1998 = vrot.slane %v1989, %v1997
      %1999 = vrot.lane.b32.xlu0 %v1994, 18
      %v2000 = vpop.permute.xlu0 %1999
      %2001 = vrot.lane.b32.xlu0 %v1998, 18
      %v2002 = vpop.permute.xlu0 %2001
      %v2003 = vsel %vm1517, %v2000, %v2002
      %v2007 = vmul.f32 %v1986, %v2000
      %v2008 = vmul.f32 %v1987, %v2003
      %v2009 = vmul.f32 %v1988, %v2002
      %v2013 = vrot.slane %v2007, 4
      %v2014 = vrot.slane %v2008, 4
      %v2015 = vrot.slane %v2009, 4
      %2016 = vrot.lane.b32.xlu0 %v2013, 110
      %v2017 = vpop.permute.xlu0 %2016
      %2018 = vrot.lane.b32.xlu0 %v2014, 110
      %v2019 = vpop.permute.xlu0 %2018
      %2020 = vrot.lane.b32.xlu0 %v2015, 110
      %v2021 = vpop.permute.xlu0 %2020
      %v2022 = vsel %vm1537, %v2017, %v2019
      %v2023 = vsel %vm1537, %v2019, %v2021
      %2026 = vst [vmem:[#allocation4 + $0x20] sm:$0xf0] %v2022
      %2027 = vst [vmem:[#allocation4 + $0x28] sm:$0xf0] %v2023
      %v2028 = vld [vmem:[#allocation3] sm:$0xf]
      %v2029 = vld [vmem:[#allocation3 + $0x8] sm:$0xf]
      %v2030 = vld [vmem:[#allocation3 + $0x10] sm:$0xf]
      %v2031 = vld [vmem:[%s6] ss:$2 sm:$0x3]
      %v2033 = vlaneseq
      %v2034 = vshrl.u32 %v2033, 7
      %v2035 = vsub.s32 0, %v2034
      %v2036 = vrot.slane %v2031, %v2035
      %v2037 = vlaneseq
      %v2038 = vshrl.u32 %v2037, 7
      %v2039 = vsub.s32 1, %v2038
      %v2040 = vrot.slane %v2031, %v2039
      %2041 = vrot.lane.b32.xlu0 %v2036, 32
      %v2042 = vpop.permute.xlu0 %2041
      %2043 = vrot.lane.b32.xlu0 %v2040, 32
      %v2044 = vpop.permute.xlu0 %2043
      %v2045 = vsel %vm1561, %v2042, %v2044
      %v2049 = vmul.f32 %v2028, %v2042
      %v2050 = vmul.f32 %v2029, %v2045
      %v2051 = vmul.f32 %v2030, %v2044
      %2055 = vrot.lane.b32.xlu0 %v2049, 96
      %v2056 = vpop.permute.xlu0 %2055
      %2057 = vrot.lane.b32.xlu0 %v2050, 96
      %v2058 = vpop.permute.xlu0 %2057
      %2059 = vrot.lane.b32.xlu0 %v2051, 96
      %v2060 = vpop.permute.xlu0 %2059
      %v2061 = vsel %vm1578, %v2056, %v2058
      %v2062 = vsel %vm1578, %v2058, %v2060
      %2065 = vst [vmem:[#allocation4 + $0x30] sm:$0xf] %v2061
      %2066 = vst [vmem:[#allocation4 + $0x38] sm:$0xf] %v2062
      %v2067 = vld [vmem:[#allocation3] sm:$0xf]
      %v2068 = vld [vmem:[#allocation3 + $0x8] sm:$0xf]
      %v2069 = vld [vmem:[#allocation3 + $0x10] sm:$0xf]
      %v2073 = vrot.slane %v2067, 4
      %v2074 = vrot.slane %v2068, 4
      %v2075 = vrot.slane %v2069, 4
      %2076 = vrot.lane.b32.xlu0 %v2073, 95
      %v2077 = vpop.permute.xlu0 %2076
      %2078 = vrot.lane.b32.xlu0 %v2074, 95
      %v2079 = vpop.permute.xlu0 %2078
      %2080 = vrot.lane.b32.xlu0 %v2075, 95
      %v2081 = vpop.permute.xlu0 %2080
      %v2082 = vsel %vm1600, %v2077, %v2079
      %v2083 = vsel %vm1600, %v2079, %v2081
      %2086 = vst [vmem:[#allocation4 + $0x30] sm:$0xf0] %v2082
      %2087 = vst [vmem:[#allocation4 + $0x38] sm:$0xf0] %v2083
      %v2088 = vld [vmem:[#allocation3] sm:$0xf]
      %v2089 = vld [vmem:[#allocation3 + $0x8] sm:$0xf]
      %v2090 = vld [vmem:[#allocation3 + $0x10] sm:$0xf]
      %v2091 = vld [vmem:[%s1399] ss:$2 sm:$0x3]
      %v2093 = vlaneseq
      %v2094 = vshrl.u32 %v2093, 7
      %v2095 = vsub.s32 0, %v2094
      %v2096 = vrot.slane %v2091, %v2095
      %v2097 = vlaneseq
      %v2098 = vshrl.u32 %v2097, 7
      %v2099 = vsub.s32 1, %v2098
      %v2100 = vrot.slane %v2091, %v2099
      %2101 = vrot.lane.b32.xlu0 %v2096, 34
      %v2102 = vpop.permute.xlu0 %2101
      %2103 = vrot.lane.b32.xlu0 %v2100, 34
      %v2104 = vpop.permute.xlu0 %2103
      %v2105 = vsel %vm1624, %v2102, %v2104
      %v2109 = vmul.f32 %v2088, %v2102
      %v2110 = vmul.f32 %v2089, %v2105
      %v2111 = vmul.f32 %v2090, %v2104
      %2115 = vrot.lane.b32.xlu0 %v2109, 94
      %v2116 = vpop.permute.xlu0 %2115
      %2117 = vrot.lane.b32.xlu0 %v2110, 94
      %v2118 = vpop.permute.xlu0 %2117
      %2119 = vrot.lane.b32.xlu0 %v2111, 94
      %v2120 = vpop.permute.xlu0 %2119
      %v2121 = vsel %vm1641, %v2116, %v2118
      %v2122 = vsel %vm1641, %v2118, %v2120
      %2125 = vst [vmem:[#allocation4 + $0x40] sm:$0xf] %v2121
      %2126 = vst [vmem:[#allocation4 + $0x48] sm:$0xf] %v2122
      %v2127 = vld [vmem:[%s11] sm:$0xf]
      %v2128 = vld [vmem:[#allocation4] sm:$0xff]
      %v2129 = vld [vmem:[#allocation4 + $0x8] sm:$0xff]
      %v2130 = vld [vmem:[#allocation4 + $0x10] sm:$0xff]
      %v2131 = vld [vmem:[#allocation4 + $0x18] sm:$0xff]
      %v2132 = vld [vmem:[#allocation4 + $0x20] sm:$0xff]
      %v2133 = vld [vmem:[#allocation4 + $0x28] sm:$0xff]
      %v2134 = vld [vmem:[#allocation4 + $0x30] sm:$0xff]
      %v2135 = vld [vmem:[#allocation4 + $0x38] sm:$0xff]
      %v2136 = vld [vmem:[#allocation4 + $0x40] sm:$0xf]
      %v2137 = vld [vmem:[#allocation4 + $0x48] sm:$0xf]
      %v2138 = vld [vmem:[%s12] sm:$0xf]
      %2140 = vset.pattern.permute.xlu0 0
      %2141 = vperm.xlu0 %2140, %v2138
      %v2142 = vpop.permute.xlu0 %2141
      %v2145 = vsel %vm966, %v2127, 0
      %v2148 = vsel %vm970, %v2136, 0
      %v2151 = vsel %vm970, %v2137, 0
      %2153 = vmatprep.subr.mxu0 0.0
      %2154 = vmatpush1.msra.mxu0 0.0
      %2155 = vmatprep.subr.mxu0 0.0
      %2156 = vmatpush1.msra.mxu0 0.0
      %2157 = vmatprep.subr.mxu0 0.0
      %2158 = vmatpush1.msra.mxu0 0.0
      %2159 = vmatprep.subr.mxu0 0.0
      %2160 = vmatpush1.msra.mxu0 0.0
      %2161 = vmatprep.subr.mxu0 0.0
      %2162 = vmatpush1.msra.mxu0 0.0
      %2163 = vmatprep.subr.mxu0 0.0
      %2164 = vmatpush1.msra.mxu0 0.0
      %2165 = vmatprep.subr.mxu0 0.0
      %2166 = vmatpush1.msra.mxu0 0.0
      %2167 = vmatprep.subr.mxu0 0.0
      %2168 = vmatpush1.msra.mxu0 0.0
      %2169 = vmatprep.subr.mxu0 0.0
      %2170 = vmatpush1.msra.mxu0 0.0
      %2171 = vmatprep.subr.mxu0 0.0
      %2172 = vmatpush1.msra.mxu0 0.0
      %2173 = vmatprep.subr.mxu0 0.0
      %2174 = vmatpush1.msra.mxu0 0.0
      %2175 = vmatprep.subr.mxu0 %v2151
      %2176 = vmatpush1.msra.mxu0 %v2148
      %2177 = vmatprep.subr.mxu0 %v2135
      %2178 = vmatpush1.msra.mxu0 %v2134
      %2179 = vmatprep.subr.mxu0 %v2133
      %2180 = vmatpush1.msra.mxu0 %v2132
      %2181 = vmatprep.subr.mxu0 %v2131
      %2182 = vmatpush1.msra.mxu0 %v2130
      %2183 = vmatprep.subr.mxu0 %v2129
      %2184 = vmatpush1.msra.mxu0 %v2128
      %2185 = vmatprep.subr.mxu0 0.0
      %2186 = vmatpush2.msra.mxu0 0.0
      %2187 = vmatprep.subr.mxu0 0.0
      %2188 = vmatpush2.msra.mxu0 0.0
      %2189 = vmatprep.subr.mxu0 0.0
      %2190 = vmatpush2.msra.mxu0 0.0
      %2191 = vmatprep.subr.mxu0 0.0
      %2192 = vmatpush2.msra.mxu0 0.0
      %2193 = vmatprep.subr.mxu0 0.0
      %2194 = vmatpush2.msra.mxu0 0.0
      %2195 = vmatprep.subr.mxu0 0.0
      %2196 = vmatpush2.msra.mxu0 0.0
      %2197 = vmatprep.subr.mxu0 0.0
      %2198 = vmatpush2.msra.mxu0 0.0
      %2199 = vmatprep.subr.mxu0 0.0
      %2200 = vmatpush2.msra.mxu0 0.0
      %2201 = vmatprep.subr.mxu0 0.0
      %2202 = vmatpush2.msra.mxu0 0.0
      %2203 = vmatprep.subr.mxu0 0.0
      %2204 = vmatpush2.msra.mxu0 0.0
      %2205 = vmatprep.subr.mxu0 0.0
      %2206 = vmatpush2.msra.mxu0 0.0
      %2207 = vmatprep.subr.mxu0 0.0
      %2208 = vmatpush2.msra.mxu0 0.0
      %2209 = vmatprep.subr.mxu0 0.0
      %2210 = vmatpush2.msra.mxu0 0.0
      %2211 = vmatprep.subr.mxu0 0.0
      %2212 = vmatpush2.msra.mxu0 0.0
      %2213 = vmatprep.subr.mxu0 0.0
      %2214 = vmatpush2.msra.mxu0 0.0
      %2215 = vmatprep.subr.mxu0 0.0
      %2216 = vmatpush2.msra.mxu0 0.0
      %2217 = vmatprep.mubr.f32.mxu0 0.0
      %2218 = vmatmul.mubr.f32.gmra.mxu0 %v2145
      %v2219 = vpop.f32.mrf.mxu0
      %v2220 = vadd.f32 %v2142, %v2219
      %v2221 = vpop.f32.mrf.mxu0
      %v2222 = vadd.f32 %v2142, %v2221
      %2223 = vdwg.mxu0
      %v2224 = vmul.f32 %v1741, %v2220
      %v2225 = vmul.f32 %v1743, %v2222
      %v2227 = vcombine.high %v759, %v759
      %v2229 = vmul.f32 %v2224, %v759
      %v2230 = vmul.f32 %v2225, %v2227
      %v2231 = vld [vmem:[%s4] sm:$0xff]
      %v2232 = vld [vmem:[%s4 + $0x8] sm:$0xff]
      %v2233 = vld [vmem:[%s4 + $0x10] sm:$0xff]
      %v2234 = vld [vmem:[%s4 + $0x18] sm:$0xff]
      %v2235 = vld [vmem:[%s4 + $0x20] sm:$0xff]
      %v2236 = vld [vmem:[%s4 + $0x28] sm:$0xff]
      %v2237 = vld [vmem:[%s4 + $0x30] sm:$0xff]
      %v2238 = vld [vmem:[%s4 + $0x38] sm:$0xff]
      %v2239 = vld [vmem:[%s4 + $0x40] sm:$0xff]
      %v2240 = vld [vmem:[%s4 + $0x48] sm:$0xff]
      %v2241 = vld [vmem:[%s4 + $0x50] sm:$0xff]
      %v2242 = vld [vmem:[%s4 + $0x58] sm:$0xff]
      %v2243 = vld [vmem:[%s4 + $0x60] sm:$0xff]
      %v2244 = vld [vmem:[%s4 + $0x68] sm:$0xff]
      %v2245 = vld [vmem:[%s4 + $0x70] sm:$0xff]
      %v2246 = vld [vmem:[%s4 + $0x78] sm:$0xff]
      %v2248 = vsel %vm1063, %v1250, 0
      %2250 = vmatprep.subr.mxu0 0.0
      %2251 = vmatpush1.msra.mxu0 0.0
      %2252 = vmatprep.subr.mxu0 0.0
      %2253 = vmatpush1.msra.mxu0 0.0
      %2254 = vmatprep.subr.mxu0 0.0
      %2255 = vmatpush1.msra.mxu0 0.0
      %2256 = vmatprep.subr.mxu0 0.0
      %2257 = vmatpush1.msra.mxu0 0.0
      %2258 = vmatprep.subr.mxu0 0.0
      %2259 = vmatpush1.msra.mxu0 0.0
      %2260 = vmatprep.subr.mxu0 0.0
      %2261 = vmatpush1.msra.mxu0 0.0
      %2262 = vmatprep.subr.mxu0 0.0
      %2263 = vmatpush1.msra.mxu0 0.0
      %2264 = vmatprep.subr.mxu0 0.0
      %2265 = vmatpush1.msra.mxu0 0.0
      %2266 = vmatprep.subr.mxu0 %v2246
      %2267 = vmatpush1.msra.mxu0 %v2245
      %2268 = vmatprep.subr.mxu0 %v2244
      %2269 = vmatpush1.msra.mxu0 %v2243
      %2270 = vmatprep.subr.mxu0 %v2242
      %2271 = vmatpush1.msra.mxu0 %v2241
      %2272 = vmatprep.subr.mxu0 %v2240
      %2273 = vmatpush1.msra.mxu0 %v2239
      %2274 = vmatprep.subr.mxu0 %v2238
      %2275 = vmatpush1.msra.mxu0 %v2237
      %2276 = vmatprep.subr.mxu0 %v2236
      %2277 = vmatpush1.msra.mxu0 %v2235
      %2278 = vmatprep.subr.mxu0 %v2234
      %2279 = vmatpush1.msra.mxu0 %v2233
      %2280 = vmatprep.subr.mxu0 %v2232
      %2281 = vmatpush1.msra.mxu0 %v2231
      %2282 = vmatprep.subr.mxu0 0.0
      %2283 = vmatpush2.msra.mxu0 0.0
      %2284 = vmatprep.subr.mxu0 0.0
      %2285 = vmatpush2.msra.mxu0 0.0
      %2286 = vmatprep.subr.mxu0 0.0
      %2287 = vmatpush2.msra.mxu0 0.0
      %2288 = vmatprep.subr.mxu0 0.0
      %2289 = vmatpush2.msra.mxu0 0.0
      %2290 = vmatprep.subr.mxu0 0.0
      %2291 = vmatpush2.msra.mxu0 0.0
      %2292 = vmatprep.subr.mxu0 0.0
      %2293 = vmatpush2.msra.mxu0 0.0
      %2294 = vmatprep.subr.mxu0 0.0
      %2295 = vmatpush2.msra.mxu0 0.0
      %2296 = vmatprep.subr.mxu0 0.0
      %2297 = vmatpush2.msra.mxu0 0.0
      %2298 = vmatprep.subr.mxu0 0.0
      %2299 = vmatpush2.msra.mxu0 0.0
      %2300 = vmatprep.subr.mxu0 0.0
      %2301 = vmatpush2.msra.mxu0 0.0
      %2302 = vmatprep.subr.mxu0 0.0
      %2303 = vmatpush2.msra.mxu0 0.0
      %2304 = vmatprep.subr.mxu0 0.0
      %2305 = vmatpush2.msra.mxu0 0.0
      %2306 = vmatprep.subr.mxu0 0.0
      %2307 = vmatpush2.msra.mxu0 0.0
      %2308 = vmatprep.subr.mxu0 0.0
      %2309 = vmatpush2.msra.mxu0 0.0
      %2310 = vmatprep.subr.mxu0 0.0
      %2311 = vmatpush2.msra.mxu0 0.0
      %2312 = vmatprep.subr.mxu0 0.0
      %2313 = vmatpush2.msra.mxu0 0.0
      %2314 = vmatprep.mubr.f32.mxu0 0.0
      %2315 = vmatmul.mubr.f32.gmra.mxu0 %v2248
      %v2316 = vpop.f32.mrf.mxu0
      %v2317 = vadd.f32 0.0, %v2316
      %v2318 = vpop.f32.mrf.mxu0
      %v2319 = vadd.f32 0.0, %v2318
      %2320 = vdwg.mxu0
      %2323 = vrot.lane.b32.xlu0 %v2317, 17
      %v2324 = vpop.permute.xlu0 %2323
      %2325 = vrot.lane.b32.xlu0 %v2319, 17
      %v2326 = vpop.permute.xlu0 %2325
      %v2327 = vsel %vm749, %v2324, %v2326
      %vm2331 = vcmask 1047688
      %2332 = vst.msk [vmem:[#allocation3] sm:$0xff] %vm2331, %v2324
      %2333 = vst [vmem:[#allocation3 + $0x8] sm:$0xff] %v2327
      %2334 = vst.msk [vmem:[#allocation3 + $0x10] sm:$0xff] %vm749, %v2326
      %v2335 = vld [vmem:[#allocation3] sm:$0xff]
      %v2336 = vld [vmem:[#allocation3 + $0x8] sm:$0xff]
      %v2337 = vld [vmem:[%s6] ss:$2 sm:$0x3]
      %v2339 = vlaneseq
      %v2340 = vshrl.u32 %v2339, 7
      %v2341 = vsub.s32 0, %v2340
      %v2342 = vrot.slane %v2337, %v2341
      %v2343 = vlaneseq
      %v2344 = vshrl.u32 %v2343, 7
      %v2345 = vsub.s32 1, %v2344
      %v2346 = vrot.slane %v2337, %v2345
      %v2349 = vmul.f32 %v2335, %v2342
      %v2350 = vmul.f32 %v2336, %v2346
      %2351 = vst [vmem:[#allocation4] sm:$0xff] %v2349
      %2352 = vst [vmem:[#allocation4 + $0x8] sm:$0xff] %v2350
      %v2353 = vld [vmem:[#allocation3] sm:$0xff]
      %v2354 = vld [vmem:[#allocation3 + $0x8] sm:$0xff]
      %v2355 = vld [vmem:[#allocation3 + $0x10] sm:$0xff]
      %2359 = vrot.lane.b32.xlu0 %v2353, 127
      %v2360 = vpop.permute.xlu0 %2359
      %2361 = vrot.lane.b32.xlu0 %v2354, 127
      %v2362 = vpop.permute.xlu0 %2361
      %2363 = vrot.lane.b32.xlu0 %v2355, 127
      %v2364 = vpop.permute.xlu0 %2363
      %v2365 = vsel %vm1389, %v2360, %v2362
      %v2366 = vsel %vm1389, %v2362, %v2364
      %2369 = vst [vmem:[#allocation4 + $0x10] sm:$0xff] %v2365
      %2370 = vst [vmem:[#allocation4 + $0x18] sm:$0xff] %v2366
      %v2371 = vld [vmem:[#allocation3] sm:$0xff]
      %v2372 = vld [vmem:[#allocation3 + $0x8] sm:$0xff]
      %v2373 = vld [vmem:[#allocation3 + $0x10] sm:$0xff]
      %v2374 = vld [vmem:[%s1399] ss:$2 sm:$0x3]
      %v2376 = vlaneseq
      %v2377 = vshrl.u32 %v2376, 7
      %v2378 = vsub.s32 0, %v2377
      %v2379 = vrot.slane %v2374, %v2378
      %v2380 = vlaneseq
      %v2381 = vshrl.u32 %v2380, 7
      %v2382 = vsub.s32 1, %v2381
      %v2383 = vrot.slane %v2374, %v2382
      %2384 = vrot.lane.b32.xlu0 %v2379, 2
      %v2385 = vpop.permute.xlu0 %2384
      %2386 = vrot.lane.b32.xlu0 %v2383, 2
      %v2387 = vpop.permute.xlu0 %2386
      %v2388 = vsel %vm1414, %v2385, %v2387
      %v2392 = vmul.f32 %v2371, %v2385
      %v2393 = vmul.f32 %v2372, %v2388
      %v2394 = vmul.f32 %v2373, %v2387
      %2398 = vrot.lane.b32.xlu0 %v2392, 126
      %v2399 = vpop.permute.xlu0 %2398
      %2400 = vrot.lane.b32.xlu0 %v2393, 126
      %v2401 = vpop.permute.xlu0 %2400
      %2402 = vrot.lane.b32.xlu0 %v2394, 126
      %v2403 = vpop.permute.xlu0 %2402
      %v2404 = vsel %vm1431, %v2399, %v2401
      %v2405 = vsel %vm1431, %v2401, %v2403
      %2408 = vst [vmem:[#allocation4 + $0x20] sm:$0xff] %v2404
      %2409 = vst [vmem:[#allocation4 + $0x28] sm:$0xff] %v2405
      %v2410 = vld [vmem:[#allocation3] sm:$0xff]
      %v2411 = vld [vmem:[#allocation3 + $0x8] sm:$0xff]
      %v2412 = vld [vmem:[#allocation3 + $0x10] sm:$0xff]
      %v2413 = vld [vmem:[%s6] ss:$2 sm:$0x3]
      %v2415 = vlaneseq
      %v2416 = vshrl.u32 %v2415, 7
      %v2417 = vsub.s32 0, %v2416
      %v2418 = vrot.slane %v2413, %v2417
      %v2419 = vlaneseq
      %v2420 = vshrl.u32 %v2419, 7
      %v2421 = vsub.s32 1, %v2420
      %v2422 = vrot.slane %v2413, %v2421
      %2423 = vrot.lane.b32.xlu0 %v2418, 16
      %v2424 = vpop.permute.xlu0 %2423
      %2425 = vrot.lane.b32.xlu0 %v2422, 16
      %v2426 = vpop.permute.xlu0 %2425
      %v2427 = vsel %vm762, %v2424, %v2426
      %v2431 = vmul.f32 %v2410, %v2424
      %v2432 = vmul.f32 %v2411, %v2427
      %v2433 = vmul.f32 %v2412, %v2426
      %2437 = vrot.lane.b32.xlu0 %v2431, 112
      %v2438 = vpop.permute.xlu0 %2437
      %2439 = vrot.lane.b32.xlu0 %v2432, 112
      %v2440 = vpop.permute.xlu0 %2439
      %2441 = vrot.lane.b32.xlu0 %v2433, 112
      %v2442 = vpop.permute.xlu0 %2441
      %v2443 = vsel %vm1474, %v2438, %v2440
      %v2444 = vsel %vm1474, %v2440, %v2442
      %2447 = vst [vmem:[#allocation4 + $0x30] sm:$0xff] %v2443
      %2448 = vst [vmem:[#allocation4 + $0x38] sm:$0xff] %v2444
      %v2449 = vld [vmem:[#allocation3] sm:$0xff]
      %v2450 = vld [vmem:[#allocation3 + $0x8] sm:$0xff]
      %v2451 = vld [vmem:[#allocation3 + $0x10] sm:$0xff]
      %2455 = vrot.lane.b32.xlu0 %v2449, 111
      %v2456 = vpop.permute.xlu0 %2455
      %2457 = vrot.lane.b32.xlu0 %v2450, 111
      %v2458 = vpop.permute.xlu0 %2457
      %2459 = vrot.lane.b32.xlu0 %v2451, 111
      %v2460 = vpop.permute.xlu0 %2459
      %v2461 = vsel %vm1493, %v2456, %v2458
      %v2462 = vsel %vm1493, %v2458, %v2460
      %2465 = vst [vmem:[#allocation4 + $0x40] sm:$0xff] %v2461
      %2466 = vst [vmem:[#allocation4 + $0x48] sm:$0xff] %v2462
      %v2467 = vld [vmem:[#allocation3] sm:$0xff]
      %v2468 = vld [vmem:[#allocation3 + $0x8] sm:$0xff]
      %v2469 = vld [vmem:[#allocation3 + $0x10] sm:$0xff]
      %v2470 = vld [vmem:[%s1399] ss:$2 sm:$0x3]
      %v2472 = vlaneseq
      %v2473 = vshrl.u32 %v2472, 7
      %v2474 = vsub.s32 0, %v2473
      %v2475 = vrot.slane %v2470, %v2474
      %v2476 = vlaneseq
      %v2477 = vshrl.u32 %v2476, 7
      %v2478 = vsub.s32 1, %v2477
      %v2479 = vrot.slane %v2470, %v2478
      %2480 = vrot.lane.b32.xlu0 %v2475, 18
      %v2481 = vpop.permute.xlu0 %2480
      %2482 = vrot.lane.b32.xlu0 %v2479, 18
      %v2483 = vpop.permute.xlu0 %2482
      %v2484 = vsel %vm1517, %v2481, %v2483
      %v2488 = vmul.f32 %v2467, %v2481
      %v2489 = vmul.f32 %v2468, %v2484
      %v2490 = vmul.f32 %v2469, %v2483
      %2494 = vrot.lane.b32.xlu0 %v2488, 110
      %v2495 = vpop.permute.xlu0 %2494
      %2496 = vrot.lane.b32.xlu0 %v2489, 110
      %v2497 = vpop.permute.xlu0 %2496
      %2498 = vrot.lane.b32.xlu0 %v2490, 110
      %v2499 = vpop.permute.xlu0 %2498
      %v2500 = vsel %vm1537, %v2495, %v2497
      %v2501 = vsel %vm1537, %v2497, %v2499
      %2504 = vst [vmem:[#allocation4 + $0x50] sm:$0xff] %v2500
      %2505 = vst [vmem:[#allocation4 + $0x58] sm:$0xff] %v2501
      %v2506 = vld [vmem:[#allocation3] sm:$0xff]
      %v2507 = vld [vmem:[#allocation3 + $0x8] sm:$0xff]
      %v2508 = vld [vmem:[#allocation3 + $0x10] sm:$0xff]
      %v2509 = vld [vmem:[%s6] ss:$2 sm:$0x3]
      %v2511 = vlaneseq
      %v2512 = vshrl.u32 %v2511, 7
      %v2513 = vsub.s32 0, %v2512
      %v2514 = vrot.slane %v2509, %v2513
      %v2515 = vlaneseq
      %v2516 = vshrl.u32 %v2515, 7
      %v2517 = vsub.s32 1, %v2516
      %v2518 = vrot.slane %v2509, %v2517
      %2519 = vrot.lane.b32.xlu0 %v2514, 32
      %v2520 = vpop.permute.xlu0 %2519
      %2521 = vrot.lane.b32.xlu0 %v2518, 32
      %v2522 = vpop.permute.xlu0 %2521
      %v2523 = vsel %vm1561, %v2520, %v2522
      %v2527 = vmul.f32 %v2506, %v2520
      %v2528 = vmul.f32 %v2507, %v2523
      %v2529 = vmul.f32 %v2508, %v2522
      %2533 = vrot.lane.b32.xlu0 %v2527, 96
      %v2534 = vpop.permute.xlu0 %2533
      %2535 = vrot.lane.b32.xlu0 %v2528, 96
      %v2536 = vpop.permute.xlu0 %2535
      %2537 = vrot.lane.b32.xlu0 %v2529, 96
      %v2538 = vpop.permute.xlu0 %2537
      %v2539 = vsel %vm1578, %v2534, %v2536
      %v2540 = vsel %vm1578, %v2536, %v2538
      %2543 = vst [vmem:[#allocation4 + $0x60] sm:$0xff] %v2539
      %2544 = vst [vmem:[#allocation4 + $0x68] sm:$0xff] %v2540
      %v2545 = vld [vmem:[#allocation3] sm:$0xff]
      %v2546 = vld [vmem:[#allocation3 + $0x8] sm:$0xff]
      %v2547 = vld [vmem:[#allocation3 + $0x10] sm:$0xff]
      %2551 = vrot.lane.b32.xlu0 %v2545, 95
      %v2552 = vpop.permute.xlu0 %2551
      %2553 = vrot.lane.b32.xlu0 %v2546, 95
      %v2554 = vpop.permute.xlu0 %2553
      %2555 = vrot.lane.b32.xlu0 %v2547, 95
      %v2556 = vpop.permute.xlu0 %2555
      %v2557 = vsel %vm1600, %v2552, %v2554
      %v2558 = vsel %vm1600, %v2554, %v2556
      %2561 = vst [vmem:[#allocation4 + $0x70] sm:$0xff] %v2557
      %2562 = vst [vmem:[#allocation4 + $0x78] sm:$0xff] %v2558
      %v2563 = vld [vmem:[#allocation3] sm:$0xff]
      %v2564 = vld [vmem:[#allocation3 + $0x8] sm:$0xff]
      %v2565 = vld [vmem:[#allocation3 + $0x10] sm:$0xff]
      %v2566 = vld [vmem:[%s1399] ss:$2 sm:$0x3]
      %v2568 = vlaneseq
      %v2569 = vshrl.u32 %v2568, 7
      %v2570 = vsub.s32 0, %v2569
      %v2571 = vrot.slane %v2566, %v2570
      %v2572 = vlaneseq
      %v2573 = vshrl.u32 %v2572, 7
      %v2574 = vsub.s32 1, %v2573
      %v2575 = vrot.slane %v2566, %v2574
      %2576 = vrot.lane.b32.xlu0 %v2571, 34
      %v2577 = vpop.permute.xlu0 %2576
      %2578 = vrot.lane.b32.xlu0 %v2575, 34
      %v2579 = vpop.permute.xlu0 %2578
      %v2580 = vsel %vm1624, %v2577, %v2579
      %v2584 = vmul.f32 %v2563, %v2577
      %v2585 = vmul.f32 %v2564, %v2580
      %v2586 = vmul.f32 %v2565, %v2579
      %2590 = vrot.lane.b32.xlu0 %v2584, 94
      %v2591 = vpop.permute.xlu0 %2590
      %2592 = vrot.lane.b32.xlu0 %v2585, 94
      %v2593 = vpop.permute.xlu0 %2592
      %2594 = vrot.lane.b32.xlu0 %v2586, 94
      %v2595 = vpop.permute.xlu0 %2594
      %v2596 = vsel %vm1641, %v2591, %v2593
      %v2597 = vsel %vm1641, %v2593, %v2595
      %2600 = vst [vmem:[#allocation4 + $0x80] sm:$0xff] %v2596
      %2601 = vst [vmem:[#allocation4 + $0x88] sm:$0xff] %v2597
      %v2602 = vld [vmem:[%s15] sm:$0xff]
      %v2603 = vld [vmem:[#allocation4] sm:$0xff]
      %v2604 = vld [vmem:[#allocation4 + $0x8] sm:$0xff]
      %v2605 = vld [vmem:[#allocation4 + $0x10] sm:$0xff]
      %v2606 = vld [vmem:[#allocation4 + $0x18] sm:$0xff]
      %v2607 = vld [vmem:[#allocation4 + $0x20] sm:$0xff]
      %v2608 = vld [vmem:[#allocation4 + $0x28] sm:$0xff]
      %v2609 = vld [vmem:[#allocation4 + $0x30] sm:$0xff]
      %v2610 = vld [vmem:[#allocation4 + $0x38] sm:$0xff]
      %v2611 = vld [vmem:[#allocation4 + $0x40] sm:$0xff]
      %v2612 = vld [vmem:[#allocation4 + $0x48] sm:$0xff]
      %v2613 = vld [vmem:[#allocation4 + $0x50] sm:$0xff]
      %v2614 = vld [vmem:[#allocation4 + $0x58] sm:$0xff]
      %v2615 = vld [vmem:[#allocation4 + $0x60] sm:$0xff]
      %v2616 = vld [vmem:[#allocation4 + $0x68] sm:$0xff]
      %v2617 = vld [vmem:[#allocation4 + $0x70] sm:$0xff]
      %v2618 = vld [vmem:[#allocation4 + $0x78] sm:$0xff]
      %v2619 = vld [vmem:[#allocation4 + $0x80] sm:$0xff]
      %v2620 = vld [vmem:[#allocation4 + $0x88] sm:$0xff]
      %v2621 = vld [vmem:[%s16] sm:$0xff]
      %2623 = vset.pattern.permute.xlu0 0
      %2624 = vperm.xlu0 %2623, %v2621
      %v2625 = vpop.permute.xlu0 %2624
      %v2628 = vsel %vm1179, %v2602, 0
      %2630 = vmatprep.subr.mxu0 0.0
      %2631 = vmatpush1.msra.mxu0 0.0
      %2632 = vmatprep.subr.mxu0 0.0
      %2633 = vmatpush1.msra.mxu0 0.0
      %2634 = vmatprep.subr.mxu0 0.0
      %2635 = vmatpush1.msra.mxu0 0.0
      %2636 = vmatprep.subr.mxu0 0.0
      %2637 = vmatpush1.msra.mxu0 0.0
      %2638 = vmatprep.subr.mxu0 0.0
      %2639 = vmatpush1.msra.mxu0 0.0
      %2640 = vmatprep.subr.mxu0 0.0
      %2641 = vmatpush1.msra.mxu0 0.0
      %2642 = vmatprep.subr.mxu0 0.0
      %2643 = vmatpush1.msra.mxu0 0.0
      %2644 = vmatprep.subr.mxu0 %v2620
      %2645 = vmatpush1.msra.mxu0 %v2619
      %2646 = vmatprep.subr.mxu0 %v2618
      %2647 = vmatpush1.msra.mxu0 %v2617
      %2648 = vmatprep.subr.mxu0 %v2616
      %2649 = vmatpush1.msra.mxu0 %v2615
      %2650 = vmatprep.subr.mxu0 %v2614
      %2651 = vmatpush1.msra.mxu0 %v2613
      %2652 = vmatprep.subr.mxu0 %v2612
      %2653 = vmatpush1.msra.mxu0 %v2611
      %2654 = vmatprep.subr.mxu0 %v2610
      %2655 = vmatpush1.msra.mxu0 %v2609
      %2656 = vmatprep.subr.mxu0 %v2608
      %2657 = vmatpush1.msra.mxu0 %v2607
      %2658 = vmatprep.subr.mxu0 %v2606
      %2659 = vmatpush1.msra.mxu0 %v2605
      %2660 = vmatprep.subr.mxu0 %v2604
      %2661 = vmatpush1.msra.mxu0 %v2603
      %2662 = vmatprep.subr.mxu0 0.0
      %2663 = vmatpush2.msra.mxu0 0.0
      %2664 = vmatprep.subr.mxu0 0.0
      %2665 = vmatpush2.msra.mxu0 0.0
      %2666 = vmatprep.subr.mxu0 0.0
      %2667 = vmatpush2.msra.mxu0 0.0
      %2668 = vmatprep.subr.mxu0 0.0
      %2669 = vmatpush2.msra.mxu0 0.0
      %2670 = vmatprep.subr.mxu0 0.0
      %2671 = vmatpush2.msra.mxu0 0.0
      %2672 = vmatprep.subr.mxu0 0.0
      %2673 = vmatpush2.msra.mxu0 0.0
      %2674 = vmatprep.subr.mxu0 0.0
      %2675 = vmatpush2.msra.mxu0 0.0
      %2676 = vmatprep.subr.mxu0 0.0
      %2677 = vmatpush2.msra.mxu0 0.0
      %2678 = vmatprep.subr.mxu0 0.0
      %2679 = vmatpush2.msra.mxu0 0.0
      %2680 = vmatprep.subr.mxu0 0.0
      %2681 = vmatpush2.msra.mxu0 0.0
      %2682 = vmatprep.subr.mxu0 0.0
      %2683 = vmatpush2.msra.mxu0 0.0
      %2684 = vmatprep.subr.mxu0 0.0
      %2685 = vmatpush2.msra.mxu0 0.0
      %2686 = vmatprep.subr.mxu0 0.0
      %2687 = vmatpush2.msra.mxu0 0.0
      %2688 = vmatprep.subr.mxu0 0.0
      %2689 = vmatpush2.msra.mxu0 0.0
      %2690 = vmatprep.subr.mxu0 0.0
      %2691 = vmatpush2.msra.mxu0 0.0
      %2692 = vmatprep.subr.mxu0 0.0
      %2693 = vmatpush2.msra.mxu0 0.0
      %2694 = vmatprep.mubr.f32.mxu0 0.0
      %2695 = vmatmul.mubr.f32.gmra.mxu0 %v2628
      %v2696 = vpop.f32.mrf.mxu0
      %v2697 = vadd.f32 %v2625, %v2696
      %v2698 = vpop.f32.mrf.mxu0
      %v2699 = vadd.f32 %v2625, %v2698
      %2700 = vdwg.mxu0
      %2703 = vrot.lane.b32.xlu0 %v2229, 17
      %v2704 = vpop.permute.xlu0 %2703
      %2705 = vrot.lane.b32.xlu0 %v2230, 17
      %v2706 = vpop.permute.xlu0 %2705
      %v2707 = vsel %vm749, %v2704, %v2706
      %2711 = vst.msk [vmem:[#allocation3] sm:$0xf] %vm1352, %v2704
      %2712 = vst [vmem:[#allocation3 + $0x8] sm:$0xf] %v2707
      %2713 = vst.msk [vmem:[#allocation3 + $0x10] sm:$0xf] %vm751, %v2706
      %v2716 = vrot.slane %v2697, 4
      %v2717 = vrot.slane %v2699, 4
      %2718 = vrot.lane.b32.xlu0 %v2716, 17
      %v2719 = vpop.permute.xlu0 %2718
      %2720 = vrot.lane.b32.xlu0 %v2717, 17
      %v2721 = vpop.permute.xlu0 %2720
      %v2722 = vsel %vm749, %v2719, %v2721
      %vm2726 = vcmask 1047692
      %2727 = vst.msk [vmem:[#allocation3] sm:$0xf0] %vm2726, %v2719
      %2728 = vst [vmem:[#allocation3 + $0x8] sm:$0xf0] %v2722
      %vm2729 = vcmask 138244
      %2730 = vst.msk [vmem:[#allocation3 + $0x10] sm:$0xf0] %vm2729, %v2721
      %2731 = vst.msk [vmem:[#allocation3 + $0x18] sm:$0xf] %vm1352, %v2719
      %2732 = vst [vmem:[#allocation3 + $0x20] sm:$0xf] %v2722
      %2733 = vst.msk [vmem:[#allocation3 + $0x28] sm:$0xf] %vm751, %v2721
      %v2734 = vld [vmem:[#allocation3] sm:$0xff]
      %v2735 = vld [vmem:[#allocation3 + $0x8] sm:$0xff]
      %v2736 = vld [vmem:[#allocation3 + $0x18] sm:$0xf]
      %v2737 = vld [vmem:[#allocation3 + $0x20] sm:$0xf]
      %v2738 = vld [vmem:[%s6] ss:$2 sm:$0x3]
      %v2740 = vlaneseq
      %v2741 = vshrl.u32 %v2740, 7
      %v2742 = vsub.s32 0, %v2741
      %v2743 = vrot.slane %v2738, %v2742
      %v2744 = vlaneseq
      %v2745 = vshrl.u32 %v2744, 7
      %v2746 = vsub.s32 1, %v2745
      %v2747 = vrot.slane %v2738, %v2746
      %v2750 = vmul.f32 %v2734, %v2743
      %v2751 = vmul.f32 %v2735, %v2747
      %v2752 = vmul.f32 %v2736, %v2743
      %v2753 = vmul.f32 %v2737, %v2747
      %2754 = vst [vmem:[#allocation4] sm:$0xff] %v2750
      %2755 = vst [vmem:[#allocation4 + $0x8] sm:$0xff] %v2751
      %2756 = vst [vmem:[#allocation4 + $0x10] sm:$0xf] %v2752
      %2757 = vst [vmem:[#allocation4 + $0x18] sm:$0xf] %v2753
      %v2758 = vld [vmem:[#allocation3] sm:$0xff]
      %v2759 = vld [vmem:[#allocation3 + $0x8] sm:$0xff]
      %v2760 = vld [vmem:[#allocation3 + $0x10] sm:$0xff]
      %v2761 = vld [vmem:[#allocation3 + $0x18] sm:$0xf]
      %v2762 = vld [vmem:[#allocation3 + $0x20] sm:$0xf]
      %v2763 = vld [vmem:[#allocation3 + $0x28] sm:$0xf]
      %v2770 = vrot.slane %v2758, 4
      %v2771 = vrot.slane %v2759, 4
      %v2772 = vrot.slane %v2760, 4
      %v2773 = vrot.slane %v2761, 4
      %v2774 = vsel %vm970, %v2770, %v2773
      %v2775 = vrot.slane %v2762, 4
      %v2776 = vsel %vm970, %v2771, %v2775
      %v2777 = vrot.slane %v2763, 4
      %v2778 = vsel %vm970, %v2772, %v2777
      %2779 = vrot.lane.b32.xlu0 %v2770, 127
      %v2780 = vpop.permute.xlu0 %2779
      %2781 = vrot.lane.b32.xlu0 %v2771, 127
      %v2782 = vpop.permute.xlu0 %2781
      %2783 = vrot.lane.b32.xlu0 %v2772, 127
      %v2784 = vpop.permute.xlu0 %2783
      %2785 = vrot.lane.b32.xlu0 %v2774, 127
      %v2786 = vpop.permute.xlu0 %2785
      %2787 = vrot.lane.b32.xlu0 %v2776, 127
      %v2788 = vpop.permute.xlu0 %2787
      %2789 = vrot.lane.b32.xlu0 %v2778, 127
      %v2790 = vpop.permute.xlu0 %2789
      %v2791 = vsel %vm1389, %v2780, %v2782
      %v2792 = vsel %vm1389, %v2782, %v2784
      %v2793 = vsel %vm1389, %v2786, %v2788
      %v2794 = vsel %vm1389, %v2788, %v2790
      %2799 = vst [vmem:[#allocation4 + $0x10] sm:$0xf0] %v2791
      %2800 = vst [vmem:[#allocation4 + $0x18] sm:$0xf0] %v2792
      %2801 = vst [vmem:[#allocation4 + $0x20] sm:$0xff] %v2793
      %2802 = vst [vmem:[#allocation4 + $0x28] sm:$0xff] %v2794
      %v2803 = vld [vmem:[#allocation3] sm:$0xff]
      %v2804 = vld [vmem:[#allocation3 + $0x8] sm:$0xff]
      %v2805 = vld [vmem:[#allocation3 + $0x10] sm:$0xff]
      %v2806 = vld [vmem:[#allocation3 + $0x18] sm:$0xf]
      %v2807 = vld [vmem:[#allocation3 + $0x20] sm:$0xf]
      %v2808 = vld [vmem:[#allocation3 + $0x28] sm:$0xf]
      %v2809 = vld [vmem:[%s1399] ss:$2 sm:$0x3]
      %v2811 = vlaneseq
      %v2812 = vshrl.u32 %v2811, 7
      %v2813 = vsub.s32 0, %v2812
      %v2814 = vrot.slane %v2809, %v2813
      %v2815 = vlaneseq
      %v2816 = vshrl.u32 %v2815, 7
      %v2817 = vsub.s32 1, %v2816
      %v2818 = vrot.slane %v2809, %v2817
      %2819 = vrot.lane.b32.xlu0 %v2814, 2
      %v2820 = vpop.permute.xlu0 %2819
      %2821 = vrot.lane.b32.xlu0 %v2818, 2
      %v2822 = vpop.permute.xlu0 %2821
      %v2823 = vsel %vm1414, %v2820, %v2822
      %v2827 = vmul.f32 %v2803, %v2820
      %v2828 = vmul.f32 %v2804, %v2823
      %v2829 = vmul.f32 %v2805, %v2822
      %v2830 = vmul.f32 %v2806, %v2820
      %v2831 = vmul.f32 %v2807, %v2823
      %v2832 = vmul.f32 %v2808, %v2822
      %2839 = vrot.lane.b32.xlu0 %v2827, 126
      %v2840 = vpop.permute.xlu0 %2839
      %2841 = vrot.lane.b32.xlu0 %v2828, 126
      %v2842 = vpop.permute.xlu0 %2841
      %2843 = vrot.lane.b32.xlu0 %v2829, 126
      %v2844 = vpop.permute.xlu0 %2843
      %2845 = vrot.lane.b32.xlu0 %v2830, 126
      %v2846 = vpop.permute.xlu0 %2845
      %2847 = vrot.lane.b32.xlu0 %v2831, 126
      %v2848 = vpop.permute.xlu0 %2847
      %2849 = vrot.lane.b32.xlu0 %v2832, 126
      %v2850 = vpop.permute.xlu0 %2849
      %v2851 = vsel %vm1431, %v2840, %v2842
      %v2852 = vsel %vm1431, %v2842, %v2844
      %v2853 = vsel %vm1431, %v2846, %v2848
      %v2854 = vsel %vm1431, %v2848, %v2850
      %2859 = vst [vmem:[#allocation4 + $0x30] sm:$0xff] %v2851
      %2860 = vst [vmem:[#allocation4 + $0x38] sm:$0xff] %v2852
      %2861 = vst [vmem:[#allocation4 + $0x40] sm:$0xf] %v2853
      %2862 = vst [vmem:[#allocation4 + $0x48] sm:$0xf] %v2854
      %v2863 = vld [vmem:[#allocation3] sm:$0xff]
      %v2864 = vld [vmem:[#allocation3 + $0x8] sm:$0xff]
      %v2865 = vld [vmem:[#allocation3 + $0x10] sm:$0xff]
      %v2866 = vld [vmem:[#allocation3 + $0x18] sm:$0xf]
      %v2867 = vld [vmem:[#allocation3 + $0x20] sm:$0xf]
      %v2868 = vld [vmem:[#allocation3 + $0x28] sm:$0xf]
      %v2869 = vld [vmem:[%s6] ss:$2 sm:$0x3]
      %v2871 = vlaneseq
      %v2872 = vshrl.u32 %v2871, 7
      %v2873 = vsub.s32 0, %v2872
      %v2874 = vrot.slane %v2869, %v2873
      %v2875 = vlaneseq
      %v2876 = vshrl.u32 %v2875, 7
      %v2877 = vsub.s32 1, %v2876
      %v2878 = vrot.slane %v2869, %v2877
      %2879 = vrot.lane.b32.xlu0 %v2874, 16
      %v2880 = vpop.permute.xlu0 %2879
      %2881 = vrot.lane.b32.xlu0 %v2878, 16
      %v2882 = vpop.permute.xlu0 %2881
      %v2883 = vsel %vm762, %v2880, %v2882
      %v2887 = vmul.f32 %v2863, %v2880
      %v2888 = vmul.f32 %v2864, %v2883
      %v2889 = vmul.f32 %v2865, %v2882
      %v2890 = vmul.f32 %v2866, %v2880
      %v2891 = vmul.f32 %v2867, %v2883
      %v2892 = vmul.f32 %v2868, %v2882
      %v2899 = vrot.slane %v2887, 4
      %v2900 = vrot.slane %v2888, 4
      %v2901 = vrot.slane %v2889, 4
      %v2902 = vrot.slane %v2890, 4
      %v2903 = vsel %vm970, %v2899, %v2902
      %v2904 = vrot.slane %v2891, 4
      %v2905 = vsel %vm970, %v2900, %v2904
      %v2906 = vrot.slane %v2892, 4
      %v2907 = vsel %vm970, %v2901, %v2906
      %2908 = vrot.lane.b32.xlu0 %v2899, 112
      %v2909 = vpop.permute.xlu0 %2908
      %2910 = vrot.lane.b32.xlu0 %v2900, 112
      %v2911 = vpop.permute.xlu0 %2910
      %2912 = vrot.lane.b32.xlu0 %v2901, 112
      %v2913 = vpop.permute.xlu0 %2912
      %2914 = vrot.lane.b32.xlu0 %v2903, 112
      %v2915 = vpop.permute.xlu0 %2914
      %2916 = vrot.lane.b32.xlu0 %v2905, 112
      %v2917 = vpop.permute.xlu0 %2916
      %2918 = vrot.lane.b32.xlu0 %v2907, 112
      %v2919 = vpop.permute.xlu0 %2918
      %v2920 = vsel %vm1474, %v2909, %v2911
      %v2921 = vsel %vm1474, %v2911, %v2913
      %v2922 = vsel %vm1474, %v2915, %v2917
      %v2923 = vsel %vm1474, %v2917, %v2919
      %2928 = vst [vmem:[#allocation4 + $0x40] sm:$0xf0] %v2920
      %2929 = vst [vmem:[#allocation4 + $0x48] sm:$0xf0] %v2921
      %2930 = vst [vmem:[#allocation4 + $0x50] sm:$0xff] %v2922
      %2931 = vst [vmem:[#allocation4 + $0x58] sm:$0xff] %v2923
      %v2932 = vld [vmem:[#allocation3] sm:$0xff]
      %v2933 = vld [vmem:[#allocation3 + $0x8] sm:$0xff]
      %v2934 = vld [vmem:[#allocation3 + $0x10] sm:$0xff]
      %v2935 = vld [vmem:[#allocation3 + $0x18] sm:$0xf]
      %v2936 = vld [vmem:[#allocation3 + $0x20] sm:$0xf]
      %v2937 = vld [vmem:[#allocation3 + $0x28] sm:$0xf]
      %2944 = vrot.lane.b32.xlu0 %v2932, 111
      %v2945 = vpop.permute.xlu0 %2944
      %2946 = vrot.lane.b32.xlu0 %v2933, 111
      %v2947 = vpop.permute.xlu0 %2946
      %2948 = vrot.lane.b32.xlu0 %v2934, 111
      %v2949 = vpop.permute.xlu0 %2948
      %2950 = vrot.lane.b32.xlu0 %v2935, 111
      %v2951 = vpop.permute.xlu0 %2950
      %2952 = vrot.lane.b32.xlu0 %v2936, 111
      %v2953 = vpop.permute.xlu0 %2952
      %2954 = vrot.lane.b32.xlu0 %v2937, 111
      %v2955 = vpop.permute.xlu0 %2954
      %v2956 = vsel %vm1493, %v2945, %v2947
      %v2957 = vsel %vm1493, %v2947, %v2949
      %v2958 = vsel %vm1493, %v2951, %v2953
      %v2959 = vsel %vm1493, %v2953, %v2955
      %2964 = vst [vmem:[#allocation4 + $0x60] sm:$0xff] %v2956
      %2965 = vst [vmem:[#allocation4 + $0x68] sm:$0xff] %v2957
      %2966 = vst [vmem:[#allocation4 + $0x70] sm:$0xf] %v2958
      %2967 = vst [vmem:[#allocation4 + $0x78] sm:$0xf] %v2959
      %v2968 = vld [vmem:[#allocation3] sm:$0xff]
      %v2969 = vld [vmem:[#allocation3 + $0x8] sm:$0xff]
      %v2970 = vld [vmem:[#allocation3 + $0x10] sm:$0xff]
      %v2971 = vld [vmem:[#allocation3 + $0x18] sm:$0xf]
      %v2972 = vld [vmem:[#allocation3 + $0x20] sm:$0xf]
      %v2973 = vld [vmem:[#allocation3 + $0x28] sm:$0xf]
      %v2974 = vld [vmem:[%s1399] ss:$2 sm:$0x3]
      %v2976 = vlaneseq
      %v2977 = vshrl.u32 %v2976, 7
      %v2978 = vsub.s32 0, %v2977
      %v2979 = vrot.slane %v2974, %v2978
      %v2980 = vlaneseq
      %v2981 = vshrl.u32 %v2980, 7
      %v2982 = vsub.s32 1, %v2981
      %v2983 = vrot.slane %v2974, %v2982
      %2984 = vrot.lane.b32.xlu0 %v2979, 18
      %v2985 = vpop.permute.xlu0 %2984
      %2986 = vrot.lane.b32.xlu0 %v2983, 18
      %v2987 = vpop.permute.xlu0 %2986
      %v2988 = vsel %vm1517, %v2985, %v2987
      %v2992 = vmul.f32 %v2968, %v2985
      %v2993 = vmul.f32 %v2969, %v2988
      %v2994 = vmul.f32 %v2970, %v2987
      %v2995 = vmul.f32 %v2971, %v2985
      %v2996 = vmul.f32 %v2972, %v2988
      %v2997 = vmul.f32 %v2973, %v2987
      %v3004 = vrot.slane %v2992, 4
      %v3005 = vrot.slane %v2993, 4
      %v3006 = vrot.slane %v2994, 4
      %v3007 = vrot.slane %v2995, 4
      %v3008 = vsel %vm970, %v3004, %v3007
      %v3009 = vrot.slane %v2996, 4
      %v3010 = vsel %vm970, %v3005, %v3009
      %v3011 = vrot.slane %v2997, 4
      %v3012 = vsel %vm970, %v3006, %v3011
      %3013 = vrot.lane.b32.xlu0 %v3004, 110
      %v3014 = vpop.permute.xlu0 %3013
      %3015 = vrot.lane.b32.xlu0 %v3005, 110
      %v3016 = vpop.permute.xlu0 %3015
      %3017 = vrot.lane.b32.xlu0 %v3006, 110
      %v3018 = vpop.permute.xlu0 %3017
      %3019 = vrot.lane.b32.xlu0 %v3008, 110
      %v3020 = vpop.permute.xlu0 %3019
      %3021 = vrot.lane.b32.xlu0 %v3010, 110
      %v3022 = vpop.permute.xlu0 %3021
      %3023 = vrot.lane.b32.xlu0 %v3012, 110
      %v3024 = vpop.permute.xlu0 %3023
      %v3025 = vsel %vm1537, %v3014, %v3016
      %v3026 = vsel %vm1537, %v3016, %v3018
      %v3027 = vsel %vm1537, %v3020, %v3022
      %v3028 = vsel %vm1537, %v3022, %v3024
      %3033 = vst [vmem:[#allocation4 + $0x70] sm:$0xf0] %v3025
      %3034 = vst [vmem:[#allocation4 + $0x78] sm:$0xf0] %v3026
      %3035 = vst [vmem:[#allocation4 + $0x80] sm:$0xff] %v3027
      %3036 = vst [vmem:[#allocation4 + $0x88] sm:$0xff] %v3028
      %v3037 = vld [vmem:[#allocation3] sm:$0xff]
      %v3038 = vld [vmem:[#allocation3 + $0x8] sm:$0xff]
      %v3039 = vld [vmem:[#allocation3 + $0x10] sm:$0xff]
      %v3040 = vld [vmem:[#allocation3 + $0x18] sm:$0xf]
      %v3041 = vld [vmem:[#allocation3 + $0x20] sm:$0xf]
      %v3042 = vld [vmem:[#allocation3 + $0x28] sm:$0xf]
      %v3043 = vld [vmem:[%s6] ss:$2 sm:$0x3]
      %v3045 = vlaneseq
      %v3046 = vshrl.u32 %v3045, 7
      %v3047 = vsub.s32 0, %v3046
      %v3048 = vrot.slane %v3043, %v3047
      %v3049 = vlaneseq
      %v3050 = vshrl.u32 %v3049, 7
      %v3051 = vsub.s32 1, %v3050
      %v3052 = vrot.slane %v3043, %v3051
      %3053 = vrot.lane.b32.xlu0 %v3048, 32
      %v3054 = vpop.permute.xlu0 %3053
      %3055 = vrot.lane.b32.xlu0 %v3052, 32
      %v3056 = vpop.permute.xlu0 %3055
      %v3057 = vsel %vm1561, %v3054, %v3056
      %v3061 = vmul.f32 %v3037, %v3054
      %v3062 = vmul.f32 %v3038, %v3057
      %v3063 = vmul.f32 %v3039, %v3056
      %v3064 = vmul.f32 %v3040, %v3054
      %v3065 = vmul.f32 %v3041, %v3057
      %v3066 = vmul.f32 %v3042, %v3056
      %3073 = vrot.lane.b32.xlu0 %v3061, 96
      %v3074 = vpop.permute.xlu0 %3073
      %3075 = vrot.lane.b32.xlu0 %v3062, 96
      %v3076 = vpop.permute.xlu0 %3075
      %3077 = vrot.lane.b32.xlu0 %v3063, 96
      %v3078 = vpop.permute.xlu0 %3077
      %3079 = vrot.lane.b32.xlu0 %v3064, 96
      %v3080 = vpop.permute.xlu0 %3079
      %3081 = vrot.lane.b32.xlu0 %v3065, 96
      %v3082 = vpop.permute.xlu0 %3081
      %3083 = vrot.lane.b32.xlu0 %v3066, 96
      %v3084 = vpop.permute.xlu0 %3083
      %v3085 = vsel %vm1578, %v3074, %v3076
      %v3086 = vsel %vm1578, %v3076, %v3078
      %v3087 = vsel %vm1578, %v3080, %v3082
      %v3088 = vsel %vm1578, %v3082, %v3084
      %3093 = vst [vmem:[#allocation4 + $0x90] sm:$0xff] %v3085
      %3094 = vst [vmem:[#allocation4 + $0x98] sm:$0xff] %v3086
      %3095 = vst [vmem:[#allocation4 + $0xa0] sm:$0xf] %v3087
      %3096 = vst [vmem:[#allocation4 + $0xa8] sm:$0xf] %v3088
      %v3097 = vld [vmem:[#allocation3] sm:$0xff]
      %v3098 = vld [vmem:[#allocation3 + $0x8] sm:$0xff]
      %v3099 = vld [vmem:[#allocation3 + $0x10] sm:$0xff]
      %v3100 = vld [vmem:[#allocation3 + $0x18] sm:$0xf]
      %v3101 = vld [vmem:[#allocation3 + $0x20] sm:$0xf]
      %v3102 = vld [vmem:[#allocation3 + $0x28] sm:$0xf]
      %v3109 = vrot.slane %v3097, 4
      %v3110 = vrot.slane %v3098, 4
      %v3111 = vrot.slane %v3099, 4
      %v3112 = vrot.slane %v3100, 4
      %v3113 = vsel %vm970, %v3109, %v3112
      %v3114 = vrot.slane %v3101, 4
      %v3115 = vsel %vm970, %v3110, %v3114
      %v3116 = vrot.slane %v3102, 4
      %v3117 = vsel %vm970, %v3111, %v3116
      %3118 = vrot.lane.b32.xlu0 %v3109, 95
      %v3119 = vpop.permute.xlu0 %3118
      %3120 = vrot.lane.b32.xlu0 %v3110, 95
      %v3121 = vpop.permute.xlu0 %3120
      %3122 = vrot.lane.b32.xlu0 %v3111, 95
      %v3123 = vpop.permute.xlu0 %3122
      %3124 = vrot.lane.b32.xlu0 %v3113, 95
      %v3125 = vpop.permute.xlu0 %3124
      %3126 = vrot.lane.b32.xlu0 %v3115, 95
      %v3127 = vpop.permute.xlu0 %3126
      %3128 = vrot.lane.b32.xlu0 %v3117, 95
      %v3129 = vpop.permute.xlu0 %3128
      %v3130 = vsel %vm1600, %v3119, %v3121
      %v3131 = vsel %vm1600, %v3121, %v3123
      %v3132 = vsel %vm1600, %v3125, %v3127
      %v3133 = vsel %vm1600, %v3127, %v3129
      %3138 = vst [vmem:[#allocation4 + $0xa0] sm:$0xf0] %v3130
      %3139 = vst [vmem:[#allocation4 + $0xa8] sm:$0xf0] %v3131
      %3140 = vst [vmem:[#allocation4 + $0xb0] sm:$0xff] %v3132
      %3141 = vst [vmem:[#allocation4 + $0xb8] sm:$0xff] %v3133
      %v3142 = vld [vmem:[#allocation3] sm:$0xff]
      %v3143 = vld [vmem:[#allocation3 + $0x8] sm:$0xff]
      %v3144 = vld [vmem:[#allocation3 + $0x10] sm:$0xff]
      %v3145 = vld [vmem:[#allocation3 + $0x18] sm:$0xf]
      %v3146 = vld [vmem:[#allocation3 + $0x20] sm:$0xf]
      %v3147 = vld [vmem:[#allocation3 + $0x28] sm:$0xf]
      %v3148 = vld [vmem:[%s1399] ss:$2 sm:$0x3]
      %v3150 = vlaneseq
      %v3151 = vshrl.u32 %v3150, 7
      %v3152 = vsub.s32 0, %v3151
      %v3153 = vrot.slane %v3148, %v3152
      %v3154 = vlaneseq
      %v3155 = vshrl.u32 %v3154, 7
      %v3156 = vsub.s32 1, %v3155
      %v3157 = vrot.slane %v3148, %v3156
      %3158 = vrot.lane.b32.xlu0 %v3153, 34
      %v3159 = vpop.permute.xlu0 %3158
      %3160 = vrot.lane.b32.xlu0 %v3157, 34
      %v3161 = vpop.permute.xlu0 %3160
      %v3162 = vsel %vm1624, %v3159, %v3161
      %v3166 = vmul.f32 %v3142, %v3159
      %v3167 = vmul.f32 %v3143, %v3162
      %v3168 = vmul.f32 %v3144, %v3161
      %v3169 = vmul.f32 %v3145, %v3159
      %v3170 = vmul.f32 %v3146, %v3162
      %v3171 = vmul.f32 %v3147, %v3161
      %3178 = vrot.lane.b32.xlu0 %v3166, 94
      %v3179 = vpop.permute.xlu0 %3178
      %3180 = vrot.lane.b32.xlu0 %v3167, 94
      %v3181 = vpop.permute.xlu0 %3180
      %3182 = vrot.lane.b32.xlu0 %v3168, 94
      %v3183 = vpop.permute.xlu0 %3182
      %3184 = vrot.lane.b32.xlu0 %v3169, 94
      %v3185 = vpop.permute.xlu0 %3184
      %3186 = vrot.lane.b32.xlu0 %v3170, 94
      %v3187 = vpop.permute.xlu0 %3186
      %3188 = vrot.lane.b32.xlu0 %v3171, 94
      %v3189 = vpop.permute.xlu0 %3188
      %v3190 = vsel %vm1641, %v3179, %v3181
      %v3191 = vsel %vm1641, %v3181, %v3183
      %v3192 = vsel %vm1641, %v3185, %v3187
      %v3193 = vsel %vm1641, %v3187, %v3189
      %3198 = vst [vmem:[#allocation4 + $0xc0] sm:$0xff] %v3190
      %3199 = vst [vmem:[#allocation4 + $0xc8] sm:$0xff] %v3191
      %3200 = vst [vmem:[#allocation4 + $0xd0] sm:$0xf] %v3192
      %3201 = vst [vmem:[#allocation4 + $0xd8] sm:$0xf] %v3193
      %v3202 = vld [vmem:[%s17] sm:$0xff]
      %v3203 = vld [vmem:[%s17 + $0x8] sm:$0xf]
      %v3204 = vld [vmem:[#allocation4] sm:$0xff]
      %v3205 = vld [vmem:[#allocation4 + $0x8] sm:$0xff]
      %v3206 = vld [vmem:[#allocation4 + $0x10] sm:$0xff]
      %v3207 = vld [vmem:[#allocation4 + $0x18] sm:$0xff]
      %v3208 = vld [vmem:[#allocation4 + $0x20] sm:$0xff]
      %v3209 = vld [vmem:[#allocation4 + $0x28] sm:$0xff]
      %v3210 = vld [vmem:[#allocation4 + $0x30] sm:$0xff]
      %v3211 = vld [vmem:[#allocation4 + $0x38] sm:$0xff]
      %v3212 = vld [vmem:[#allocation4 + $0x40] sm:$0xff]
      %v3213 = vld [vmem:[#allocation4 + $0x48] sm:$0xff]
      %v3214 = vld [vmem:[#allocation4 + $0x50] sm:$0xff]
      %v3215 = vld [vmem:[#allocation4 + $0x58] sm:$0xff]
      %v3216 = vld [vmem:[#allocation4 + $0x60] sm:$0xff]
      %v3217 = vld [vmem:[#allocation4 + $0x68] sm:$0xff]
      %v3218 = vld [vmem:[#allocation4 + $0x70] sm:$0xff]
      %v3219 = vld [vmem:[#allocation4 + $0x78] sm:$0xff]
      %v3220 = vld [vmem:[#allocation4 + $0x80] sm:$0xff]
      %v3221 = vld [vmem:[#allocation4 + $0x88] sm:$0xff]
      %v3222 = vld [vmem:[#allocation4 + $0x90] sm:$0xff]
      %v3223 = vld [vmem:[#allocation4 + $0x98] sm:$0xff]
      %v3224 = vld [vmem:[#allocation4 + $0xa0] sm:$0xff]
      %v3225 = vld [vmem:[#allocation4 + $0xa8] sm:$0xff]
      %v3226 = vld [vmem:[#allocation4 + $0xb0] sm:$0xff]
      %v3227 = vld [vmem:[#allocation4 + $0xb8] sm:$0xff]
      %v3228 = vld [vmem:[#allocation4 + $0xc0] sm:$0xff]
      %v3229 = vld [vmem:[#allocation4 + $0xc8] sm:$0xff]
      %v3230 = vld [vmem:[#allocation4 + $0xd0] sm:$0xf]
      %v3231 = vld [vmem:[#allocation4 + $0xd8] sm:$0xf]
      %v3232 = vld [vmem:[%s18] sm:$0xff]
      %v3233 = vld [vmem:[%s18 + $0x8] sm:$0xf]
      %3235 = vset.pattern.permute.xlu0 0
      %3236 = vperm.xlu0 %3235, %v3232
      %v3237 = vpop.permute.xlu0 %3236
      %3240 = vset.pattern.permute.xlu0 0
      %3241 = vperm.xlu0 %3240, %v3233
      %v3242 = vpop.permute.xlu0 %3241
      %vm3244 = vcmask 883712
      %v3246 = vsel %vm3244, %v3202, 0
      %v3249 = vsel %vm3244, %v3203, 0
      %v3252 = vsel %vm970, %v3230, 0
      %v3255 = vsel %vm970, %v3231, 0
      %3257 = vmatprep.subr.mxu0 0.0
      %3258 = vmatpush1.msra.mxu0 0.0
      %3259 = vmatprep.subr.mxu0 0.0
      %3260 = vmatpush1.msra.mxu0 0.0
      %3261 = vmatprep.subr.mxu0 %v3255
      %3262 = vmatpush1.msra.mxu0 %v3252
      %3263 = vmatprep.subr.mxu0 %v3229
      %3264 = vmatpush1.msra.mxu0 %v3228
      %3265 = vmatprep.subr.mxu0 %v3227
      %3266 = vmatpush1.msra.mxu0 %v3226
      %3267 = vmatprep.subr.mxu0 %v3225
      %3268 = vmatpush1.msra.mxu0 %v3224
      %3269 = vmatprep.subr.mxu0 %v3223
      %3270 = vmatpush1.msra.mxu0 %v3222
      %3271 = vmatprep.subr.mxu0 %v3221
      %3272 = vmatpush1.msra.mxu0 %v3220
      %3273 = vmatprep.subr.mxu0 %v3219
      %3274 = vmatpush1.msra.mxu0 %v3218
      %3275 = vmatprep.subr.mxu0 %v3217
      %3276 = vmatpush1.msra.mxu0 %v3216
      %3277 = vmatprep.subr.mxu0 %v3215
      %3278 = vmatpush1.msra.mxu0 %v3214
      %3279 = vmatprep.subr.mxu0 %v3213
      %3280 = vmatpush1.msra.mxu0 %v3212
      %3281 = vmatprep.subr.mxu0 %v3211
      %3282 = vmatpush1.msra.mxu0 %v3210
      %3283 = vmatprep.subr.mxu0 %v3209
      %3284 = vmatpush1.msra.mxu0 %v3208
      %3285 = vmatprep.subr.mxu0 %v3207
      %3286 = vmatpush1.msra.mxu0 %v3206
      %3287 = vmatprep.subr.mxu0 %v3205
      %3288 = vmatpush1.msra.mxu0 %v3204
      %3289 = vmatprep.subr.mxu0 0.0
      %3290 = vmatpush2.msra.mxu0 0.0
      %3291 = vmatprep.subr.mxu0 0.0
      %3292 = vmatpush2.msra.mxu0 0.0
      %3293 = vmatprep.subr.mxu0 0.0
      %3294 = vmatpush2.msra.mxu0 0.0
      %3295 = vmatprep.subr.mxu0 0.0
      %3296 = vmatpush2.msra.mxu0 0.0
      %3297 = vmatprep.subr.mxu0 0.0
      %3298 = vmatpush2.msra.mxu0 0.0
      %3299 = vmatprep.subr.mxu0 0.0
      %3300 = vmatpush2.msra.mxu0 0.0
      %3301 = vmatprep.subr.mxu0 0.0
      %3302 = vmatpush2.msra.mxu0 0.0
      %3303 = vmatprep.subr.mxu0 0.0
      %3304 = vmatpush2.msra.mxu0 0.0
      %3305 = vmatprep.subr.mxu0 0.0
      %3306 = vmatpush2.msra.mxu0 0.0
      %3307 = vmatprep.subr.mxu0 0.0
      %3308 = vmatpush2.msra.mxu0 0.0
      %3309 = vmatprep.subr.mxu0 0.0
      %3310 = vmatpush2.msra.mxu0 0.0
      %3311 = vmatprep.subr.mxu0 0.0
      %3312 = vmatpush2.msra.mxu0 0.0
      %3313 = vmatprep.subr.mxu0 0.0
      %3314 = vmatpush2.msra.mxu0 0.0
      %3315 = vmatprep.subr.mxu0 0.0
      %3316 = vmatpush2.msra.mxu0 0.0
      %3317 = vmatprep.subr.mxu0 0.0
      %3318 = vmatpush2.msra.mxu0 0.0
      %3319 = vmatprep.subr.mxu0 0.0
      %3320 = vmatpush2.msra.mxu0 0.0
      %3321 = vmatprep.mubr.f32.mxu0 0.0
      %3322 = vmatmul.mubr.f32.gmra.mxu0 %v3246
      %v3323 = vpop.f32.mrf.mxu0
      %v3324 = vadd.f32 %v3237, %v3323
      %v3325 = vpop.f32.mrf.mxu0
      %v3326 = vadd.f32 %v3237, %v3325
      %3327 = vmatprep.mubr.f32.mxu0 0.0
      %3328 = vmatmul.mubr.f32.gmra.mxu0 %v3249
      %v3329 = vpop.f32.mrf.mxu0
      %v3330 = vadd.f32 %v3242, %v3329
      %v3331 = vpop.f32.mrf.mxu0
      %v3332 = vadd.f32 %v3242, %v3331
      %3333 = vdwg.mxu0
      %3338 = vrot.lane.b32.xlu0 %v3324, 17
      %v3339 = vpop.permute.xlu0 %3338
      %3340 = vrot.lane.b32.xlu0 %v3326, 17
      %v3341 = vpop.permute.xlu0 %3340
      %3342 = vrot.lane.b32.xlu0 %v3330, 17
      %v3343 = vpop.permute.xlu0 %3342
      %3344 = vrot.lane.b32.xlu0 %v3332, 17
      %v3345 = vpop.permute.xlu0 %3344
      %v3346 = vsel %vm749, %v3339, %v3341
      %v3347 = vsel %vm749, %v3343, %v3345
      %3354 = vst.msk [vmem:[#allocation3] sm:$0xff] %vm2331, %v3339
      %3355 = vst [vmem:[#allocation3 + $0x8] sm:$0xff] %v3346
      %3356 = vst.msk [vmem:[#allocation3 + $0x10] sm:$0xff] %vm749, %v3341
      %3357 = vst.msk [vmem:[#allocation3 + $0x18] sm:$0xf] %vm1352, %v3343
      %3358 = vst [vmem:[#allocation3 + $0x20] sm:$0xf] %v3347
      %3359 = vst.msk [vmem:[#allocation3 + $0x28] sm:$0xf] %vm751, %v3345
      %v3360 = vld [vmem:[#allocation3] sm:$0xff]
      %v3361 = vld [vmem:[#allocation3 + $0x8] sm:$0xff]
      %v3362 = vld [vmem:[#allocation3 + $0x18] sm:$0xf]
      %v3363 = vld [vmem:[#allocation3 + $0x20] sm:$0xf]
      %v3364 = vld [vmem:[%s6] ss:$2 sm:$0x3]
      %v3366 = vlaneseq
      %v3367 = vshrl.u32 %v3366, 7
      %v3368 = vsub.s32 0, %v3367
      %v3369 = vrot.slane %v3364, %v3368
      %v3370 = vlaneseq
      %v3371 = vshrl.u32 %v3370, 7
      %v3372 = vsub.s32 1, %v3371
      %v3373 = vrot.slane %v3364, %v3372
      %v3376 = vmul.f32 %v3360, %v3369
      %v3377 = vmul.f32 %v3361, %v3373
      %v3378 = vmul.f32 %v3362, %v3369
      %v3379 = vmul.f32 %v3363, %v3373
      %3380 = vst [vmem:[#allocation4] sm:$0xff] %v3376
      %3381 = vst [vmem:[#allocation4 + $0x8] sm:$0xff] %v3377
      %3382 = vst [vmem:[#allocation4 + $0x10] sm:$0xf] %v3378
      %3383 = vst [vmem:[#allocation4 + $0x18] sm:$0xf] %v3379
      %v3384 = vld [vmem:[#allocation3] sm:$0xff]
      %v3385 = vld [vmem:[#allocation3 + $0x8] sm:$0xff]
      %v3386 = vld [vmem:[#allocation3 + $0x10] sm:$0xff]
      %v3387 = vld [vmem:[#allocation3 + $0x18] sm:$0xf]
      %v3388 = vld [vmem:[#allocation3 + $0x20] sm:$0xf]
      %v3389 = vld [vmem:[#allocation3 + $0x28] sm:$0xf]
      %v3396 = vrot.slane %v3384, 4
      %v3397 = vrot.slane %v3385, 4
      %v3398 = vrot.slane %v3386, 4
      %v3399 = vrot.slane %v3387, 4
      %v3400 = vsel %vm970, %v3396, %v3399
      %v3401 = vrot.slane %v3388, 4
      %v3402 = vsel %vm970, %v3397, %v3401
      %v3403 = vrot.slane %v3389, 4
      %v3404 = vsel %vm970, %v3398, %v3403
      %3405 = vrot.lane.b32.xlu0 %v3396, 127
      %v3406 = vpop.permute.xlu0 %3405
      %3407 = vrot.lane.b32.xlu0 %v3397, 127
      %v3408 = vpop.permute.xlu0 %3407
      %3409 = vrot.lane.b32.xlu0 %v3398, 127
      %v3410 = vpop.permute.xlu0 %3409
      %3411 = vrot.lane.b32.xlu0 %v3400, 127
      %v3412 = vpop.permute.xlu0 %3411
      %3413 = vrot.lane.b32.xlu0 %v3402, 127
      %v3414 = vpop.permute.xlu0 %3413
      %3415 = vrot.lane.b32.xlu0 %v3404, 127
      %v3416 = vpop.permute.xlu0 %3415
      %v3417 = vsel %vm1389, %v3406, %v3408
      %v3418 = vsel %vm1389, %v3408, %v3410
      %v3419 = vsel %vm1389, %v3412, %v3414
      %v3420 = vsel %vm1389, %v3414, %v3416
      %3425 = vst [vmem:[#allocation4 + $0x10] sm:$0xf0] %v3417
      %3426 = vst [vmem:[#allocation4 + $0x18] sm:$0xf0] %v3418
      %3427 = vst [vmem:[#allocation4 + $0x20] sm:$0xff] %v3419
      %3428 = vst [vmem:[#allocation4 + $0x28] sm:$0xff] %v3420
      %v3429 = vld [vmem:[#allocation3] sm:$0xff]
      %v3430 = vld [vmem:[#allocation3 + $0x8] sm:$0xff]
      %v3431 = vld [vmem:[#allocation3 + $0x10] sm:$0xff]
      %v3432 = vld [vmem:[#allocation3 + $0x18] sm:$0xf]
      %v3433 = vld [vmem:[#allocation3 + $0x20] sm:$0xf]
      %v3434 = vld [vmem:[#allocation3 + $0x28] sm:$0xf]
      %v3435 = vld [vmem:[%s1399] ss:$2 sm:$0x3]
      %v3437 = vlaneseq
      %v3438 = vshrl.u32 %v3437, 7
      %v3439 = vsub.s32 0, %v3438
      %v3440 = vrot.slane %v3435, %v3439
      %v3441 = vlaneseq
      %v3442 = vshrl.u32 %v3441, 7
      %v3443 = vsub.s32 1, %v3442
      %v3444 = vrot.slane %v3435, %v3443
      %3445 = vrot.lane.b32.xlu0 %v3440, 2
      %v3446 = vpop.permute.xlu0 %3445
      %3447 = vrot.lane.b32.xlu0 %v3444, 2
      %v3448 = vpop.permute.xlu0 %3447
      %v3449 = vsel %vm1414, %v3446, %v3448
      %v3453 = vmul.f32 %v3429, %v3446
      %v3454 = vmul.f32 %v3430, %v3449
      %v3455 = vmul.f32 %v3431, %v3448
      %v3456 = vmul.f32 %v3432, %v3446
      %v3457 = vmul.f32 %v3433, %v3449
      %v3458 = vmul.f32 %v3434, %v3448
      %3465 = vrot.lane.b32.xlu0 %v3453, 126
      %v3466 = vpop.permute.xlu0 %3465
      %3467 = vrot.lane.b32.xlu0 %v3454, 126
      %v3468 = vpop.permute.xlu0 %3467
      %3469 = vrot.lane.b32.xlu0 %v3455, 126
      %v3470 = vpop.permute.xlu0 %3469
      %3471 = vrot.lane.b32.xlu0 %v3456, 126
      %v3472 = vpop.permute.xlu0 %3471
      %3473 = vrot.lane.b32.xlu0 %v3457, 126
      %v3474 = vpop.permute.xlu0 %3473
      %3475 = vrot.lane.b32.xlu0 %v3458, 126
      %v3476 = vpop.permute.xlu0 %3475
      %v3477 = vsel %vm1431, %v3466, %v3468
      %v3478 = vsel %vm1431, %v3468, %v3470
      %v3479 = vsel %vm1431, %v3472, %v3474
      %v3480 = vsel %vm1431, %v3474, %v3476
      %3485 = vst [vmem:[#allocation4 + $0x30] sm:$0xff] %v3477
      %3486 = vst [vmem:[#allocation4 + $0x38] sm:$0xff] %v3478
      %3487 = vst [vmem:[#allocation4 + $0x40] sm:$0xf] %v3479
      %3488 = vst [vmem:[#allocation4 + $0x48] sm:$0xf] %v3480
      %v3489 = vld [vmem:[#allocation3] sm:$0xff]
      %v3490 = vld [vmem:[#allocation3 + $0x8] sm:$0xff]
      %v3491 = vld [vmem:[#allocation3 + $0x10] sm:$0xff]
      %v3492 = vld [vmem:[#allocation3 + $0x18] sm:$0xf]
      %v3493 = vld [vmem:[#allocation3 + $0x20] sm:$0xf]
      %v3494 = vld [vmem:[#allocation3 + $0x28] sm:$0xf]
      %v3495 = vld [vmem:[%s6] ss:$2 sm:$0x3]
      %v3497 = vlaneseq
      %v3498 = vshrl.u32 %v3497, 7
      %v3499 = vsub.s32 0, %v3498
      %v3500 = vrot.slane %v3495, %v3499
      %v3501 = vlaneseq
      %v3502 = vshrl.u32 %v3501, 7
      %v3503 = vsub.s32 1, %v3502
      %v3504 = vrot.slane %v3495, %v3503
      %3505 = vrot.lane.b32.xlu0 %v3500, 16
      %v3506 = vpop.permute.xlu0 %3505
      %3507 = vrot.lane.b32.xlu0 %v3504, 16
      %v3508 = vpop.permute.xlu0 %3507
      %v3509 = vsel %vm762, %v3506, %v3508
      %v3513 = vmul.f32 %v3489, %v3506
      %v3514 = vmul.f32 %v3490, %v3509
      %v3515 = vmul.f32 %v3491, %v3508
      %v3516 = vmul.f32 %v3492, %v3506
      %v3517 = vmul.f32 %v3493, %v3509
      %v3518 = vmul.f32 %v3494, %v3508
      %v3525 = vrot.slane %v3513, 4
      %v3526 = vrot.slane %v3514, 4
      %v3527 = vrot.slane %v3515, 4
      %v3528 = vrot.slane %v3516, 4
      %v3529 = vsel %vm970, %v3525, %v3528
      %v3530 = vrot.slane %v3517, 4
      %v3531 = vsel %vm970, %v3526, %v3530
      %v3532 = vrot.slane %v3518, 4
      %v3533 = vsel %vm970, %v3527, %v3532
      %3534 = vrot.lane.b32.xlu0 %v3525, 112
      %v3535 = vpop.permute.xlu0 %3534
      %3536 = vrot.lane.b32.xlu0 %v3526, 112
      %v3537 = vpop.permute.xlu0 %3536
      %3538 = vrot.lane.b32.xlu0 %v3527, 112
      %v3539 = vpop.permute.xlu0 %3538
      %3540 = vrot.lane.b32.xlu0 %v3529, 112
      %v3541 = vpop.permute.xlu0 %3540
      %3542 = vrot.lane.b32.xlu0 %v3531, 112
      %v3543 = vpop.permute.xlu0 %3542
      %3544 = vrot.lane.b32.xlu0 %v3533, 112
      %v3545 = vpop.permute.xlu0 %3544
      %v3546 = vsel %vm1474, %v3535, %v3537
      %v3547 = vsel %vm1474, %v3537, %v3539
      %v3548 = vsel %vm1474, %v3541, %v3543
      %v3549 = vsel %vm1474, %v3543, %v3545
      %3554 = vst [vmem:[#allocation4 + $0x40] sm:$0xf0] %v3546
      %3555 = vst [vmem:[#allocation4 + $0x48] sm:$0xf0] %v3547
      %3556 = vst [vmem:[#allocation4 + $0x50] sm:$0xff] %v3548
      %3557 = vst [vmem:[#allocation4 + $0x58] sm:$0xff] %v3549
      %v3558 = vld [vmem:[#allocation3] sm:$0xff]
      %v3559 = vld [vmem:[#allocation3 + $0x8] sm:$0xff]
      %v3560 = vld [vmem:[#allocation3 + $0x10] sm:$0xff]
      %v3561 = vld [vmem:[#allocation3 + $0x18] sm:$0xf]
      %v3562 = vld [vmem:[#allocation3 + $0x20] sm:$0xf]
      %v3563 = vld [vmem:[#allocation3 + $0x28] sm:$0xf]
      %3570 = vrot.lane.b32.xlu0 %v3558, 111
      %v3571 = vpop.permute.xlu0 %3570
      %3572 = vrot.lane.b32.xlu0 %v3559, 111
      %v3573 = vpop.permute.xlu0 %3572
      %3574 = vrot.lane.b32.xlu0 %v3560, 111
      %v3575 = vpop.permute.xlu0 %3574
      %3576 = vrot.lane.b32.xlu0 %v3561, 111
      %v3577 = vpop.permute.xlu0 %3576
      %3578 = vrot.lane.b32.xlu0 %v3562, 111
      %v3579 = vpop.permute.xlu0 %3578
      %3580 = vrot.lane.b32.xlu0 %v3563, 111
      %v3581 = vpop.permute.xlu0 %3580
      %v3582 = vsel %vm1493, %v3571, %v3573
      %v3583 = vsel %vm1493, %v3573, %v3575
      %v3584 = vsel %vm1493, %v3577, %v3579
      %v3585 = vsel %vm1493, %v3579, %v3581
      %3590 = vst [vmem:[#allocation4 + $0x60] sm:$0xff] %v3582
      %3591 = vst [vmem:[#allocation4 + $0x68] sm:$0xff] %v3583
      %3592 = vst [vmem:[#allocation4 + $0x70] sm:$0xf] %v3584
      %3593 = vst [vmem:[#allocation4 + $0x78] sm:$0xf] %v3585
      %v3594 = vld [vmem:[#allocation3] sm:$0xff]
      %v3595 = vld [vmem:[#allocation3 + $0x8] sm:$0xff]
      %v3596 = vld [vmem:[#allocation3 + $0x10] sm:$0xff]
      %v3597 = vld [vmem:[#allocation3 + $0x18] sm:$0xf]
      %v3598 = vld [vmem:[#allocation3 + $0x20] sm:$0xf]
      %v3599 = vld [vmem:[#allocation3 + $0x28] sm:$0xf]
      %v3600 = vld [vmem:[%s1399] ss:$2 sm:$0x3]
      %v3602 = vlaneseq
      %v3603 = vshrl.u32 %v3602, 7
      %v3604 = vsub.s32 0, %v3603
      %v3605 = vrot.slane %v3600, %v3604
      %v3606 = vlaneseq
      %v3607 = vshrl.u32 %v3606, 7
      %v3608 = vsub.s32 1, %v3607
      %v3609 = vrot.slane %v3600, %v3608
      %3610 = vrot.lane.b32.xlu0 %v3605, 18
      %v3611 = vpop.permute.xlu0 %3610
      %3612 = vrot.lane.b32.xlu0 %v3609, 18
      %v3613 = vpop.permute.xlu0 %3612
      %v3614 = vsel %vm1517, %v3611, %v3613
      %v3618 = vmul.f32 %v3594, %v3611
      %v3619 = vmul.f32 %v3595, %v3614
      %v3620 = vmul.f32 %v3596, %v3613
      %v3621 = vmul.f32 %v3597, %v3611
      %v3622 = vmul.f32 %v3598, %v3614
      %v3623 = vmul.f32 %v3599, %v3613
      %v3630 = vrot.slane %v3618, 4
      %v3631 = vrot.slane %v3619, 4
      %v3632 = vrot.slane %v3620, 4
      %v3633 = vrot.slane %v3621, 4
      %v3634 = vsel %vm970, %v3630, %v3633
      %v3635 = vrot.slane %v3622, 4
      %v3636 = vsel %vm970, %v3631, %v3635
      %v3637 = vrot.slane %v3623, 4
      %v3638 = vsel %vm970, %v3632, %v3637
      %3639 = vrot.lane.b32.xlu0 %v3630, 110
      %v3640 = vpop.permute.xlu0 %3639
      %3641 = vrot.lane.b32.xlu0 %v3631, 110
      %v3642 = vpop.permute.xlu0 %3641
      %3643 = vrot.lane.b32.xlu0 %v3632, 110
      %v3644 = vpop.permute.xlu0 %3643
      %3645 = vrot.lane.b32.xlu0 %v3634, 110
      %v3646 = vpop.permute.xlu0 %3645
      %3647 = vrot.lane.b32.xlu0 %v3636, 110
      %v3648 = vpop.permute.xlu0 %3647
      %3649 = vrot.lane.b32.xlu0 %v3638, 110
      %v3650 = vpop.permute.xlu0 %3649
      %v3651 = vsel %vm1537, %v3640, %v3642
      %v3652 = vsel %vm1537, %v3642, %v3644
      %v3653 = vsel %vm1537, %v3646, %v3648
      %v3654 = vsel %vm1537, %v3648, %v3650
      %3659 = vst [vmem:[#allocation4 + $0x70] sm:$0xf0] %v3651
      %3660 = vst [vmem:[#allocation4 + $0x78] sm:$0xf0] %v3652
      %3661 = vst [vmem:[#allocation4 + $0x80] sm:$0xff] %v3653
      %3662 = vst [vmem:[#allocation4 + $0x88] sm:$0xff] %v3654
      %v3663 = vld [vmem:[#allocation3] sm:$0xff]
      %v3664 = vld [vmem:[#allocation3 + $0x8] sm:$0xff]
      %v3665 = vld [vmem:[#allocation3 + $0x10] sm:$0xff]
      %v3666 = vld [vmem:[#allocation3 + $0x18] sm:$0xf]
      %v3667 = vld [vmem:[#allocation3 + $0x20] sm:$0xf]
      %v3668 = vld [vmem:[#allocation3 + $0x28] sm:$0xf]
      %v3669 = vld [vmem:[%s6] ss:$2 sm:$0x3]
      %v3671 = vlaneseq
      %v3672 = vshrl.u32 %v3671, 7
      %v3673 = vsub.s32 0, %v3672
      %v3674 = vrot.slane %v3669, %v3673
      %v3675 = vlaneseq
      %v3676 = vshrl.u32 %v3675, 7
      %v3677 = vsub.s32 1, %v3676
      %v3678 = vrot.slane %v3669, %v3677
      %3679 = vrot.lane.b32.xlu0 %v3674, 32
      %v3680 = vpop.permute.xlu0 %3679
      %3681 = vrot.lane.b32.xlu0 %v3678, 32
      %v3682 = vpop.permute.xlu0 %3681
      %v3683 = vsel %vm1561, %v3680, %v3682
      %v3687 = vmul.f32 %v3663, %v3680
      %v3688 = vmul.f32 %v3664, %v3683
      %v3689 = vmul.f32 %v3665, %v3682
      %v3690 = vmul.f32 %v3666, %v3680
      %v3691 = vmul.f32 %v3667, %v3683
      %v3692 = vmul.f32 %v3668, %v3682
      %3699 = vrot.lane.b32.xlu0 %v3687, 96
      %v3700 = vpop.permute.xlu0 %3699
      %3701 = vrot.lane.b32.xlu0 %v3688, 96
      %v3702 = vpop.permute.xlu0 %3701
      %3703 = vrot.lane.b32.xlu0 %v3689, 96
      %v3704 = vpop.permute.xlu0 %3703
      %3705 = vrot.lane.b32.xlu0 %v3690, 96
      %v3706 = vpop.permute.xlu0 %3705
      %3707 = vrot.lane.b32.xlu0 %v3691, 96
      %v3708 = vpop.permute.xlu0 %3707
      %3709 = vrot.lane.b32.xlu0 %v3692, 96
      %v3710 = vpop.permute.xlu0 %3709
      %v3711 = vsel %vm1578, %v3700, %v3702
      %v3712 = vsel %vm1578, %v3702, %v3704
      %v3713 = vsel %vm1578, %v3706, %v3708
      %v3714 = vsel %vm1578, %v3708, %v3710
      %3719 = vst [vmem:[#allocation4 + $0x90] sm:$0xff] %v3711
      %3720 = vst [vmem:[#allocation4 + $0x98] sm:$0xff] %v3712
      %3721 = vst [vmem:[#allocation4 + $0xa0] sm:$0xf] %v3713
      %3722 = vst [vmem:[#allocation4 + $0xa8] sm:$0xf] %v3714
      %v3723 = vld [vmem:[#allocation3] sm:$0xff]
      %v3724 = vld [vmem:[#allocation3 + $0x8] sm:$0xff]
      %v3725 = vld [vmem:[#allocation3 + $0x10] sm:$0xff]
      %v3726 = vld [vmem:[#allocation3 + $0x18] sm:$0xf]
      %v3727 = vld [vmem:[#allocation3 + $0x20] sm:$0xf]
      %v3728 = vld [vmem:[#allocation3 + $0x28] sm:$0xf]
      %v3735 = vrot.slane %v3723, 4
      %v3736 = vrot.slane %v3724, 4
      %v3737 = vrot.slane %v3725, 4
      %v3738 = vrot.slane %v3726, 4
      %v3739 = vsel %vm970, %v3735, %v3738
      %v3740 = vrot.slane %v3727, 4
      %v3741 = vsel %vm970, %v3736, %v3740
      %v3742 = vrot.slane %v3728, 4
      %v3743 = vsel %vm970, %v3737, %v3742
      %3744 = vrot.lane.b32.xlu0 %v3735, 95
      %v3745 = vpop.permute.xlu0 %3744
      %3746 = vrot.lane.b32.xlu0 %v3736, 95
      %v3747 = vpop.permute.xlu0 %3746
      %3748 = vrot.lane.b32.xlu0 %v3737, 95
      %v3749 = vpop.permute.xlu0 %3748
      %3750 = vrot.lane.b32.xlu0 %v3739, 95
      %v3751 = vpop.permute.xlu0 %3750
      %3752 = vrot.lane.b32.xlu0 %v3741, 95
      %v3753 = vpop.permute.xlu0 %3752
      %3754 = vrot.lane.b32.xlu0 %v3743, 95
      %v3755 = vpop.permute.xlu0 %3754
      %v3756 = vsel %vm1600, %v3745, %v3747
      %v3757 = vsel %vm1600, %v3747, %v3749
      %v3758 = vsel %vm1600, %v3751, %v3753
      %v3759 = vsel %vm1600, %v3753, %v3755
      %3764 = vst [vmem:[#allocation4 + $0xa0] sm:$0xf0] %v3756
      %3765 = vst [vmem:[#allocation4 + $0xa8] sm:$0xf0] %v3757
      %3766 = vst [vmem:[#allocation4 + $0xb0] sm:$0xff] %v3758
      %3767 = vst [vmem:[#allocation4 + $0xb8] sm:$0xff] %v3759
      %v3768 = vld [vmem:[#allocation3] sm:$0xff]
      %v3769 = vld [vmem:[#allocation3 + $0x8] sm:$0xff]
      %v3770 = vld [vmem:[#allocation3 + $0x10] sm:$0xff]
      %v3771 = vld [vmem:[#allocation3 + $0x18] sm:$0xf]
      %v3772 = vld [vmem:[#allocation3 + $0x20] sm:$0xf]
      %v3773 = vld [vmem:[#allocation3 + $0x28] sm:$0xf]
      %v3774 = vld [vmem:[%s1399] ss:$2 sm:$0x3]
      %v3776 = vlaneseq
      %v3777 = vshrl.u32 %v3776, 7
      %v3778 = vsub.s32 0, %v3777
      %v3779 = vrot.slane %v3774, %v3778
      %v3780 = vlaneseq
      %v3781 = vshrl.u32 %v3780, 7
      %v3782 = vsub.s32 1, %v3781
      %v3783 = vrot.slane %v3774, %v3782
      %3784 = vrot.lane.b32.xlu0 %v3779, 34
      %v3785 = vpop.permute.xlu0 %3784
      %3786 = vrot.lane.b32.xlu0 %v3783, 34
      %v3787 = vpop.permute.xlu0 %3786
      %v3788 = vsel %vm1624, %v3785, %v3787
      %v3792 = vmul.f32 %v3768, %v3785
      %v3793 = vmul.f32 %v3769, %v3788
      %v3794 = vmul.f32 %v3770, %v3787
      %v3795 = vmul.f32 %v3771, %v3785
      %v3796 = vmul.f32 %v3772, %v3788
      %v3797 = vmul.f32 %v3773, %v3787
      %3804 = vrot.lane.b32.xlu0 %v3792, 94
      %v3805 = vpop.permute.xlu0 %3804
      %3806 = vrot.lane.b32.xlu0 %v3793, 94
      %v3807 = vpop.permute.xlu0 %3806
      %3808 = vrot.lane.b32.xlu0 %v3794, 94
      %v3809 = vpop.permute.xlu0 %3808
      %3810 = vrot.lane.b32.xlu0 %v3795, 94
      %v3811 = vpop.permute.xlu0 %3810
      %3812 = vrot.lane.b32.xlu0 %v3796, 94
      %v3813 = vpop.permute.xlu0 %3812
      %3814 = vrot.lane.b32.xlu0 %v3797, 94
      %v3815 = vpop.permute.xlu0 %3814
      %v3816 = vsel %vm1641, %v3805, %v3807
      %v3817 = vsel %vm1641, %v3807, %v3809
      %v3818 = vsel %vm1641, %v3811, %v3813
      %v3819 = vsel %vm1641, %v3813, %v3815
      %3824 = vst [vmem:[#allocation4 + $0xc0] sm:$0xff] %v3816
      %3825 = vst [vmem:[#allocation4 + $0xc8] sm:$0xff] %v3817
      %3826 = vst [vmem:[#allocation4 + $0xd0] sm:$0xf] %v3818
      %3827 = vst [vmem:[#allocation4 + $0xd8] sm:$0xf] %v3819
      %v3828 = vld [vmem:[%s19] sm:$0xff]
      %v3829 = vld [vmem:[%s19 + $0x8] sm:$0xf]
      %v3830 = vld [vmem:[#allocation4] sm:$0xff]
      %v3831 = vld [vmem:[#allocation4 + $0x8] sm:$0xff]
      %v3832 = vld [vmem:[#allocation4 + $0x10] sm:$0xff]
      %v3833 = vld [vmem:[#allocation4 + $0x18] sm:$0xff]
      %v3834 = vld [vmem:[#allocation4 + $0x20] sm:$0xff]
      %v3835 = vld [vmem:[#allocation4 + $0x28] sm:$0xff]
      %v3836 = vld [vmem:[#allocation4 + $0x30] sm:$0xff]
      %v3837 = vld [vmem:[#allocation4 + $0x38] sm:$0xff]
      %v3838 = vld [vmem:[#allocation4 + $0x40] sm:$0xff]
      %v3839 = vld [vmem:[#allocation4 + $0x48] sm:$0xff]
      %v3840 = vld [vmem:[#allocation4 + $0x50] sm:$0xff]
      %v3841 = vld [vmem:[#allocation4 + $0x58] sm:$0xff]
      %v3842 = vld [vmem:[#allocation4 + $0x60] sm:$0xff]
      %v3843 = vld [vmem:[#allocation4 + $0x68] sm:$0xff]
      %v3844 = vld [vmem:[#allocation4 + $0x70] sm:$0xff]
      %v3845 = vld [vmem:[#allocation4 + $0x78] sm:$0xff]
      %v3846 = vld [vmem:[#allocation4 + $0x80] sm:$0xff]
      %v3847 = vld [vmem:[#allocation4 + $0x88] sm:$0xff]
      %v3848 = vld [vmem:[#allocation4 + $0x90] sm:$0xff]
      %v3849 = vld [vmem:[#allocation4 + $0x98] sm:$0xff]
      %v3850 = vld [vmem:[#allocation4 + $0xa0] sm:$0xff]
      %v3851 = vld [vmem:[#allocation4 + $0xa8] sm:$0xff]
      %v3852 = vld [vmem:[#allocation4 + $0xb0] sm:$0xff]
      %v3853 = vld [vmem:[#allocation4 + $0xb8] sm:$0xff]
      %v3854 = vld [vmem:[#allocation4 + $0xc0] sm:$0xff]
      %v3855 = vld [vmem:[#allocation4 + $0xc8] sm:$0xff]
      %v3856 = vld [vmem:[#allocation4 + $0xd0] sm:$0xf]
      %v3857 = vld [vmem:[#allocation4 + $0xd8] sm:$0xf]
      %v3858 = vld [vmem:[%s20] sm:$0xff]
      %v3859 = vld [vmem:[%s20 + $0x8] sm:$0xf]
      %3861 = vset.pattern.permute.xlu0 0
      %3862 = vperm.xlu0 %3861, %v3858
      %v3863 = vpop.permute.xlu0 %3862
      %3866 = vset.pattern.permute.xlu0 0
      %3867 = vperm.xlu0 %3866, %v3859
      %v3868 = vpop.permute.xlu0 %3867
      %v3871 = vsel %vm3244, %v3828, 0
      %v3874 = vsel %vm3244, %v3829, 0
      %v3877 = vsel %vm970, %v3856, 0
      %v3880 = vsel %vm970, %v3857, 0
      %3882 = vmatprep.subr.mxu0 0.0
      %3883 = vmatpush1.msra.mxu0 0.0
      %3884 = vmatprep.subr.mxu0 0.0
      %3885 = vmatpush1.msra.mxu0 0.0
      %3886 = vmatprep.subr.mxu0 %v3880
      %3887 = vmatpush1.msra.mxu0 %v3877
      %3888 = vmatprep.subr.mxu0 %v3855
      %3889 = vmatpush1.msra.mxu0 %v3854
      %3890 = vmatprep.subr.mxu0 %v3853
      %3891 = vmatpush1.msra.mxu0 %v3852
      %3892 = vmatprep.subr.mxu0 %v3851
      %3893 = vmatpush1.msra.mxu0 %v3850
      %3894 = vmatprep.subr.mxu0 %v3849
      %3895 = vmatpush1.msra.mxu0 %v3848
      %3896 = vmatprep.subr.mxu0 %v3847
      %3897 = vmatpush1.msra.mxu0 %v3846
      %3898 = vmatprep.subr.mxu0 %v3845
      %3899 = vmatpush1.msra.mxu0 %v3844
      %3900 = vmatprep.subr.mxu0 %v3843
      %3901 = vmatpush1.msra.mxu0 %v3842
      %3902 = vmatprep.subr.mxu0 %v3841
      %3903 = vmatpush1.msra.mxu0 %v3840
      %3904 = vmatprep.subr.mxu0 %v3839
      %3905 = vmatpush1.msra.mxu0 %v3838
      %3906 = vmatprep.subr.mxu0 %v3837
      %3907 = vmatpush1.msra.mxu0 %v3836
      %3908 = vmatprep.subr.mxu0 %v3835
      %3909 = vmatpush1.msra.mxu0 %v3834
      %3910 = vmatprep.subr.mxu0 %v3833
      %3911 = vmatpush1.msra.mxu0 %v3832
      %3912 = vmatprep.subr.mxu0 %v3831
      %3913 = vmatpush1.msra.mxu0 %v3830
      %3914 = vmatprep.subr.mxu0 0.0
      %3915 = vmatpush2.msra.mxu0 0.0
      %3916 = vmatprep.subr.mxu0 0.0
      %3917 = vmatpush2.msra.mxu0 0.0
      %3918 = vmatprep.subr.mxu0 0.0
      %3919 = vmatpush2.msra.mxu0 0.0
      %3920 = vmatprep.subr.mxu0 0.0
      %3921 = vmatpush2.msra.mxu0 0.0
      %3922 = vmatprep.subr.mxu0 0.0
      %3923 = vmatpush2.msra.mxu0 0.0
      %3924 = vmatprep.subr.mxu0 0.0
      %3925 = vmatpush2.msra.mxu0 0.0
      %3926 = vmatprep.subr.mxu0 0.0
      %3927 = vmatpush2.msra.mxu0 0.0
      %3928 = vmatprep.subr.mxu0 0.0
      %3929 = vmatpush2.msra.mxu0 0.0
      %3930 = vmatprep.subr.mxu0 0.0
      %3931 = vmatpush2.msra.mxu0 0.0
      %3932 = vmatprep.subr.mxu0 0.0
      %3933 = vmatpush2.msra.mxu0 0.0
      %3934 = vmatprep.subr.mxu0 0.0
      %3935 = vmatpush2.msra.mxu0 0.0
      %3936 = vmatprep.subr.mxu0 0.0
      %3937 = vmatpush2.msra.mxu0 0.0
      %3938 = vmatprep.subr.mxu0 0.0
      %3939 = vmatpush2.msra.mxu0 0.0
      %3940 = vmatprep.subr.mxu0 0.0
      %3941 = vmatpush2.msra.mxu0 0.0
      %3942 = vmatprep.subr.mxu0 0.0
      %3943 = vmatpush2.msra.mxu0 0.0
      %3944 = vmatprep.subr.mxu0 0.0
      %3945 = vmatpush2.msra.mxu0 0.0
      %3946 = vmatprep.mubr.f32.mxu0 0.0
      %3947 = vmatmul.mubr.f32.gmra.mxu0 %v3871
      %v3948 = vpop.f32.mrf.mxu0
      %v3949 = vadd.f32 %v3863, %v3948
      %v3950 = vpop.f32.mrf.mxu0
      %v3951 = vadd.f32 %v3863, %v3950
      %3952 = vmatprep.mubr.f32.mxu0 0.0
      %3953 = vmatmul.mubr.f32.gmra.mxu0 %v3874
      %v3954 = vpop.f32.mrf.mxu0
      %v3955 = vadd.f32 %v3868, %v3954
      %v3956 = vpop.f32.mrf.mxu0
      %v3957 = vadd.f32 %v3868, %v3956
      %3958 = vdwg.mxu0
      %v3959 = vld [vmem:[%s21] sm:$0xf]
      %v3960 = vld [vmem:[%s22] sm:$0xf]
      %3962 = vset.pattern.permute.xlu0 0
      %3963 = vperm.xlu0 %3962, %v3960
      %v3964 = vpop.permute.xlu0 %3963
      %vm3966 = vcmask 97280
      %v3968 = vsel %vm3966, %v3959, 0
      %v3971 = vsel %vm970, %v3955, 0
      %v3974 = vsel %vm970, %v3957, 0
      %3976 = vmatprep.subr.mxu0 0.0
      %3977 = vmatpush1.msra.mxu0 0.0
      %3978 = vmatprep.subr.mxu0 0.0
      %3979 = vmatpush1.msra.mxu0 0.0
      %3980 = vmatprep.subr.mxu0 0.0
      %3981 = vmatpush1.msra.mxu0 0.0
      %3982 = vmatprep.subr.mxu0 0.0
      %3983 = vmatpush1.msra.mxu0 0.0
      %3984 = vmatprep.subr.mxu0 0.0
      %3985 = vmatpush1.msra.mxu0 0.0
      %3986 = vmatprep.subr.mxu0 0.0
      %3987 = vmatpush1.msra.mxu0 0.0
      %3988 = vmatprep.subr.mxu0 0.0
      %3989 = vmatpush1.msra.mxu0 0.0
      %3990 = vmatprep.subr.mxu0 0.0
      %3991 = vmatpush1.msra.mxu0 0.0
      %3992 = vmatprep.subr.mxu0 0.0
      %3993 = vmatpush1.msra.mxu0 0.0
      %3994 = vmatprep.subr.mxu0 0.0
      %3995 = vmatpush1.msra.mxu0 0.0
      %3996 = vmatprep.subr.mxu0 0.0
      %3997 = vmatpush1.msra.mxu0 0.0
      %3998 = vmatprep.subr.mxu0 0.0
      %3999 = vmatpush1.msra.mxu0 0.0
      %4000 = vmatprep.subr.mxu0 0.0
      %4001 = vmatpush1.msra.mxu0 0.0
      %4002 = vmatprep.subr.mxu0 0.0
      %4003 = vmatpush1.msra.mxu0 0.0
      %4004 = vmatprep.subr.mxu0 %v3974
      %4005 = vmatpush1.msra.mxu0 %v3971
      %4006 = vmatprep.subr.mxu0 %v3951
      %4007 = vmatpush1.msra.mxu0 %v3949
      %4008 = vmatprep.subr.mxu0 0.0
      %4009 = vmatpush2.msra.mxu0 0.0
      %4010 = vmatprep.subr.mxu0 0.0
      %4011 = vmatpush2.msra.mxu0 0.0
      %4012 = vmatprep.subr.mxu0 0.0
      %4013 = vmatpush2.msra.mxu0 0.0
      %4014 = vmatprep.subr.mxu0 0.0
      %4015 = vmatpush2.msra.mxu0 0.0
      %4016 = vmatprep.subr.mxu0 0.0
      %4017 = vmatpush2.msra.mxu0 0.0
      %4018 = vmatprep.subr.mxu0 0.0
      %4019 = vmatpush2.msra.mxu0 0.0
      %4020 = vmatprep.subr.mxu0 0.0
      %4021 = vmatpush2.msra.mxu0 0.0
      %4022 = vmatprep.subr.mxu0 0.0
      %4023 = vmatpush2.msra.mxu0 0.0
      %4024 = vmatprep.subr.mxu0 0.0
      %4025 = vmatpush2.msra.mxu0 0.0
      %4026 = vmatprep.subr.mxu0 0.0
      %4027 = vmatpush2.msra.mxu0 0.0
      %4028 = vmatprep.subr.mxu0 0.0
      %4029 = vmatpush2.msra.mxu0 0.0
      %4030 = vmatprep.subr.mxu0 0.0
      %4031 = vmatpush2.msra.mxu0 0.0
      %4032 = vmatprep.subr.mxu0 0.0
      %4033 = vmatpush2.msra.mxu0 0.0
      %4034 = vmatprep.subr.mxu0 0.0
      %4035 = vmatpush2.msra.mxu0 0.0
      %4036 = vmatprep.subr.mxu0 0.0
      %4037 = vmatpush2.msra.mxu0 0.0
      %4038 = vmatprep.subr.mxu0 0.0
      %4039 = vmatpush2.msra.mxu0 0.0
      %4040 = vmatprep.mubr.f32.mxu0 0.0
      %4041 = vmatmul.mubr.f32.gmra.mxu0 %v3968
      %v4042 = vpop.f32.mrf.mxu0
      %v4043 = vadd.f32 %v3964, %v4042
      %v4044 = vpop.f32.mrf.mxu0
      %v4045 = vadd.f32 %v3964, %v4044
      %4046 = vdwg.mxu0
      %v4049 = vcombine.low %v4043, %v4045
      %4051 = vst [vmem:[%s744] sm:$0xff] %v4049
      %p4052 = scmp.lt.s32.totalorder %s34, 1
      %s4053 = scalar_select %p4052, %s34, 1
      %s4054 = smul.addr %s4053, 2
      %s4055 = smul.addr %s4054, 4
      %s4056 = scalar_lea.vmem %s23, %s4055
      // Predicated region
      $region113: #{sad_forward.1} parent=111 // pred_check
        %p4057 = pneg %p550
      $region114: #{sad_forward.1} parent=111 // pred_check_branch
        %4059 = sbr.rel (%p4057) target = $region116
      $region115: #{sad_forward.1} parent=111 // pred_region
        _
      $region116: #{sad_forward.1} parent=111 // pred_fallthru
        _
    $region112: #{sad_forward.1} parent=5 // pred_fallthru
      _
    %p4060 = scmp.le.s32.totalorder 2, %s29
    // Predicated region
    $region117: #{sad_forward.1} parent=5 // pred_check
      %p4061 = pneg %p4060
    $region118: #{sad_forward.1} parent=5 // pred_check_branch
      %4063 = sbr.rel (%p4061) target = $region120
    $region119: #{sad_forward.1} parent=5 // pred_region
      %s4064 = ssub.s32 %s29, 2
      // Predicated region
      $region121: #{sad_forward.1} parent=119 // pred_check
        %p4065 = pneg %p556
      $region122: #{sad_forward.1} parent=119 // pred_check_branch
        %4067 = sbr.rel (%p4065) target = $region124
      $region123: #{sad_forward.1} parent=119 // pred_region
        %p4068 = scmp.lt.s32.totalorder %s35, 1
        %s4069 = scalar_select %p4068, %s35, 1
        %s4070 = smul.addr %s4069, 2
        %s4071 = smul.addr %s4070, 4
        %s4072 = scalar_lea.vmem %s23, %s4071
      $region124: #{sad_forward.1} parent=119 // pred_fallthru
        _
    $region120: #{sad_forward.1} parent=5 // pred_fallthru
      _
  $region6: #{sad_forward.1} parent=0 // loop_footer
    %s33 = sadd.s32 1, %s29
  $region7: #{sad_forward.1} parent=0 // loop_footer_branch
    %28 = sbr.rel target = $region3
  $region8: #{sad_forward.1} parent=0 // loop_exit
    _

</llo_original>
